<compile_context>
chip_gen: v5e
topology: v5e:2x2
jax: 0.10.0
libtpu: 0.0.40
codegen_flags: <defaults>
</compile_context>

<pallas_src>
import math
import numpy as np
import jax
import jax.numpy as jnp
from jax import lax
from jax.experimental import pallas as pl
from jax.experimental.pallas import tpu as pltpu


# --------------------------------------------------------------------------- #
#  Helpers
# --------------------------------------------------------------------------- #
def _round_up(x, m):
    return ((x + m - 1) // m) * m


# --------------------------------------------------------------------------- #
#  Pallas GEMM:  (Cout, K) @ (K, M) + bias -> (Cout, M)     [bf16 in, f32 out]
# --------------------------------------------------------------------------- #
_PALLAS_MIN_M = 1024          # below this, plain jnp.dot wins (launch/pad cost)
_PALLAS_MIN_K = 8             # degenerate contractions go to XLA
_TM_CANDIDATES = (2048, 1536, 1152, 1024, 896, 768, 640, 512, 384, 256, 128)


def _gemm_bias_kernel(w_ref, x_ref, b_ref, o_ref):
    # One K step: straight MXU matmul + fused bias, written lane-dense.
    acc = jnp.dot(w_ref[...], x_ref[...], preferred_element_type=jnp.float32)
    o_ref[...] = (acc + b_ref[...]).astype(o_ref.dtype)


def gemm_wxb(wm, acm, bvec):
    """wm: (Cout, K) bf16, acm: (K, M) bf16, bvec: (Cout, 1) f32 -> (Cout, M) f32."""
    Cout, K = wm.shape
    K2, M = acm.shape
    assert K == K2

    if M < _PALLAS_MIN_M or K < _PALLAS_MIN_K:
        # Tiny GEMM: XLA handles it (and fuses the bias) with less overhead.
        return jnp.dot(wm, acm, preferred_element_type=jnp.float32) + bvec

    tm = next((t for t in _TM_CANDIDATES if M % t == 0), 512)
    Mp = _round_up(M, tm)
    if Mp != M:
        acm = jnp.pad(acm, ((0, 0), (0, Mp - M)))

    flops = 2 * M * K * Cout
    bytes_accessed = wm.size * 2 + K * M * 2 + Cout * M * 4 + Cout * 4

    out = pl.pallas_call(
        _gemm_bias_kernel,
        out_shape=jax.ShapeDtypeStruct((Cout, Mp), jnp.float32),
        grid_spec=pltpu.PrefetchScalarGridSpec(
            num_scalar_prefetch=0,
            grid=(Mp // tm,),
            in_specs=[pl.BlockSpec((Cout, K), lambda j: (0, 0)),   # weights (resident)
                      pl.BlockSpec((K, tm), lambda j: (0, j)),     # im2col columns
                      pl.BlockSpec((Cout, 1), lambda j: (0, 0))],  # fused bias
            out_specs=pl.BlockSpec((Cout, tm), lambda j: (0, j))),
        compiler_params=pltpu.CompilerParams(
            dimension_semantics=("parallel",)),
        cost_estimate=pl.CostEstimate(flops=flops, transcendentals=0,
                                      bytes_accessed=bytes_accessed),
    )(wm, acm, bvec)
    if Mp != M:
        out = out[:, :M]
    return out


# --------------------------------------------------------------------------- #
#  Fused InstanceNorm + conditional affine + PReLU
# --------------------------------------------------------------------------- #
_INSTNORM_MIN_S = 512     # below this, plain JAX (tiny tensors, launch overhead)
_INSTNORM_ROW_BLK = 8


def _instnorm_prelu_kernel(x_ref, g_ref, b_ref, a_ref, o_ref):
    x = x_ref[...]
    mean = jnp.mean(x, axis=-1, keepdims=True)
    var = jnp.mean(jnp.square(x - mean), axis=-1, keepdims=True)
    xn = (x - mean) * lax.rsqrt(var + 1e-5)
    y = (1.0 + g_ref[...]) * xn + b_ref[...]
    o_ref[...] = jnp.where(y >= 0, y, a_ref[...] * y)


def _instnorm_prelu_jax(x2, g, b, a):
    mean = jnp.mean(x2, axis=-1, keepdims=True)
    var = jnp.mean(jnp.square(x2 - mean), axis=-1, keepdims=True)
    xn = (x2 - mean) * lax.rsqrt(var + 1e-5)
    y = (1.0 + g) * xn + b
    return jnp.where(y >= 0, y, a * y)


def instnorm_affine_prelu(x, gamma, beta, alpha):
    """x: (N,C,D,H,W); gamma/beta: (N,C); alpha: (C,)."""
    N, C, D, H, W = x.shape
    S = D * H * W
    R = N * C
    x2 = x.reshape(R, S).astype(jnp.float32)
    g = gamma.reshape(R, 1).astype(jnp.float32)
    b = beta.reshape(R, 1).astype(jnp.float32)
    a = jnp.broadcast_to(alpha[None, :], (N, C)).reshape(R, 1).astype(jnp.float32)

    if S < _INSTNORM_MIN_S:
        y = _instnorm_prelu_jax(x2, g, b, a)
        return y.reshape(N, C, D, H, W)

    RB = _INSTNORM_ROW_BLK
    Rp = _round_up(R, RB)
    if Rp != R:
        pad = ((0, Rp - R), (0, 0))
        x2 = jnp.pad(x2, pad)
        g = jnp.pad(g, pad)
        b = jnp.pad(b, pad)
        a = jnp.pad(a, pad)

    y = pl.pallas_call(
        _instnorm_prelu_kernel,
        out_shape=jax.ShapeDtypeStruct((Rp, S), jnp.float32),
        grid_spec=pltpu.PrefetchScalarGridSpec(
            num_scalar_prefetch=0,
            grid=(Rp // RB,),
            in_specs=[pl.BlockSpec((RB, S), lambda i: (i, 0)),
                      pl.BlockSpec((RB, 1), lambda i: (i, 0)),
                      pl.BlockSpec((RB, 1), lambda i: (i, 0)),
                      pl.BlockSpec((RB, 1), lambda i: (i, 0))],
            out_specs=pl.BlockSpec((RB, S), lambda i: (i, 0))),
        compiler_params=pltpu.CompilerParams(
            dimension_semantics=("parallel",)),
    )(x2, g, b, a)
    return y[:R].reshape(N, C, D, H, W)


# --------------------------------------------------------------------------- #
#  Conv3d  (im2col built directly in (K, M) order + transposed Pallas GEMM)
# --------------------------------------------------------------------------- #
def conv3d_pallas(x, w, bias=None, padding=(0, 0, 0)):
    """x: (N,Cin,D2,D3,D4), w: (Cout,Cin,k2,k3,k4) — symmetric pad then 'valid'."""
    N, Cin, D2, D3, D4 = x.shape
    Cout, _, k2, k3, k4 = w.shape
    p2, p3, p4 = padding
    O2 = D2 + 2 * p2 - k2 + 1
    O3 = D3 + 2 * p3 - k3 + 1
    O4 = D4 + 2 * p4 - k4 + 1
    K = Cin * k2 * k3 * k4
    M = N * O2 * O3 * O4

    # bf16 feeder: pad once, put channels first (free relabel for N small),
    # build patches already in (Cin, kk, N, O2, O3, O4) -> (K, M) order.
    xp = jnp.pad(x.astype(jnp.bfloat16),
                 ((0, 0), (0, 0), (p2, p2), (p3, p3), (p4, p4)))
    xt = jnp.transpose(xp, (1, 0, 2, 3, 4))
    taps = []
    for a in range(k2):
        for b in range(k3):
            for c in range(k4):
                taps.append(xt[:, :, a:a + O2, b:b + O3, c:c + O4])
    acm = jnp.stack(taps, axis=1).reshape(K, M)                 # (K, M) bf16

    wm = w.reshape(Cout, K).astype(jnp.bfloat16)                # (Cout, K) bf16
    if bias is not None:
        bvec = bias.astype(jnp.float32).reshape(Cout, 1)
    else:
        bvec = jnp.zeros((Cout, 1), jnp.float32)

    out_cm = gemm_wxb(wm, acm, bvec)                            # (Cout, M) f32
    out = out_cm.reshape(Cout, N, O2, O3, O4).transpose(1, 0, 2, 3, 4)
    return out


# --------------------------------------------------------------------------- #
#  Plain-JAX glue: pooling, trilinear interp, FFT data consistency
# --------------------------------------------------------------------------- #
def maxpool3d(x, kernel, stride):
    return lax.reduce_window(x, -np.inf, lax.max,
                             (1, 1) + kernel, (1, 1) + stride, 'VALID')


def avgpool3d(x, kernel, stride):
    s = lax.reduce_window(x, 0.0, lax.add,
                          (1, 1) + kernel, (1, 1) + stride, 'VALID')
    return s / float(np.prod(kernel))


def _interp_matrix(out_size, in_size):
    # F.interpolate(..., mode='trilinear', align_corners=True), one axis.
    W = np.zeros((out_size, in_size), dtype=np.float32)
    if out_size == 1 or in_size == 1:
        W[:, 0] = 1.0
        return jnp.asarray(W)
    for i in range(out_size):
        pos = i * (in_size - 1) / (out_size - 1)
        lo = int(math.floor(pos))
        hi = min(lo + 1, in_size - 1)
        f = pos - lo
        W[i, lo] += 1.0 - f
        W[i, hi] += f
    return jnp.asarray(W)


def trilinear_resize(x, out_size):
    """align_corners=True trilinear resize of (N,C,D2,D3,D4) to out_size."""
    Wd = _interp_matrix(out_size[0], x.shape[2])
    Wh = _interp_matrix(out_size[1], x.shape[3])
    Ww = _interp_matrix(out_size[2], x.shape[4])
    x = jnp.einsum('ncdhw,ed->ncehw', x, Wd)
    x = jnp.einsum('ncdhw,eh->ncdew', x, Wh)
    x = jnp.einsum('ncdhw,ew->ncdhe', x, Ww)
    return x


# TODO(synk): utils.fft2 implementation not provided in the reference repo;
#             assuming centered, orthonormal 2D FFT (fastMRI convention).
def _fft2c(x):
    x = jnp.fft.ifftshift(x, axes=(-2, -1))
    x = jnp.fft.fft2(x, axes=(-2, -1), norm='ortho')
    return jnp.fft.fftshift(x, axes=(-2, -1))


def _ifft2c(x):
    x = jnp.fft.ifftshift(x, axes=(-2, -1))
    x = jnp.fft.ifft2(x, axes=(-2, -1), norm='ortho')
    return jnp.fft.fftshift(x, axes=(-2, -1))


def data_consistency(met_LR, output, lowRes):
    sub_k = _fft2c(met_LR.astype(jnp.complex64))
    out_k = _fft2c(output.astype(jnp.complex64))
    d = output.shape[-1] // 2
    div = lowRes
    out_k = out_k.at[:, :, d - div:d + div, d - div:d + div].set(
        sub_k[:, :, d - div:d + div, d - div:d + div])
    out_c = _ifft2c(out_k)
    return jnp.abs(out_c)


def metname_to_metcode(metname):
    met_list = {'Cr+PCr': 0, 'Gln': 1, 'Glu': 2, 'Gly': 3,
                'GPC+PCh': 4, 'Ins': 5, 'NAA': 6}
    metname = list(metname)
    metcode = np.zeros((1, 1))
    metcode[0, 0] = met_list[metname[0]]
    return metcode


# --------------------------------------------------------------------------- #
#  Parameters (deterministic init)
# --------------------------------------------------------------------------- #
class KeyGen:
    def __init__(self, seed):
        self.key = jax.random.PRNGKey(seed)

    def __call__(self):
        self.key, k = jax.random.split(self.key)
        return k


def init_linear(kg, fin, fout):
    bound = 1.0 / math.sqrt(fin)
    return {'w': jax.random.uniform(kg(), (fout, fin), jnp.float32, -bound, bound),
            'b': jax.random.uniform(kg(), (fout,), jnp.float32, -bound, bound)}


def init_conv3d(kg, cin, cout, ksize, bias=False):
    fan_in = cin * ksize[0] * ksize[1] * ksize[2]
    bound = 1.0 / math.sqrt(fan_in)
    p = {'w': jax.random.uniform(kg(), (cout, cin) + ksize, jnp.float32, -bound, bound)}
    if bias:
        p['b'] = jax.random.uniform(kg(), (cout,), jnp.float32, -bound, bound)
    return p


def init_cin(kg, C, L):
    mapping = [init_linear(kg, 1, 2 * L)] + [init_linear(kg, 2 * L, 2 * L) for _ in range(3)]
    style = init_linear(kg, 2 * L, 2 * C)
    style['b'] = jnp.concatenate([jnp.ones((C,), jnp.float32),
                                  jnp.zeros((C,), jnp.float32)])
    return {'mapping': mapping, 'style': style}


def init_fs(kg, cin, cout, L):
    return {'emb': jax.random.normal(kg(), (7, 3), jnp.float32),
            'm1': [init_linear(kg, 1, L)] + [init_linear(kg, L, L) for _ in range(3)],
            'm2': [init_linear(kg, 3, L)] + [init_linear(kg, L, L) for _ in range(3)],
            's1': init_linear(kg, 2 * L, 2 * L),
            's2': init_linear(kg, 2 * L, cout * cin)}


def init_basic(kg, cin, cout, L, ksize):
    return {'conv_w': init_conv3d(kg, cin, cout, ksize)['w'],
            'fs': init_fs(kg, cin, cout, L),
            'bn': init_cin(kg, cout, L),
            'prelu': jnp.full((cout,), 0.25, jnp.float32),
            'conv2_w': init_conv3d(kg, cout, cout, ksize)['w'],
            'fs2': init_fs(kg, cout, cout, L),
            'bn2': init_cin(kg, cout, L),
            'prelu2': jnp.full((cout,), 0.25, jnp.float32)}


def init_encoder(kg, cin, feat, L):
    return {'enc1': init_basic(kg, cin, feat, L, (3, 3, 3)),
            'enc2': init_basic(kg, feat, feat * 2, L, (3, 3, 1)),
            'enc3': init_basic(kg, feat * 2, feat * 4, L, (3, 3, 1)),
            'enc4': init_basic(kg, feat * 4, feat * 8, L, (3, 3, 1)),
            'bottleneck': init_basic(kg, feat * 8, feat * 16, L, (3, 3, 1))}


def init_model(kg, in_channels, feat, L, out_ch=1):
    return {'encoder1': init_encoder(kg, in_channels, feat, L),
            'encoder2': init_encoder(kg, in_channels, feat, L),
            'conv4': init_conv3d(kg, feat * 32, feat * 8, (3, 3, 1), bias=True),
            'decoder4': init_basic(kg, feat * 24, feat * 8, L, (3, 3, 1)),
            'conv3': init_conv3d(kg, feat * 8, feat * 4, (3, 3, 1), bias=True),
            'decoder3': init_basic(kg, feat * 12, feat * 4, L, (3, 3, 1)),
            'conv2': init_conv3d(kg, feat * 4, feat * 2, (3, 3, 1), bias=True),
            'decoder2': init_basic(kg, feat * 6, feat * 2, L, (3, 3, 1)),
            'conv1': init_conv3d(kg, feat * 2, feat, (3, 3, 3), bias=True),
            'decoder1': init_basic(kg, feat * 3, feat, L, (3, 3, 3)),
            'conv_output': init_conv3d(kg, feat, out_ch, (1, 1, 1), bias=True)}


# --------------------------------------------------------------------------- #
#  Forward pass
# --------------------------------------------------------------------------- #
def _leaky(x, s=0.2):
    return jnp.where(x >= 0, x, s * x)


def _linear(p, x):
    return x @ p['w'].T + p['b']


def _mlp_leaky(layers, x):
    for p in layers:
        x = _leaky(_linear(p, x))
    return x


def filter_scaling_fwd(p, lowres, metcode, cout, cin):
    emb = p['emb'][metcode][None, :]          # (1, 3)
    f1 = _mlp_leaky(p['m1'], lowres)          # (1, L)
    f2 = _mlp_leaky(p['m2'], emb)             # (1, L)
    h = jnp.concatenate([f1, f2], axis=1)
    out = _linear(p['s2'], _leaky(_linear(p['s1'], h)))
    return out.reshape(cout, cin, 1, 1, 1)


def cin_style(p, adv):
    lat = _mlp_leaky(p['mapping'], adv)
    style = _linear(p['style'], lat)          # (N, 2C)
    gamma, beta = jnp.split(style, 2, axis=1)
    return gamma, beta


def basic_conv3d_fwd(p, x, lowres, metcode, adv, padding):
    w = p['conv_w']
    fs = filter_scaling_fwd(p['fs'], lowres, metcode, w.shape[0], w.shape[1])
    x = conv3d_pallas(x, w * fs, None, padding)
    g, b = cin_style(p['bn'], adv)
    x = instnorm_affine_prelu(x, g, b, p['prelu'])

    w2 = p['conv2_w']
    fs2 = filter_scaling_fwd(p['fs2'], lowres, metcode, w2.shape[0], w2.shape[1])
    x = conv3d_pallas(x, w2 * fs2, None, padding)
    g2, b2 = cin_style(p['bn2'], adv)
    x = instnorm_affine_prelu(x, g2, b2, p['prelu2'])
    return x


def encoder_fwd(p, x, lowres, metcode, adv):
    enc1 = basic_conv3d_fwd(p['enc1'], x, lowres, metcode, adv, (1, 1, 1))
    e1p = maxpool3d(enc1, (2, 2, 3), (2, 2, 3))
    enc2 = basic_conv3d_fwd(p['enc2'], e1p, lowres, metcode, adv, (1, 1, 0))
    e2p = maxpool3d(enc2, (2, 2, 1), (2, 2, 1))
    enc3 = basic_conv3d_fwd(p['enc3'], e2p, lowres, metcode, adv, (1, 1, 0))
    e3p = maxpool3d(enc3, (2, 2, 1), (2, 2, 1))
    enc4 = basic_conv3d_fwd(p['enc4'], e3p, lowres, metcode, adv, (1, 1, 0))
    e4p = maxpool3d(enc4, (2, 2, 1), (2, 2, 1))
    bott = basic_conv3d_fwd(p['bottleneck'], e4p, lowres, metcode, adv, (1, 1, 0))
    return enc1, enc2, enc3, enc4, bott


def munet_forward(params, T1, flair, met_LR, lowRes, lowRes_input, metname, adv_weight):
    metcode = int(metname_to_metcode(metname)[0, 0])
    lowres_t = jnp.asarray([[float(lowRes_input)]], jnp.float32)       # (1, 1)
    adv = jnp.full((met_LR.shape[0], 1), float(adv_weight), jnp.float32)

    x = trilinear_resize(met_LR[..., None], T1.shape[2:])

    e1_1, e1_2, e1_3, e1_4, b1 = encoder_fwd(
        params['encoder1'], jnp.concatenate([x, T1], 1), lowres_t, metcode, adv)
    e2_1, e2_2, e2_3, e2_4, b2 = encoder_fwd(
        params['encoder2'], jnp.concatenate([x, flair], 1), lowres_t, metcode, adv)
    bott = jnp.concatenate([b1, b2], 1)

    def up(t, s):
        return trilinear_resize(t, (t.shape[2] * s[0], t.shape[3] * s[1], t.shape[4] * s[2]))

    dec4 = conv3d_pallas(up(bott, (2, 2, 1)), params['conv4']['w'], params['conv4']['b'], (1, 1, 0))
    dec4 = jnp.concatenate([e1_4, e2_4, dec4], 1)
    dec4 = basic_conv3d_fwd(params['decoder4'], dec4, lowres_t, metcode, adv, (1, 1, 0))

    dec3 = conv3d_pallas(up(dec4, (2, 2, 1)), params['conv3']['w'], params['conv3']['b'], (1, 1, 0))
    dec3 = jnp.concatenate([e1_3, e2_3, dec3], 1)
    dec3 = basic_conv3d_fwd(params['decoder3'], dec3, lowres_t, metcode, adv, (1, 1, 0))

    dec2 = conv3d_pallas(up(dec3, (2, 2, 1)), params['conv2']['w'], params['conv2']['b'], (1, 1, 0))
    dec2 = jnp.concatenate([e1_2, e2_2, dec2], 1)
    dec2 = basic_conv3d_fwd(params['decoder2'], dec2, lowres_t, metcode, adv, (1, 1, 0))

    dec1 = conv3d_pallas(up(dec2, (2, 2, 3)), params['conv1']['w'], params['conv1']['b'], (1, 1, 1))
    dec1 = jnp.concatenate([e1_1, e2_1, dec1], 1)
    dec1 = basic_conv3d_fwd(params['decoder1'], dec1, lowres_t, metcode, adv, (1, 1, 1))

    out = conv3d_pallas(dec1, params['conv_output']['w'], params['conv_output']['b'], (0, 0, 0))
    out = jax.nn.sigmoid(out)
    out = avgpool3d(out, (3, 3, 3), (3, 3, 3))[..., 0]      # squeeze(-1)
    out = data_consistency(met_LR, out, lowRes)
    return out


# --------------------------------------------------------------------------- #
#  Main
# --------------------------------------------------------------------------- #
if __name__ == "__main__":
    # Small shapes consistent with the architecture:
    #   spatial (H, W) must be divisible by 16 (4 poolings of 2) and by 3
    #   (final AvgPool3d); D = 3 (pool1 depth-3 / final depth squeeze).
    N, in_channels, feat, latent_dim = 1, 2, 4, 8
    H = W = 48
    D = 3
    h = w = 16          # met_LR resolution = (H/3, W/3)

    key = jax.random.PRNGKey(0)
    k1, k2, k3 = jax.random.split(key, 3)
    T1 = jax.random.normal(k1, (N, 1, H, W, D), jnp.float32)
    flair = jax.random.normal(k2, (N, 1, H, W, D), jnp.float32)
    met_LR = jax.random.uniform(k3, (N, 1, h, w), jnp.float32)

    params = init_model(KeyGen(42), in_channels=in_channels, feat=feat,
                        L=latent_dim, out_ch=1)

    lowRes = 4            # k-space data-consistency half-width (static)
    lowRes_input = 4.0    # conditioning scalar
    metname = ['NAA']
    adv_weight = 0.5

    fwd = jax.jit(lambda p, t1, fl, m: munet_forward(
        p, t1, fl, m, lowRes=lowRes, lowRes_input=lowRes_input,
        metname=metname, adv_weight=adv_weight))

    out = fwd(params, T1, flair, met_LR)
    out = jax.block_until_ready(out)
    assert out.shape == (N, 1, h, w), out.shape
    assert jnp.all(jnp.isfinite(out))
    print("KERNEL_OK")
</pallas_src>

<mosaic_0001>
module attributes {stable_mosaic.version = 11 : i64} {
  func.func @_instnorm_prelu_kernel(%arg0: i32, %arg1: memref<8x6912xf32, #tpu.memory_space<vmem>>, %arg2: memref<8x1xf32, #tpu.memory_space<vmem>>, %arg3: memref<8x1xf32, #tpu.memory_space<vmem>>, %arg4: memref<8x1xf32, #tpu.memory_space<vmem>>, %arg5: memref<8x6912xf32, #tpu.memory_space<vmem>>) attributes {dimension_semantics = [#tpu.dimension_semantics<parallel>], iteration_bounds = array<i64: 1>, scalar_prefetch = 0 : i64, scratch_operands = 0 : i64, tpu.core_type = #tpu.core_type<tc>, window_params = [{transform_indices = @transform_0, window_bounds = array<i64: 8, 6912>}, {transform_indices = @transform_1, window_bounds = array<i64: 8, 1>}, {transform_indices = @transform_2, window_bounds = array<i64: 8, 1>}, {transform_indices = @transform_3, window_bounds = array<i64: 8, 1>}, {transform_indices = @transform_4, window_bounds = array<i64: 8, 6912>}]} {
    %c0 = arith.constant 0 : index
    %c0_0 = arith.constant 0 : index
    %0 = vector.load %arg1[%c0, %c0_0] : memref<8x6912xf32, #tpu.memory_space<vmem>>, vector<8x6912xf32>
    %cst = arith.constant dense<0.000000e+00> : vector<8xf32>
    %1 = vector.multi_reduction <add>, %0, %cst [1] : vector<8x6912xf32> to vector<8xf32>
    %2 = vector.shape_cast %1 : vector<8xf32> to vector<8x1xf32>
    %cst_1 = arith.constant 6.912000e+03 : f32
    %3 = vector.broadcast %cst_1 : f32 to vector<8x1xf32>
    %4 = arith.divf %2, %3 : vector<8x1xf32>
    %5 = vector.broadcast %4 : vector<8x1xf32> to vector<8x6912xf32>
    %6 = arith.subf %0, %5 : vector<8x6912xf32>
    %7 = arith.mulf %6, %6 : vector<8x6912xf32>
    %cst_2 = arith.constant dense<0.000000e+00> : vector<8xf32>
    %8 = vector.multi_reduction <add>, %7, %cst_2 [1] : vector<8x6912xf32> to vector<8xf32>
    %9 = vector.shape_cast %8 : vector<8xf32> to vector<8x1xf32>
    %cst_3 = arith.constant 6.912000e+03 : f32
    %10 = vector.broadcast %cst_3 : f32 to vector<8x1xf32>
    %11 = arith.divf %9, %10 : vector<8x1xf32>
    %12 = vector.broadcast %4 : vector<8x1xf32> to vector<8x6912xf32>
    %13 = arith.subf %0, %12 : vector<8x6912xf32>
    %cst_4 = arith.constant 9.99999974E-6 : f32
    %14 = vector.broadcast %cst_4 : f32 to vector<8x1xf32>
    %15 = arith.addf %11, %14 : vector<8x1xf32>
    %16 = math.rsqrt %15 : vector<8x1xf32>
    %17 = vector.broadcast %16 : vector<8x1xf32> to vector<8x6912xf32>
    %18 = arith.mulf %13, %17 : vector<8x6912xf32>
    %c0_5 = arith.constant 0 : index
    %c0_6 = arith.constant 0 : index
    %19 = vector.load %arg2[%c0_5, %c0_6] : memref<8x1xf32, #tpu.memory_space<vmem>>, vector<8x1xf32>
    %cst_7 = arith.constant 1.000000e+00 : f32
    %20 = vector.broadcast %cst_7 : f32 to vector<8x1xf32>
    %21 = arith.addf %20, %19 : vector<8x1xf32>
    %22 = vector.broadcast %21 : vector<8x1xf32> to vector<8x6912xf32>
    %23 = arith.mulf %22, %18 : vector<8x6912xf32>
    %c0_8 = arith.constant 0 : index
    %c0_9 = arith.constant 0 : index
    %24 = vector.load %arg3[%c0_8, %c0_9] : memref<8x1xf32, #tpu.memory_space<vmem>>, vector<8x1xf32>
    %25 = vector.broadcast %24 : vector<8x1xf32> to vector<8x6912xf32>
    %26 = arith.addf %23, %25 : vector<8x6912xf32>
    %cst_10 = arith.constant 0.000000e+00 : f32
    %27 = vector.broadcast %cst_10 : f32 to vector<8x6912xf32>
    %28 = arith.cmpf oge, %26, %27 : vector<8x6912xf32>
    %c0_11 = arith.constant 0 : index
    %c0_12 = arith.constant 0 : index
    %29 = vector.load %arg4[%c0_11, %c0_12] : memref<8x1xf32, #tpu.memory_space<vmem>>, vector<8x1xf32>
    %30 = vector.broadcast %29 : vector<8x1xf32> to vector<8x6912xf32>
    %31 = arith.mulf %30, %26 : vector<8x6912xf32>
    %32 = arith.select %28, %26, %31 : vector<8x6912xi1>, vector<8x6912xf32>
    %c0_13 = arith.constant 0 : index
    %c0_14 = arith.constant 0 : index
    %33 = vector.load %arg5[%c0_13, %c0_14] : memref<8x6912xf32, #tpu.memory_space<vmem>>, vector<8x6912xf32>
    tpu.vector_store %arg5[%c0_13, %c0_14], %32 {strides = array<i32>} : memref<8x6912xf32, #tpu.memory_space<vmem>>, vector<8x6912xf32>,
    return
  }
  func.func @transform_0(%arg0: i32) -> (i32, i32) {
    %c0_i32 = arith.constant 0 : i32
    %c0_i32_0 = arith.constant 0 : i32
    return %arg0, %c0_i32 : i32, i32
  }
  func.func @transform_1(%arg0: i32) -> (i32, i32) {
    %c0_i32 = arith.constant 0 : i32
    %c0_i32_0 = arith.constant 0 : i32
    return %arg0, %c0_i32 : i32, i32
  }
  func.func @transform_2(%arg0: i32) -> (i32, i32) {
    %c0_i32 = arith.constant 0 : i32
    %c0_i32_0 = arith.constant 0 : i32
    return %arg0, %c0_i32 : i32, i32
  }
  func.func @transform_3(%arg0: i32) -> (i32, i32) {
    %c0_i32 = arith.constant 0 : i32
    %c0_i32_0 = arith.constant 0 : i32
    return %arg0, %c0_i32 : i32, i32
  }
  func.func @transform_4(%arg0: i32) -> (i32, i32) {
    %c0_i32 = arith.constant 0 : i32
    %c0_i32_0 = arith.constant 0 : i32
    return %arg0, %c0_i32 : i32, i32
  }
}

module attributes {stable_mosaic.version = 11 : i64} {
  func.func @_gemm_bias_kernel(%arg0: i32, %arg1: memref<4x54xbf16, #tpu.memory_space<vmem>>, %arg2: memref<54x1152xbf16, #tpu.memory_space<vmem>>, %arg3: memref<4x1xf32, #tpu.memory_space<vmem>>, %arg4: memref<4x1152xf32, #tpu.memory_space<vmem>>) attributes {dimension_semantics = [#tpu.dimension_semantics<parallel>], iteration_bounds = array<i64: 6>, scalar_prefetch = 0 : i64, scratch_operands = 0 : i64, tpu.core_type = #tpu.core_type<tc>, window_params = [{pipeline_mode = #tpu.pipeline_mode<synchronous>, transform_indices = @transform_0, window_bounds = array<i64: 4, 54>}, {transform_indices = @transform_1, window_bounds = array<i64: 54, 1152>}, {pipeline_mode = #tpu.pipeline_mode<synchronous>, transform_indices = @transform_2, window_bounds = array<i64: 4, 1>}, {transform_indices = @transform_3, window_bounds = array<i64: 4, 1152>}]} {
    %c0 = arith.constant 0 : index
    %c0_0 = arith.constant 0 : index
    %0 = vector.load %arg1[%c0, %c0_0] : memref<4x54xbf16, #tpu.memory_space<vmem>>, vector<4x54xbf16>
    %c0_1 = arith.constant 0 : index
    %c0_2 = arith.constant 0 : index
    %1 = vector.load %arg2[%c0_1, %c0_2] : memref<54x1152xbf16, #tpu.memory_space<vmem>>, vector<54x1152xbf16>
    %cst = arith.constant dense<0.000000e+00> : vector<4x1152xf32>
    %2 = tpu.matmul %0, %1, %cst {dimension_numbers = #tpu.dot_dimension_numbers<[1], [0], [0], [1], [0, 0, 1, 1], [], []>} : vector<4x54xbf16>, vector<54x1152xbf16>, vector<4x1152xf32> -> vector<4x1152xf32>
    %c0_3 = arith.constant 0 : index
    %c0_4 = arith.constant 0 : index
    %3 = vector.load %arg3[%c0_3, %c0_4] : memref<4x1xf32, #tpu.memory_space<vmem>>, vector<4x1xf32>
    %4 = vector.broadcast %3 : vector<4x1xf32> to vector<4x1152xf32>
    %5 = arith.addf %2, %4 : vector<4x1152xf32>
    %c0_5 = arith.constant 0 : index
    %c0_6 = arith.constant 0 : index
    %6 = vector.load %arg4[%c0_5, %c0_6] : memref<4x1152xf32, #tpu.memory_space<vmem>>, vector<4x1152xf32>
    tpu.vector_store %arg4[%c0_5, %c0_6], %5 {strides = array<i32>} : memref<4x1152xf32, #tpu.memory_space<vmem>>, vector<4x1152xf32>,
    return
  }
  func.func @transform_0(%arg0: i32) -> (i32, i32) {
    %c0_i32 = arith.constant 0 : i32
    %c0_i32_0 = arith.constant 0 : i32
    %c0_i32_1 = arith.constant 0 : i32
    return %c0_i32, %c0_i32_0 : i32, i32
  }
  func.func @transform_1(%arg0: i32) -> (i32, i32) {
    %c0_i32 = arith.constant 0 : i32
    %c0_i32_0 = arith.constant 0 : i32
    return %c0_i32, %arg0 : i32, i32
  }
  func.func @transform_2(%arg0: i32) -> (i32, i32) {
    %c0_i32 = arith.constant 0 : i32
    %c0_i32_0 = arith.constant 0 : i32
    %c0_i32_1 = arith.constant 0 : i32
    return %c0_i32, %c0_i32_0 : i32, i32
  }
  func.func @transform_3(%arg0: i32) -> (i32, i32) {
    %c0_i32 = arith.constant 0 : i32
    %c0_i32_0 = arith.constant 0 : i32
    return %c0_i32, %arg0 : i32, i32
  }
}

module attributes {stable_mosaic.version = 11 : i64} {
  func.func @_gemm_bias_kernel(%arg0: i32, %arg1: memref<4x108xbf16, #tpu.memory_space<vmem>>, %arg2: memref<108x1152xbf16, #tpu.memory_space<vmem>>, %arg3: memref<4x1xf32, #tpu.memory_space<vmem>>, %arg4: memref<4x1152xf32, #tpu.memory_space<vmem>>) attributes {dimension_semantics = [#tpu.dimension_semantics<parallel>], iteration_bounds = array<i64: 6>, scalar_prefetch = 0 : i64, scratch_operands = 0 : i64, tpu.core_type = #tpu.core_type<tc>, window_params = [{pipeline_mode = #tpu.pipeline_mode<synchronous>, transform_indices = @transform_0, window_bounds = array<i64: 4, 108>}, {transform_indices = @transform_1, window_bounds = array<i64: 108, 1152>}, {pipeline_mode = #tpu.pipeline_mode<synchronous>, transform_indices = @transform_2, window_bounds = array<i64: 4, 1>}, {transform_indices = @transform_3, window_bounds = array<i64: 4, 1152>}]} {
    %c0 = arith.constant 0 : index
    %c0_0 = arith.constant 0 : index
    %0 = vector.load %arg1[%c0, %c0_0] : memref<4x108xbf16, #tpu.memory_space<vmem>>, vector<4x108xbf16>
    %c0_1 = arith.constant 0 : index
    %c0_2 = arith.constant 0 : index
    %1 = vector.load %arg2[%c0_1, %c0_2] : memref<108x1152xbf16, #tpu.memory_space<vmem>>, vector<108x1152xbf16>
    %cst = arith.constant dense<0.000000e+00> : vector<4x1152xf32>
    %2 = tpu.matmul %0, %1, %cst {dimension_numbers = #tpu.dot_dimension_numbers<[1], [0], [0], [1], [0, 0, 1, 1], [], []>} : vector<4x108xbf16>, vector<108x1152xbf16>, vector<4x1152xf32> -> vector<4x1152xf32>
    %c0_3 = arith.constant 0 : index
    %c0_4 = arith.constant 0 : index
    %3 = vector.load %arg3[%c0_3, %c0_4] : memref<4x1xf32, #tpu.memory_space<vmem>>, vector<4x1xf32>
    %4 = vector.broadcast %3 : vector<4x1xf32> to vector<4x1152xf32>
    %5 = arith.addf %2, %4 : vector<4x1152xf32>
    %c0_5 = arith.constant 0 : index
    %c0_6 = arith.constant 0 : index
    %6 = vector.load %arg4[%c0_5, %c0_6] : memref<4x1152xf32, #tpu.memory_space<vmem>>, vector<4x1152xf32>
    tpu.vector_store %arg4[%c0_5, %c0_6], %5 {strides = array<i32>} : memref<4x1152xf32, #tpu.memory_space<vmem>>, vector<4x1152xf32>,
    return
  }
  func.func @transform_0(%arg0: i32) -> (i32, i32) {
    %c0_i32 = arith.constant 0 : i32
    %c0_i32_0 = arith.constant 0 : i32
    %c0_i32_1 = arith.constant 0 : i32
    return %c0_i32, %c0_i32_0 : i32, i32
  }
  func.func @transform_1(%arg0: i32) -> (i32, i32) {
    %c0_i32 = arith.constant 0 : i32
    %c0_i32_0 = arith.constant 0 : i32
    return %c0_i32, %arg0 : i32, i32
  }
  func.func @transform_2(%arg0: i32) -> (i32, i32) {
    %c0_i32 = arith.constant 0 : i32
    %c0_i32_0 = arith.constant 0 : i32
    %c0_i32_1 = arith.constant 0 : i32
    return %c0_i32, %c0_i32_0 : i32, i32
  }
  func.func @transform_3(%arg0: i32) -> (i32, i32) {
    %c0_i32 = arith.constant 0 : i32
    %c0_i32_0 = arith.constant 0 : i32
    return %c0_i32, %arg0 : i32, i32
  }
}

module attributes {stable_mosaic.version = 11 : i64} {
  func.func @_instnorm_prelu_kernel(%arg0: i32, %arg1: memref<8x576xf32, #tpu.memory_space<vmem>>, %arg2: memref<8x1xf32, #tpu.memory_space<vmem>>, %arg3: memref<8x1xf32, #tpu.memory_space<vmem>>, %arg4: memref<8x1xf32, #tpu.memory_space<vmem>>, %arg5: memref<8x576xf32, #tpu.memory_space<vmem>>) attributes {dimension_semantics = [#tpu.dimension_semantics<parallel>], iteration_bounds = array<i64: 1>, scalar_prefetch = 0 : i64, scratch_operands = 0 : i64, tpu.core_type = #tpu.core_type<tc>, window_params = [{transform_indices = @transform_0, window_bounds = array<i64: 8, 576>}, {transform_indices = @transform_1, window_bounds = array<i64: 8, 1>}, {transform_indices = @transform_2, window_bounds = array<i64: 8, 1>}, {transform_indices = @transform_3, window_bounds = array<i64: 8, 1>}, {transform_indices = @transform_4, window_bounds = array<i64: 8, 576>}]} {
    %c0 = arith.constant 0 : index
    %c0_0 = arith.constant 0 : index
    %0 = vector.load %arg1[%c0, %c0_0] : memref<8x576xf32, #tpu.memory_space<vmem>>, vector<8x576xf32>
    %cst = arith.constant dense<0.000000e+00> : vector<8xf32>
    %1 = vector.multi_reduction <add>, %0, %cst [1] : vector<8x576xf32> to vector<8xf32>
    %2 = vector.shape_cast %1 : vector<8xf32> to vector<8x1xf32>
    %cst_1 = arith.constant 5.760000e+02 : f32
    %3 = vector.broadcast %cst_1 : f32 to vector<8x1xf32>
    %4 = arith.divf %2, %3 : vector<8x1xf32>
    %5 = vector.broadcast %4 : vector<8x1xf32> to vector<8x576xf32>
    %6 = arith.subf %0, %5 : vector<8x576xf32>
    %7 = arith.mulf %6, %6 : vector<8x576xf32>
    %cst_2 = arith.constant dense<0.000000e+00> : vector<8xf32>
    %8 = vector.multi_reduction <add>, %7, %cst_2 [1] : vector<8x576xf32> to vector<8xf32>
    %9 = vector.shape_cast %8 : vector<8xf32> to vector<8x1xf32>
    %cst_3 = arith.constant 5.760000e+02 : f32
    %10 = vector.broadcast %cst_3 : f32 to vector<8x1xf32>
    %11 = arith.divf %9, %10 : vector<8x1xf32>
    %12 = vector.broadcast %4 : vector<8x1xf32> to vector<8x576xf32>
    %13 = arith.subf %0, %12 : vector<8x576xf32>
    %cst_4 = arith.constant 9.99999974E-6 : f32
    %14 = vector.broadcast %cst_4 : f32 to vector<8x1xf32>
    %15 = arith.addf %11, %14 : vector<8x1xf32>
    %16 = math.rsqrt %15 : vector<8x1xf32>
    %17 = vector.broadcast %16 : vector<8x1xf32> to vector<8x576xf32>
    %18 = arith.mulf %13, %17 : vector<8x576xf32>
    %c0_5 = arith.constant 0 : index
    %c0_6 = arith.constant 0 : index
    %19 = vector.load %arg2[%c0_5, %c0_6] : memref<8x1xf32, #tpu.memory_space<vmem>>, vector<8x1xf32>
    %cst_7 = arith.constant 1.000000e+00 : f32
    %20 = vector.broadcast %cst_7 : f32 to vector<8x1xf32>
    %21 = arith.addf %20, %19 : vector<8x1xf32>
    %22 = vector.broadcast %21 : vector<8x1xf32> to vector<8x576xf32>
    %23 = arith.mulf %22, %18 : vector<8x576xf32>
    %c0_8 = arith.constant 0 : index
    %c0_9 = arith.constant 0 : index
    %24 = vector.load %arg3[%c0_8, %c0_9] : memref<8x1xf32, #tpu.memory_space<vmem>>, vector<8x1xf32>
    %25 = vector.broadcast %24 : vector<8x1xf32> to vector<8x576xf32>
    %26 = arith.addf %23, %25 : vector<8x576xf32>
    %cst_10 = arith.constant 0.000000e+00 : f32
    %27 = vector.broadcast %cst_10 : f32 to vector<8x576xf32>
    %28 = arith.cmpf oge, %26, %27 : vector<8x576xf32>
    %c0_11 = arith.constant 0 : index
    %c0_12 = arith.constant 0 : index
    %29 = vector.load %arg4[%c0_11, %c0_12] : memref<8x1xf32, #tpu.memory_space<vmem>>, vector<8x1xf32>
    %30 = vector.broadcast %29 : vector<8x1xf32> to vector<8x576xf32>
    %31 = arith.mulf %30, %26 : vector<8x576xf32>
    %32 = arith.select %28, %26, %31 : vector<8x576xi1>, vector<8x576xf32>
    %c0_13 = arith.constant 0 : index
    %c0_14 = arith.constant 0 : index
    %33 = vector.load %arg5[%c0_13, %c0_14] : memref<8x576xf32, #tpu.memory_space<vmem>>, vector<8x576xf32>
    tpu.vector_store %arg5[%c0_13, %c0_14], %32 {strides = array<i32>} : memref<8x576xf32, #tpu.memory_space<vmem>>, vector<8x576xf32>,
    return
  }
  func.func @transform_0(%arg0: i32) -> (i32, i32) {
    %c0_i32 = arith.constant 0 : i32
    %c0_i32_0 = arith.constant 0 : i32
    return %arg0, %c0_i32 : i32, i32
  }
  func.func @transform_1(%arg0: i32) -> (i32, i32) {
    %c0_i32 = arith.constant 0 : i32
    %c0_i32_0 = arith.constant 0 : i32
    return %arg0, %c0_i32 : i32, i32
  }
  func.func @transform_2(%arg0: i32) -> (i32, i32) {
    %c0_i32 = arith.constant 0 : i32
    %c0_i32_0 = arith.constant 0 : i32
    return %arg0, %c0_i32 : i32, i32
  }
  func.func @transform_3(%arg0: i32) -> (i32, i32) {
    %c0_i32 = arith.constant 0 : i32
    %c0_i32_0 = arith.constant 0 : i32
    return %arg0, %c0_i32 : i32, i32
  }
  func.func @transform_4(%arg0: i32) -> (i32, i32) {
    %c0_i32 = arith.constant 0 : i32
    %c0_i32_0 = arith.constant 0 : i32
    return %arg0, %c0_i32 : i32, i32
  }
}

module attributes {stable_mosaic.version = 11 : i64} {
  func.func @_gemm_bias_kernel(%arg0: i32, %arg1: memref<4x216xbf16, #tpu.memory_space<vmem>>, %arg2: memref<216x1152xbf16, #tpu.memory_space<vmem>>, %arg3: memref<4x1xf32, #tpu.memory_space<vmem>>, %arg4: memref<4x1152xf32, #tpu.memory_space<vmem>>) attributes {dimension_semantics = [#tpu.dimension_semantics<parallel>], iteration_bounds = array<i64: 6>, scalar_prefetch = 0 : i64, scratch_operands = 0 : i64, tpu.core_type = #tpu.core_type<tc>, window_params = [{pipeline_mode = #tpu.pipeline_mode<synchronous>, transform_indices = @transform_0, window_bounds = array<i64: 4, 216>}, {transform_indices = @transform_1, window_bounds = array<i64: 216, 1152>}, {pipeline_mode = #tpu.pipeline_mode<synchronous>, transform_indices = @transform_2, window_bounds = array<i64: 4, 1>}, {transform_indices = @transform_3, window_bounds = array<i64: 4, 1152>}]} {
    %c0 = arith.constant 0 : index
    %c0_0 = arith.constant 0 : index
    %0 = vector.load %arg1[%c0, %c0_0] : memref<4x216xbf16, #tpu.memory_space<vmem>>, vector<4x216xbf16>
    %c0_1 = arith.constant 0 : index
    %c0_2 = arith.constant 0 : index
    %1 = vector.load %arg2[%c0_1, %c0_2] : memref<216x1152xbf16, #tpu.memory_space<vmem>>, vector<216x1152xbf16>
    %cst = arith.constant dense<0.000000e+00> : vector<4x1152xf32>
    %2 = tpu.matmul %0, %1, %cst {dimension_numbers = #tpu.dot_dimension_numbers<[1], [0], [0], [1], [0, 0, 1, 1], [], []>} : vector<4x216xbf16>, vector<216x1152xbf16>, vector<4x1152xf32> -> vector<4x1152xf32>
    %c0_3 = arith.constant 0 : index
    %c0_4 = arith.constant 0 : index
    %3 = vector.load %arg3[%c0_3, %c0_4] : memref<4x1xf32, #tpu.memory_space<vmem>>, vector<4x1xf32>
    %4 = vector.broadcast %3 : vector<4x1xf32> to vector<4x1152xf32>
    %5 = arith.addf %2, %4 : vector<4x1152xf32>
    %c0_5 = arith.constant 0 : index
    %c0_6 = arith.constant 0 : index
    %6 = vector.load %arg4[%c0_5, %c0_6] : memref<4x1152xf32, #tpu.memory_space<vmem>>, vector<4x1152xf32>
    tpu.vector_store %arg4[%c0_5, %c0_6], %5 {strides = array<i32>} : memref<4x1152xf32, #tpu.memory_space<vmem>>, vector<4x1152xf32>,
    return
  }
  func.func @transform_0(%arg0: i32) -> (i32, i32) {
    %c0_i32 = arith.constant 0 : i32
    %c0_i32_0 = arith.constant 0 : i32
    %c0_i32_1 = arith.constant 0 : i32
    return %c0_i32, %c0_i32_0 : i32, i32
  }
  func.func @transform_1(%arg0: i32) -> (i32, i32) {
    %c0_i32 = arith.constant 0 : i32
    %c0_i32_0 = arith.constant 0 : i32
    return %c0_i32, %arg0 : i32, i32
  }
  func.func @transform_2(%arg0: i32) -> (i32, i32) {
    %c0_i32 = arith.constant 0 : i32
    %c0_i32_0 = arith.constant 0 : i32
    %c0_i32_1 = arith.constant 0 : i32
    return %c0_i32, %c0_i32_0 : i32, i32
  }
  func.func @transform_3(%arg0: i32) -> (i32, i32) {
    %c0_i32 = arith.constant 0 : i32
    %c0_i32_0 = arith.constant 0 : i32
    return %c0_i32, %arg0 : i32, i32
  }
}

module attributes {stable_mosaic.version = 11 : i64} {
  func.func @_gemm_bias_kernel(%arg0: i32, %arg1: memref<4x324xbf16, #tpu.memory_space<vmem>>, %arg2: memref<324x1152xbf16, #tpu.memory_space<vmem>>, %arg3: memref<4x1xf32, #tpu.memory_space<vmem>>, %arg4: memref<4x1152xf32, #tpu.memory_space<vmem>>) attributes {dimension_semantics = [#tpu.dimension_semantics<parallel>], iteration_bounds = array<i64: 6>, scalar_prefetch = 0 : i64, scratch_operands = 0 : i64, tpu.core_type = #tpu.core_type<tc>, window_params = [{pipeline_mode = #tpu.pipeline_mode<synchronous>, transform_indices = @transform_0, window_bounds = array<i64: 4, 324>}, {transform_indices = @transform_1, window_bounds = array<i64: 324, 1152>}, {pipeline_mode = #tpu.pipeline_mode<synchronous>, transform_indices = @transform_2, window_bounds = array<i64: 4, 1>}, {transform_indices = @transform_3, window_bounds = array<i64: 4, 1152>}]} {
    %c0 = arith.constant 0 : index
    %c0_0 = arith.constant 0 : index
    %0 = vector.load %arg1[%c0, %c0_0] : memref<4x324xbf16, #tpu.memory_space<vmem>>, vector<4x324xbf16>
    %c0_1 = arith.constant 0 : index
    %c0_2 = arith.constant 0 : index
    %1 = vector.load %arg2[%c0_1, %c0_2] : memref<324x1152xbf16, #tpu.memory_space<vmem>>, vector<324x1152xbf16>
    %cst = arith.constant dense<0.000000e+00> : vector<4x1152xf32>
    %2 = tpu.matmul %0, %1, %cst {dimension_numbers = #tpu.dot_dimension_numbers<[1], [0], [0], [1], [0, 0, 1, 1], [], []>} : vector<4x324xbf16>, vector<324x1152xbf16>, vector<4x1152xf32> -> vector<4x1152xf32>
    %c0_3 = arith.constant 0 : index
    %c0_4 = arith.constant 0 : index
    %3 = vector.load %arg3[%c0_3, %c0_4] : memref<4x1xf32, #tpu.memory_space<vmem>>, vector<4x1xf32>
    %4 = vector.broadcast %3 : vector<4x1xf32> to vector<4x1152xf32>
    %5 = arith.addf %2, %4 : vector<4x1152xf32>
    %c0_5 = arith.constant 0 : index
    %c0_6 = arith.constant 0 : index
    %6 = vector.load %arg4[%c0_5, %c0_6] : memref<4x1152xf32, #tpu.memory_space<vmem>>, vector<4x1152xf32>
    tpu.vector_store %arg4[%c0_5, %c0_6], %5 {strides = array<i32>} : memref<4x1152xf32, #tpu.memory_space<vmem>>, vector<4x1152xf32>,
    return
  }
  func.func @transform_0(%arg0: i32) -> (i32, i32) {
    %c0_i32 = arith.constant 0 : i32
    %c0_i32_0 = arith.constant 0 : i32
    %c0_i32_1 = arith.constant 0 : i32
    return %c0_i32, %c0_i32_0 : i32, i32
  }
  func.func @transform_1(%arg0: i32) -> (i32, i32) {
    %c0_i32 = arith.constant 0 : i32
    %c0_i32_0 = arith.constant 0 : i32
    return %c0_i32, %arg0 : i32, i32
  }
  func.func @transform_2(%arg0: i32) -> (i32, i32) {
    %c0_i32 = arith.constant 0 : i32
    %c0_i32_0 = arith.constant 0 : i32
    %c0_i32_1 = arith.constant 0 : i32
    return %c0_i32, %c0_i32_0 : i32, i32
  }
  func.func @transform_3(%arg0: i32) -> (i32, i32) {
    %c0_i32 = arith.constant 0 : i32
    %c0_i32_0 = arith.constant 0 : i32
    return %c0_i32, %arg0 : i32, i32
  }
}

</mosaic_0001>

<llo_original>
// kernel: _lambda_.19
$region0: #{_lambda_.19}
  #allocation0 [shape = 'u32[]', space=smem, size = 0x4, offset = 0x4, fixed_abs, tag = 'smem constant byte address 0x4 - core index']
  #allocation1 [shape = 'u32[72,128]{1,0:T(1,128)}', space=vmem, size = 0x9000, scoped, tag = 'internal scratch']
  %s0 = inlined_call_operand.vmem [shape: bf16[4,54], index: 0, kind: input, shape index: {}]
  %s1 = inlined_call_operand.vmem [shape: bf16[54,6912], index: 1, kind: input, shape index: {}]
  %s2 = inlined_call_operand.vmem [shape: f32[4,1], index: 2, kind: input, shape index: {}]
  %s3 = inlined_call_operand.vmem [shape: f32[4,6912], index: 3, kind: output, shape index: {}]
  %s4 = sld [smem:[#allocation0]]
  $region71: #{_lambda_.19} parent=0
    _
  %s6 = ssub.s32 1, %s4
  %s7 = scalar_select 0, %s6, %s4
  $region1: #{_lambda_.19} parent=0
    #allocation2 [shape = 'u8[258048]{0}', space=vmem, size = 0x3f000, scoped, tag = 'input window, operand 1']
    loop: start=0, step=1, limit=8
    $region2: #{_lambda_.19} parent=1 // loop_pre_header
      _
    $region3: #{_lambda_.19} parent=1 // loop_header
      %s9 = sphi 0, %s13
      %p10 = scmp.ge.s32.totalorder %s9, 8
      %s17 = sphi 0, %s17
      %s19 = sphi 0, %s17
      %s20 = sphi 0, %s19
      %s34 = sphi 0, %s20
      %s40 = sphi 0, %s42
      %s43 = sphi 0, %s40
      %s44 = sphi 0, %s43
      %s60 = sphi 0, %s44
      %s64 = sphi 0, %s64
      %s66 = sphi 0, %s64
      %s67 = sphi 0, %s66
      %s81 = sphi 0, %s67
      %s87 = sphi 0, %s89
      %s90 = sphi 0, %s87
      %s91 = sphi 0, %s90
      %s107 = sphi 0, %s91
    $region4: #{_lambda_.19} parent=1 // loop_header_branch
      %12 = sbr.rel (%p10) target = $region8
    $region5: #{_lambda_.19} parent=1 // loop_body
      %s14 = ssub.s32 %s9, 1
      %s15 = ssub.s32 %s9, 2
      %s16 = sadd.s32 %s9, 1
      %s18 = sadd.s32 %s17, 1
      %p21 = scmp.eq.s32.totalorder %s9, 5
      %p22 = scmp.ne.s32.totalorder %s17, %s19
      %p23 = scmp.eq.s32.totalorder %s9, 0
      %p24 = por %p22, %p23
      %p25 = scmp.ne.s32.totalorder %s17, %s19
      %p26 = scmp.eq.s32.totalorder %s14, 5
      %p27 = por %p25, %p26
      %p28 = scmp.ne.s32.totalorder %s19, %s20
      %p29 = scmp.eq.s32.totalorder %s14, 0
      %p30 = por %p28, %p29
      %p31 = scmp.ne.s32.totalorder %s19, %s20
      %p32 = scmp.eq.s32.totalorder %s15, 5
      %p33 = por %p31, %p32
      %p35 = scmp.ne.s32.totalorder %s20, %s34
      %p36 = scmp.eq.s32.totalorder %s15, 0
      %p37 = por %p35, %p36
      %s38 = ssub.s32 %s9, %s16
      %p39 = scmp.eq.s32.totalorder %s38, 0
      %s41 = sadd.s32 %s40, 1
      %s42 = scalar_select %p39, %s40, %s41
      %p45 = pneg %p39
      %p46 = scmp.eq.s32.totalorder %s9, 5
      %p47 = por %p45, %p46
      %p48 = scmp.ne.s32.totalorder %s40, %s43
      %p49 = scmp.eq.s32.totalorder %s9, 0
      %p50 = por %p48, %p49
      %p51 = scmp.ne.s32.totalorder %s40, %s43
      %p52 = scmp.eq.s32.totalorder %s14, 5
      %p53 = por %p51, %p52
      %p54 = scmp.ne.s32.totalorder %s43, %s44
      %p55 = scmp.eq.s32.totalorder %s14, 0
      %p56 = por %p54, %p55
      %p57 = scmp.ne.s32.totalorder %s43, %s44
      %p58 = scmp.eq.s32.totalorder %s15, 5
      %p59 = por %p57, %p58
      %p61 = scmp.ne.s32.totalorder %s44, %s60
      %p62 = scmp.eq.s32.totalorder %s15, 0
      %p63 = por %p61, %p62
      %s65 = sadd.s32 %s64, 1
      %p68 = scmp.eq.s32.totalorder %s9, 5
      %p69 = scmp.ne.s32.totalorder %s64, %s66
      %p70 = scmp.eq.s32.totalorder %s9, 0
      %p71 = por %p69, %p70
      %p72 = scmp.ne.s32.totalorder %s64, %s66
      %p73 = scmp.eq.s32.totalorder %s14, 5
      %p74 = por %p72, %p73
      %p75 = scmp.ne.s32.totalorder %s66, %s67
      %p76 = scmp.eq.s32.totalorder %s14, 0
      %p77 = por %p75, %p76
      %p78 = scmp.ne.s32.totalorder %s66, %s67
      %p79 = scmp.eq.s32.totalorder %s15, 5
      %p80 = por %p78, %p79
      %p82 = scmp.ne.s32.totalorder %s67, %s81
      %p83 = scmp.eq.s32.totalorder %s15, 0
      %p84 = por %p82, %p83
      %s85 = ssub.s32 %s9, %s16
      %p86 = scmp.eq.s32.totalorder %s85, 0
      %s88 = sadd.s32 %s87, 1
      %s89 = scalar_select %p86, %s87, %s88
      %p92 = pneg %p86
      %p93 = scmp.eq.s32.totalorder %s9, 5
      %p94 = por %p92, %p93
      %p95 = scmp.ne.s32.totalorder %s87, %s90
      %p96 = scmp.eq.s32.totalorder %s9, 0
      %p97 = por %p95, %p96
      %p98 = scmp.ne.s32.totalorder %s87, %s90
      %p99 = scmp.eq.s32.totalorder %s14, 5
      %p100 = por %p98, %p99
      %p101 = scmp.ne.s32.totalorder %s90, %s91
      %p102 = scmp.eq.s32.totalorder %s14, 0
      %p103 = por %p101, %p102
      %p104 = scmp.ne.s32.totalorder %s90, %s91
      %p105 = scmp.eq.s32.totalorder %s15, 5
      %p106 = por %p104, %p105
      %p108 = scmp.ne.s32.totalorder %s91, %s107
      %p109 = scmp.eq.s32.totalorder %s15, 0
      %p110 = por %p108, %p109
      %p111 = scmp.le.s32.totalorder 1, %s9
      %p112 = scmp.lt.s32.totalorder %s9, 7
      %p113 = pnand %p111, %p112
      %p114 = pneg %p113
      // Predicated region
      $region9: #{_lambda_.19} parent=5 // pred_check
        _
      $region10: #{_lambda_.19} parent=5 // pred_check_branch
        %116 = sbr.rel (%p113) target = $region12
      $region11: #{_lambda_.19} parent=5 // pred_region
        %s117 = ssub.s32 %s9, 1
        // Predicated region
        $region13: #{_lambda_.19} parent=11 // pred_check
          %p118 = pneg %p30
        $region14: #{_lambda_.19} parent=11 // pred_check_branch
          %120 = sbr.rel (%p118) target = $region16
        $region15: #{_lambda_.19} parent=11 // pred_region
          _
        $region16: #{_lambda_.19} parent=11 // pred_fallthru
          _
        // Predicated region
        $region17: #{_lambda_.19} parent=11 // pred_check
          %p121 = pneg %p77
        $region18: #{_lambda_.19} parent=11 // pred_check_branch
          %123 = sbr.rel (%p121) target = $region20
        $region19: #{_lambda_.19} parent=11 // pred_region
          _
        $region20: #{_lambda_.19} parent=11 // pred_fallthru
          _
      $region12: #{_lambda_.19} parent=5 // pred_fallthru
        _
      %p124 = scmp.lt.s32.totalorder %s9, 6
      // Predicated region
      $region21: #{_lambda_.19} parent=5 // pred_check
        %p125 = pneg %p124
      $region22: #{_lambda_.19} parent=5 // pred_check_branch
        %127 = sbr.rel (%p125) target = $region24
      $region23: #{_lambda_.19} parent=5 // pred_region
        // Predicated region
        $region25: #{_lambda_.19} parent=23 // pred_check
          %p128 = pneg %p50
        $region26: #{_lambda_.19} parent=23 // pred_check_branch
          %130 = sbr.rel (%p128) target = $region28
        $region27: #{_lambda_.19} parent=23 // pred_region
          %s131 = sand.u32 %s40, 1
          %s132 = sand.u32 %s40, 1
          %s133 = smul.addr %s132, 252
          %s134 = scalar_lea.vmem [#allocation2], %s133
          %s135 = smul.u32 9, %s9
          %s136 = smul.addr %s135, 4
          %s137 = scalar_lea.vmem %s1, %s136
          // Predicated region
          $region29: #{_lambda_.19} parent=27 // pred_check
            _
          $region30: #{_lambda_.19} parent=27 // pred_check_branch
            %139 = sbr.rel (0) target = $region32
          $region31: #{_lambda_.19} parent=27 // pred_region
            // Predicated region
            $region33: #{_lambda_.19} parent=31 // pred_check
              _
            $region34: #{_lambda_.19} parent=31 // pred_check_branch
              %141 = sbr.rel (0) target = $region36
            $region35: #{_lambda_.19} parent=31 // pred_region
              %s142 = scalar_lea.vmem %s137, 32
              %s143 = scalar_lea.vmem %s134, 32 [#allocation2]
              loop: start=0, step=1, limit=1
              $region37: #{_lambda_.19} parent=35 // loop_pre_header
                _
              $region38: #{_lambda_.19} parent=35 // loop_header
                %s145 = sphi 0, %s149
                %p146 = scmp.ge.s32.totalorder %s145, 1
                %s150 = sphi %s137, %s137
                %s151 = sphi %s134, %s134
              $region39: #{_lambda_.19} parent=35 // loop_header_branch
                %148 = sbr.rel (%p146) target = $region43
              $region40: #{_lambda_.19} parent=35 // loop_body
                %v152 = vld [vmem:[%s150] sm:$0xff]
                %153 = vst [vmem:[%s151] sm:$0xff] %v152
                %v154 = vld [vmem:[%s150 + $0x8] sm:$0xff]
                %155 = vst [vmem:[%s151 + $0x8] sm:$0xff] %v154
                %v156 = vld [vmem:[%s150 + $0x10] sm:$0xff]
                %157 = vst [vmem:[%s151 + $0x10] sm:$0xff] %v156
                %v158 = vld [vmem:[%s150 + $0x18] sm:$0xff]
                %159 = vst [vmem:[%s151 + $0x18] sm:$0xff] %v158
                %v160 = vld [vmem:[%s150 + $0xd8] sm:$0xff]
                %161 = vst [vmem:[%s151 + $0x24] sm:$0xff] %v160
                %v162 = vld [vmem:[%s150 + $0xe0] sm:$0xff]
                %163 = vst [vmem:[%s151 + $0x2c] sm:$0xff] %v162
                %v164 = vld [vmem:[%s150 + $0xe8] sm:$0xff]
                %165 = vst [vmem:[%s151 + $0x34] sm:$0xff] %v164
                %v166 = vld [vmem:[%s150 + $0xf0] sm:$0xff]
                %167 = vst [vmem:[%s151 + $0x3c] sm:$0xff] %v166
                %v168 = vld [vmem:[%s150 + $0x1b0] sm:$0xff]
                %169 = vst [vmem:[%s151 + $0x48] sm:$0xff] %v168
                %v170 = vld [vmem:[%s150 + $0x1b8] sm:$0xff]
                %171 = vst [vmem:[%s151 + $0x50] sm:$0xff] %v170
                %v172 = vld [vmem:[%s150 + $0x1c0] sm:$0xff]
                %173 = vst [vmem:[%s151 + $0x58] sm:$0xff] %v172
                %v174 = vld [vmem:[%s150 + $0x1c8] sm:$0xff]
                %175 = vst [vmem:[%s151 + $0x60] sm:$0xff] %v174
                %v176 = vld [vmem:[%s150 + $0x288] sm:$0xff]
                %177 = vst [vmem:[%s151 + $0x6c] sm:$0xff] %v176
                %v178 = vld [vmem:[%s150 + $0x290] sm:$0xff]
                %179 = vst [vmem:[%s151 + $0x74] sm:$0xff] %v178
                %v180 = vld [vmem:[%s150 + $0x298] sm:$0xff]
                %181 = vst [vmem:[%s151 + $0x7c] sm:$0xff] %v180
                %v182 = vld [vmem:[%s150 + $0x2a0] sm:$0xff]
                %183 = vst [vmem:[%s151 + $0x84] sm:$0xff] %v182
                %v184 = vld [vmem:[%s150 + $0x360] sm:$0xff]
                %185 = vst [vmem:[%s151 + $0x90] sm:$0xff] %v184
                %v186 = vld [vmem:[%s150 + $0x368] sm:$0xff]
                %187 = vst [vmem:[%s151 + $0x98] sm:$0xff] %v186
                %v188 = vld [vmem:[%s150 + $0x370] sm:$0xff]
                %189 = vst [vmem:[%s151 + $0xa0] sm:$0xff] %v188
                %v190 = vld [vmem:[%s150 + $0x378] sm:$0xff]
                %191 = vst [vmem:[%s151 + $0xa8] sm:$0xff] %v190
                %v192 = vld [vmem:[%s150 + $0x438] sm:$0xff]
                %193 = vst [vmem:[%s151 + $0xb4] sm:$0xff] %v192
                %v194 = vld [vmem:[%s150 + $0x440] sm:$0xff]
                %195 = vst [vmem:[%s151 + $0xbc] sm:$0xff] %v194
                %v196 = vld [vmem:[%s150 + $0x448] sm:$0xff]
                %197 = vst [vmem:[%s151 + $0xc4] sm:$0xff] %v196
                %v198 = vld [vmem:[%s150 + $0x450] sm:$0xff]
                %199 = vst [vmem:[%s151 + $0xcc] sm:$0xff] %v198
                %v200 = vld [vmem:[%s150 + $0x510] sm:$0xff]
                %201 = vst [vmem:[%s151 + $0xd8] sm:$0xff] %v200
                %v202 = vld [vmem:[%s150 + $0x518] sm:$0xff]
                %203 = vst [vmem:[%s151 + $0xe0] sm:$0xff] %v202
                %v204 = vld [vmem:[%s150 + $0x520] sm:$0xff]
                %205 = vst [vmem:[%s151 + $0xe8] sm:$0xff] %v204
                %v206 = vld [vmem:[%s150 + $0x528] sm:$0xff]
                %207 = vst [vmem:[%s151 + $0xf0] sm:$0xff] %v206
              $region41: #{_lambda_.19} parent=35 // loop_footer
                %s149 = sadd.s32 1, %s145
              $region42: #{_lambda_.19} parent=35 // loop_footer_branch
                %144 = sbr.rel target = $region38
              $region43: #{_lambda_.19} parent=35 // loop_exit
                _
              %s209 = ssub.s32 16, 1
              loop: start=0, step=1, limit=1
              $region44: #{_lambda_.19} parent=35 // loop_pre_header
                _
              $region45: #{_lambda_.19} parent=35 // loop_header
                %s211 = sphi 0, %s215
                %p212 = scmp.ge.s32.totalorder %s211, 1
                %s216 = sphi %s142, %s142
                %s217 = sphi %s143, %s143
              $region46: #{_lambda_.19} parent=35 // loop_header_branch
                %214 = sbr.rel (%p212) target = $region50
              $region47: #{_lambda_.19} parent=35 // loop_body
                %v218 = vld [vmem:[%s216] sm:%s209]
                %219 = vst [vmem:[%s217] sm:%s209] %v218
                %v220 = vld [vmem:[%s216 + $0xd8] sm:%s209]
                %221 = vst [vmem:[%s217 + $0x24] sm:%s209] %v220
                %v222 = vld [vmem:[%s216 + $0x1b0] sm:%s209]
                %223 = vst [vmem:[%s217 + $0x48] sm:%s209] %v222
                %v224 = vld [vmem:[%s216 + $0x288] sm:%s209]
                %225 = vst [vmem:[%s217 + $0x6c] sm:%s209] %v224
                %v226 = vld [vmem:[%s216 + $0x360] sm:%s209]
                %227 = vst [vmem:[%s217 + $0x90] sm:%s209] %v226
                %v228 = vld [vmem:[%s216 + $0x438] sm:%s209]
                %229 = vst [vmem:[%s217 + $0xb4] sm:%s209] %v228
                %v230 = vld [vmem:[%s216 + $0x510] sm:%s209]
                %231 = vst [vmem:[%s217 + $0xd8] sm:%s209] %v230
              $region48: #{_lambda_.19} parent=35 // loop_footer
                %s215 = sadd.s32 1, %s211
              $region49: #{_lambda_.19} parent=35 // loop_footer_branch
                %210 = sbr.rel target = $region45
              $region50: #{_lambda_.19} parent=35 // loop_exit
                _
            $region36: #{_lambda_.19} parent=31 // pred_fallthru
              _
          $region32: #{_lambda_.19} parent=27 // pred_fallthru
            _
          %232 = vnop
        $region28: #{_lambda_.19} parent=23 // pred_fallthru
          _
      $region24: #{_lambda_.19} parent=5 // pred_fallthru
        _
      %p233 = scmp.le.s32.totalorder 1, %s9
      %p234 = scmp.lt.s32.totalorder %s9, 7
      %p235 = pnand %p233, %p234
      %p236 = pneg %p235
      // Predicated region
      $region51: #{_lambda_.19} parent=5 // pred_check
        _
      $region52: #{_lambda_.19} parent=5 // pred_check_branch
        %238 = sbr.rel (%p235) target = $region54
      $region53: #{_lambda_.19} parent=5 // pred_region
        %s239 = ssub.s32 %s9, 1
        %s240 = sand.u32 %s43, 1
        %s241 = sand.u32 %s43, 1
        %s242 = smul.addr %s241, 252
        %s243 = scalar_lea.vmem [#allocation2], %s242
        // Predicated region
        $region55: #{_lambda_.19} parent=53 // pred_check
          %p244 = pneg %p56
        $region56: #{_lambda_.19} parent=53 // pred_check_branch
          %246 = sbr.rel (%p244) target = $region58
        $region57: #{_lambda_.19} parent=53 // pred_region
          _
        $region58: #{_lambda_.19} parent=53 // pred_fallthru
          _
        %p247 = pneg %p30
        %p248 = pneg %p27
        %s249 = sand.u32 %s43, 1
        %s250 = sand.u32 %s43, 1
        %s251 = smul.addr %s250, 252
        %s252 = scalar_lea.vmem [#allocation2], %s251
        %p253 = pneg %p56
        %p254 = pneg %p53
        %p255 = pneg %p77
        %p256 = pneg %p74
        %p257 = pneg %p103
        %p258 = pneg %p100
        %s259 = smul.u32 9, %s14
        %p260 = scmp.lt.s32.totalorder %s259, 53
        %s261 = scalar_select %p260, %s259, 53
        %s262 = smul.addr %s261, 4
        %s263 = scalar_lea.vmem %s3, %s262
        %s264 = smul.u32 9, %s14
        %s265 = smul.u32 9, %s14
        %p266 = scmp.lt.s32.totalorder %s265, 53
        %s267 = scalar_select %p266, %s265, 53
        %s268 = smul.addr %s267, 4
        %s269 = scalar_lea.vmem %s3, %s268
        %s270 = smul.u32 9, %s14
        %v272 = vld [vmem:[%s0] sm:$0x3]
        %v273 = vld [vmem:[%s243] sm:$0xff]
        %v274 = vld [vmem:[%s243 + $0x8] sm:$0xff]
        %v275 = vld [vmem:[%s243 + $0x10] sm:$0xff]
        %v276 = vld [vmem:[%s243 + $0x18] sm:$0xff]
        %v277 = vld [vmem:[%s243 + $0x20] sm:$0xf]
        %v278 = vld [vmem:[%s243 + $0x24] sm:$0xff]
        %v279 = vld [vmem:[%s243 + $0x2c] sm:$0xff]
        %v280 = vld [vmem:[%s243 + $0x34] sm:$0xff]
        %v281 = vld [vmem:[%s243 + $0x3c] sm:$0xff]
        %v282 = vld [vmem:[%s243 + $0x44] sm:$0xf]
        %v283 = vld [vmem:[%s243 + $0x48] sm:$0xff]
        %v284 = vld [vmem:[%s243 + $0x50] sm:$0xff]
        %v285 = vld [vmem:[%s243 + $0x58] sm:$0xff]
        %v286 = vld [vmem:[%s243 + $0x60] sm:$0xff]
        %v287 = vld [vmem:[%s243 + $0x68] sm:$0xf]
        %v288 = vld [vmem:[%s243 + $0x6c] sm:$0xff]
        %v289 = vld [vmem:[%s243 + $0x74] sm:$0xff]
        %v290 = vld [vmem:[%s243 + $0x7c] sm:$0xff]
        %v291 = vld [vmem:[%s243 + $0x84] sm:$0xff]
        %v292 = vld [vmem:[%s243 + $0x8c] sm:$0xf]
        %v293 = vld [vmem:[%s243 + $0x90] sm:$0xff]
        %v294 = vld [vmem:[%s243 + $0x98] sm:$0xff]
        %v295 = vld [vmem:[%s243 + $0xa0] sm:$0xff]
        %v296 = vld [vmem:[%s243 + $0xa8] sm:$0xff]
        %v297 = vld [vmem:[%s243 + $0xb0] sm:$0xf]
        %v298 = vld [vmem:[%s243 + $0xb4] sm:$0xff]
        %v299 = vld [vmem:[%s243 + $0xbc] sm:$0xff]
        %v300 = vld [vmem:[%s243 + $0xc4] sm:$0xff]
        %v301 = vld [vmem:[%s243 + $0xcc] sm:$0xff]
        %v302 = vld [vmem:[%s243 + $0xd4] sm:$0xf]
        %v303 = vld [vmem:[%s243 + $0xd8] sm:$0x77]
        %v304 = vld [vmem:[%s243 + $0xe0] sm:$0x77]
        %v305 = vld [vmem:[%s243 + $0xe8] sm:$0x77]
        %v306 = vld [vmem:[%s243 + $0xf0] sm:$0x77]
        %v307 = vld [vmem:[%s243 + $0xf8] sm:$0x7]
        %v308 = vld [vmem:[%s2] sm:$0xf]
        %310 = vset.pattern.permute.xlu0 0
        %311 = vperm.xlu0 %310, %v308
        %v312 = vpop.permute.xlu0 %311
        %v349 = vunpack.c.l.b16 %v273
        %v350 = vunpack.c.h.b16 %v273
        %v351 = vunpack.c.l.b16 %v274
        %v352 = vunpack.c.h.b16 %v274
        %v353 = vunpack.c.l.b16 %v275
        %v354 = vunpack.c.h.b16 %v275
        %v355 = vunpack.c.l.b16 %v276
        %v356 = vunpack.c.h.b16 %v276
        %v357 = vunpack.c.l.b16 %v277
        %v358 = vunpack.c.l.b16 %v278
        %v359 = vunpack.c.h.b16 %v278
        %v360 = vunpack.c.l.b16 %v279
        %v361 = vunpack.c.h.b16 %v279
        %v362 = vunpack.c.l.b16 %v280
        %v363 = vunpack.c.h.b16 %v280
        %v364 = vunpack.c.l.b16 %v281
        %v365 = vunpack.c.h.b16 %v281
        %v366 = vunpack.c.l.b16 %v282
        %v367 = vunpack.c.l.b16 %v283
        %v368 = vunpack.c.h.b16 %v283
        %v369 = vunpack.c.l.b16 %v284
        %v370 = vunpack.c.h.b16 %v284
        %v371 = vunpack.c.l.b16 %v285
        %v372 = vunpack.c.h.b16 %v285
        %v373 = vunpack.c.l.b16 %v286
        %v374 = vunpack.c.h.b16 %v286
        %v375 = vunpack.c.l.b16 %v287
        %v376 = vunpack.c.l.b16 %v288
        %v377 = vunpack.c.h.b16 %v288
        %v378 = vunpack.c.l.b16 %v289
        %v379 = vunpack.c.h.b16 %v289
        %v380 = vunpack.c.l.b16 %v290
        %v381 = vunpack.c.h.b16 %v290
        %v382 = vunpack.c.l.b16 %v291
        %v383 = vunpack.c.h.b16 %v291
        %v384 = vunpack.c.l.b16 %v292
        %v385 = vunpack.c.l.b16 %v293
        %v386 = vunpack.c.h.b16 %v293
        %v387 = vunpack.c.l.b16 %v294
        %v388 = vunpack.c.h.b16 %v294
        %v389 = vunpack.c.l.b16 %v295
        %v390 = vunpack.c.h.b16 %v295
        %v391 = vunpack.c.l.b16 %v296
        %v392 = vunpack.c.h.b16 %v296
        %v393 = vunpack.c.l.b16 %v297
        %v394 = vunpack.c.l.b16 %v298
        %v395 = vunpack.c.h.b16 %v298
        %v396 = vunpack.c.l.b16 %v299
        %v397 = vunpack.c.h.b16 %v299
        %v398 = vunpack.c.l.b16 %v300
        %v399 = vunpack.c.h.b16 %v300
        %v400 = vunpack.c.l.b16 %v301
        %v401 = vunpack.c.h.b16 %v301
        %v402 = vunpack.c.l.b16 %v302
        %v403 = vunpack.c.l.b16 %v303
        %v404 = vunpack.c.h.b16 %v303
        %v405 = vunpack.c.l.b16 %v304
        %v406 = vunpack.c.h.b16 %v304
        %v407 = vunpack.c.l.b16 %v305
        %v408 = vunpack.c.h.b16 %v305
        %v409 = vunpack.c.l.b16 %v306
        %v410 = vunpack.c.h.b16 %v306
        %v411 = vunpack.c.l.b16 %v307
        %v412 = vpack.c.b16 %v358, %v349
        %v413 = vpack.c.b16 %v359, %v350
        %v414 = vpack.c.b16 %v360, %v351
        %v415 = vpack.c.b16 %v361, %v352
        %v416 = vpack.c.b16 %v362, %v353
        %v417 = vpack.c.b16 %v363, %v354
        %v418 = vpack.c.b16 %v364, %v355
        %v419 = vpack.c.b16 %v365, %v356
        %v420 = vpack.c.b16 %v366, %v357
        %v421 = vpack.c.b16 %v376, %v367
        %v422 = vpack.c.b16 %v377, %v368
        %v423 = vpack.c.b16 %v378, %v369
        %v424 = vpack.c.b16 %v379, %v370
        %v425 = vpack.c.b16 %v380, %v371
        %v426 = vpack.c.b16 %v381, %v372
        %v427 = vpack.c.b16 %v382, %v373
        %v428 = vpack.c.b16 %v383, %v374
        %v429 = vpack.c.b16 %v384, %v375
        %v430 = vpack.c.b16 %v394, %v385
        %v431 = vpack.c.b16 %v395, %v386
        %v432 = vpack.c.b16 %v396, %v387
        %v433 = vpack.c.b16 %v397, %v388
        %v434 = vpack.c.b16 %v398, %v389
        %v435 = vpack.c.b16 %v399, %v390
        %v436 = vpack.c.b16 %v400, %v391
        %v437 = vpack.c.b16 %v401, %v392
        %v438 = vpack.c.b16 %v402, %v393
        %v439 = vpack.c.b16 %v403, %v403
        %v440 = vpack.c.b16 %v404, %v404
        %v441 = vpack.c.b16 %v405, %v405
        %v442 = vpack.c.b16 %v406, %v406
        %v443 = vpack.c.b16 %v407, %v407
        %v444 = vpack.c.b16 %v408, %v408
        %v445 = vpack.c.b16 %v409, %v409
        %v446 = vpack.c.b16 %v410, %v410
        %v447 = vpack.c.b16 %v411, %v411
        %vm475 = vcmask 441344
        %v477 = vsel %vm475, %v272, 0
        %vm479 = vcmask 1042432
        %v481 = vsel %vm479, %v439, 0
        %v484 = vsel %vm479, %v440, 0
        %v487 = vsel %vm479, %v441, 0
        %v490 = vsel %vm479, %v442, 0
        %v493 = vsel %vm479, %v443, 0
        %v496 = vsel %vm479, %v444, 0
        %v499 = vsel %vm479, %v445, 0
        %v502 = vsel %vm479, %v446, 0
        %v505 = vsel %vm479, %v447, 0
        %507 = vmatpush.bf16.msra.mxu0 0
        %508 = vmatpush.bf16.msra.mxu0 0
        %509 = vmatpush.bf16.msra.mxu0 0
        %510 = vmatpush.bf16.msra.mxu0 0
        %511 = vmatpush.bf16.msra.mxu0 %v481
        %512 = vmatpush.bf16.msra.mxu0 %v430
        %513 = vmatpush.bf16.msra.mxu0 %v421
        %514 = vmatpush.bf16.msra.mxu0 %v412
        %515 = vmatmul.bf16.gmra.mxu0 %v477
        %v516 = vpop.f32.mrf.mxu0
        %v517 = vadd.f32 %v312, %v516
        %v518 = vpop.f32.mrf.mxu0
        %519 = vdwg.mxu0
        %520 = vmatpush.bf16.msra.mxu0 0
        %521 = vmatpush.bf16.msra.mxu0 0
        %522 = vmatpush.bf16.msra.mxu0 0
        %523 = vmatpush.bf16.msra.mxu0 0
        %524 = vmatpush.bf16.msra.mxu0 %v484
        %525 = vmatpush.bf16.msra.mxu0 %v431
        %526 = vmatpush.bf16.msra.mxu0 %v422
        %527 = vmatpush.bf16.msra.mxu0 %v413
        %528 = vmatmul.bf16.gmra.mxu0 %v477
        %v529 = vpop.f32.mrf.mxu0
        %v530 = vadd.f32 %v312, %v529
        %v531 = vpop.f32.mrf.mxu0
        %532 = vdwg.mxu0
        %533 = vmatpush.bf16.msra.mxu0 0
        %534 = vmatpush.bf16.msra.mxu0 0
        %535 = vmatpush.bf16.msra.mxu0 0
        %536 = vmatpush.bf16.msra.mxu0 0
        %537 = vmatpush.bf16.msra.mxu0 %v487
        %538 = vmatpush.bf16.msra.mxu0 %v432
        %539 = vmatpush.bf16.msra.mxu0 %v423
        %540 = vmatpush.bf16.msra.mxu0 %v414
        %541 = vmatmul.bf16.gmra.mxu0 %v477
        %v542 = vpop.f32.mrf.mxu0
        %v543 = vadd.f32 %v312, %v542
        %v544 = vpop.f32.mrf.mxu0
        %545 = vdwg.mxu0
        %546 = vmatpush.bf16.msra.mxu0 0
        %547 = vmatpush.bf16.msra.mxu0 0
        %548 = vmatpush.bf16.msra.mxu0 0
        %549 = vmatpush.bf16.msra.mxu0 0
        %550 = vmatpush.bf16.msra.mxu0 %v490
        %551 = vmatpush.bf16.msra.mxu0 %v433
        %552 = vmatpush.bf16.msra.mxu0 %v424
        %553 = vmatpush.bf16.msra.mxu0 %v415
        %554 = vmatmul.bf16.gmra.mxu0 %v477
        %v555 = vpop.f32.mrf.mxu0
        %v556 = vadd.f32 %v312, %v555
        %v557 = vpop.f32.mrf.mxu0
        %558 = vdwg.mxu0
        %559 = vmatpush.bf16.msra.mxu0 0
        %560 = vmatpush.bf16.msra.mxu0 0
        %561 = vmatpush.bf16.msra.mxu0 0
        %562 = vmatpush.bf16.msra.mxu0 0
        %563 = vmatpush.bf16.msra.mxu0 %v493
        %564 = vmatpush.bf16.msra.mxu0 %v434
        %565 = vmatpush.bf16.msra.mxu0 %v425
        %566 = vmatpush.bf16.msra.mxu0 %v416
        %567 = vmatmul.bf16.gmra.mxu0 %v477
        %v568 = vpop.f32.mrf.mxu0
        %v569 = vadd.f32 %v312, %v568
        %v570 = vpop.f32.mrf.mxu0
        %571 = vdwg.mxu0
        %572 = vmatpush.bf16.msra.mxu0 0
        %573 = vmatpush.bf16.msra.mxu0 0
        %574 = vmatpush.bf16.msra.mxu0 0
        %575 = vmatpush.bf16.msra.mxu0 0
        %576 = vmatpush.bf16.msra.mxu0 %v496
        %577 = vmatpush.bf16.msra.mxu0 %v435
        %578 = vmatpush.bf16.msra.mxu0 %v426
        %579 = vmatpush.bf16.msra.mxu0 %v417
        %580 = vmatmul.bf16.gmra.mxu0 %v477
        %v581 = vpop.f32.mrf.mxu0
        %v582 = vadd.f32 %v312, %v581
        %v583 = vpop.f32.mrf.mxu0
        %584 = vdwg.mxu0
        %585 = vmatpush.bf16.msra.mxu0 0
        %586 = vmatpush.bf16.msra.mxu0 0
        %587 = vmatpush.bf16.msra.mxu0 0
        %588 = vmatpush.bf16.msra.mxu0 0
        %589 = vmatpush.bf16.msra.mxu0 %v499
        %590 = vmatpush.bf16.msra.mxu0 %v436
        %591 = vmatpush.bf16.msra.mxu0 %v427
        %592 = vmatpush.bf16.msra.mxu0 %v418
        %593 = vmatmul.bf16.gmra.mxu0 %v477
        %v594 = vpop.f32.mrf.mxu0
        %v595 = vadd.f32 %v312, %v594
        %v596 = vpop.f32.mrf.mxu0
        %597 = vdwg.mxu0
        %598 = vmatpush.bf16.msra.mxu0 0
        %599 = vmatpush.bf16.msra.mxu0 0
        %600 = vmatpush.bf16.msra.mxu0 0
        %601 = vmatpush.bf16.msra.mxu0 0
        %602 = vmatpush.bf16.msra.mxu0 %v502
        %603 = vmatpush.bf16.msra.mxu0 %v437
        %604 = vmatpush.bf16.msra.mxu0 %v428
        %605 = vmatpush.bf16.msra.mxu0 %v419
        %606 = vmatmul.bf16.gmra.mxu0 %v477
        %v607 = vpop.f32.mrf.mxu0
        %v608 = vadd.f32 %v312, %v607
        %v609 = vpop.f32.mrf.mxu0
        %610 = vdwg.mxu0
        %611 = vmatpush.bf16.msra.mxu0 0
        %612 = vmatpush.bf16.msra.mxu0 0
        %613 = vmatpush.bf16.msra.mxu0 0
        %614 = vmatpush.bf16.msra.mxu0 0
        %615 = vmatpush.bf16.msra.mxu0 %v505
        %616 = vmatpush.bf16.msra.mxu0 %v438
        %617 = vmatpush.bf16.msra.mxu0 %v429
        %618 = vmatpush.bf16.msra.mxu0 %v420
        %619 = vmatmul.bf16.gmra.mxu0 %v477
        %v620 = vpop.f32.mrf.mxu0
        %v621 = vadd.f32 %v312, %v620
        %v622 = vpop.f32.mrf.mxu0
        %623 = vdwg.mxu0
        %v632 = vrot.slane %v530, 4
        %v633 = vrot.slane %v556, 4
        %v634 = vrot.slane %v582, 4
        %v635 = vrot.slane %v608, 4
        %vm636 = vcmask 1043456
        %v637 = vsel %vm636, %v517, %v632
        %v638 = vsel %vm636, %v543, %v633
        %v639 = vsel %vm636, %v569, %v634
        %v640 = vsel %vm636, %v595, %v635
        %645 = vst [vmem:[%s269] sm:$0xff] %v637
        %646 = vst [vmem:[%s269 + $0x8] sm:$0xff] %v638
        %647 = vst [vmem:[%s269 + $0x10] sm:$0xff] %v639
        %648 = vst [vmem:[%s269 + $0x18] sm:$0xff] %v640
        %649 = vst [vmem:[%s269 + $0x20] sm:$0xf] %v621
        %s650 = smul.u32 9, %s14
        %p651 = scmp.lt.s32.totalorder %s650, 53
        %s652 = scalar_select %p651, %s650, 53
        %s653 = smul.addr %s652, 4
        %s654 = scalar_lea.vmem %s3, %s653
        // Predicated region
        $region59: #{_lambda_.19} parent=53 // pred_check
          %p655 = pneg %p100
        $region60: #{_lambda_.19} parent=53 // pred_check_branch
          %657 = sbr.rel (%p655) target = $region62
        $region61: #{_lambda_.19} parent=53 // pred_region
          %s658 = smul.u32 9, %s14
        $region62: #{_lambda_.19} parent=53 // pred_fallthru
          _
      $region54: #{_lambda_.19} parent=5 // pred_fallthru
        _
      %p659 = scmp.le.s32.totalorder 2, %s9
      // Predicated region
      $region63: #{_lambda_.19} parent=5 // pred_check
        %p660 = pneg %p659
      $region64: #{_lambda_.19} parent=5 // pred_check_branch
        %662 = sbr.rel (%p660) target = $region66
      $region65: #{_lambda_.19} parent=5 // pred_region
        %s663 = ssub.s32 %s9, 2
        // Predicated region
        $region67: #{_lambda_.19} parent=65 // pred_check
          %p664 = pneg %p106
        $region68: #{_lambda_.19} parent=65 // pred_check_branch
          %666 = sbr.rel (%p664) target = $region70
        $region69: #{_lambda_.19} parent=65 // pred_region
          %s667 = smul.u32 9, %s15
          %p668 = scmp.lt.s32.totalorder %s667, 53
          %s669 = scalar_select %p668, %s667, 53
          %s670 = smul.addr %s669, 4
          %s671 = scalar_lea.vmem %s3, %s670
        $region70: #{_lambda_.19} parent=65 // pred_fallthru
          _
      $region66: #{_lambda_.19} parent=5 // pred_fallthru
        _
    $region6: #{_lambda_.19} parent=1 // loop_footer
      %s13 = sadd.s32 1, %s9
    $region7: #{_lambda_.19} parent=1 // loop_footer_branch
      %8 = sbr.rel target = $region3
    $region8: #{_lambda_.19} parent=1 // loop_exit
      _

// kernel: _lambda_.20
$region0: #{_lambda_.20}
  #allocation0 [shape = 'u32[]', space=smem, size = 0x4, offset = 0x4, fixed_abs, tag = 'smem constant byte address 0x4 - core index']
  #allocation1 [shape = 'u32[72,128]{1,0:T(1,128)}', space=vmem, size = 0x9000, scoped, tag = 'internal scratch']
  %s0 = inlined_call_operand.vmem [shape: f32[8,6912], index: 0, kind: input, shape index: {}]
  %s1 = inlined_call_operand.vmem [shape: f32[8,1], index: 1, kind: input, shape index: {}]
  %s2 = inlined_call_operand.vmem [shape: f32[8,1], index: 2, kind: input, shape index: {}]
  %s3 = inlined_call_operand.vmem [shape: f32[8,1], index: 3, kind: input, shape index: {}]
  %s4 = inlined_call_operand.vmem [shape: f32[8,6912], index: 4, kind: output, shape index: {}]
  %s5 = sld [smem:[#allocation0]]
  $region26: #{_lambda_.20} parent=0
    _
  %s7 = ssub.s32 1, %s5
  %s8 = scalar_select 0, %s7, %s5
  // Predicated region
  $region2: #{_lambda_.20} parent=0 // pred_check
    _
  $region3: #{_lambda_.20} parent=0 // pred_check_branch
    %10 = sbr.rel (0) target = $region5
  $region4: #{_lambda_.20} parent=0 // pred_region
    _
  $region5: #{_lambda_.20} parent=0 // pred_fallthru
    _
  // Predicated region
  $region6: #{_lambda_.20} parent=0 // pred_check
    _
  $region7: #{_lambda_.20} parent=0 // pred_check_branch
    %12 = sbr.rel (0) target = $region9
  $region8: #{_lambda_.20} parent=0 // pred_region
    _
  $region9: #{_lambda_.20} parent=0 // pred_fallthru
    _
  // Predicated region
  $region10: #{_lambda_.20} parent=0 // pred_check
    _
  $region11: #{_lambda_.20} parent=0 // pred_check_branch
    %14 = sbr.rel (0) target = $region13
  $region12: #{_lambda_.20} parent=0 // pred_region
    _
  $region13: #{_lambda_.20} parent=0 // pred_fallthru
    _
  // Predicated region
  $region14: #{_lambda_.20} parent=0 // pred_check
    _
  $region15: #{_lambda_.20} parent=0 // pred_check_branch
    %16 = sbr.rel (0) target = $region17
  $region16: #{_lambda_.20} parent=0 // pred_region
    _
  $region17: #{_lambda_.20} parent=0 // pred_fallthru
    _
  %v17 = vld [vmem:[%s0] sm:$0xff]
  %v18 = vld [vmem:[%s0 + $0x8] sm:$0xff]
  %v19 = vld [vmem:[%s0 + $0x10] sm:$0xff]
  %v20 = vld [vmem:[%s0 + $0x18] sm:$0xff]
  %v21 = vld [vmem:[%s0 + $0x20] sm:$0xff]
  %v22 = vld [vmem:[%s0 + $0x28] sm:$0xff]
  %v23 = vld [vmem:[%s0 + $0x30] sm:$0xff]
  %v24 = vld [vmem:[%s0 + $0x38] sm:$0xff]
  %v25 = vld [vmem:[%s0 + $0x40] sm:$0xff]
  %v26 = vld [vmem:[%s0 + $0x48] sm:$0xff]
  %v27 = vld [vmem:[%s0 + $0x50] sm:$0xff]
  %v28 = vld [vmem:[%s0 + $0x58] sm:$0xff]
  %v29 = vld [vmem:[%s0 + $0x60] sm:$0xff]
  %v30 = vld [vmem:[%s0 + $0x68] sm:$0xff]
  %v31 = vld [vmem:[%s0 + $0x70] sm:$0xff]
  %v32 = vld [vmem:[%s0 + $0x78] sm:$0xff]
  %v33 = vld [vmem:[%s0 + $0x80] sm:$0xff]
  %v34 = vld [vmem:[%s0 + $0x88] sm:$0xff]
  %v35 = vld [vmem:[%s0 + $0x90] sm:$0xff]
  %v36 = vld [vmem:[%s0 + $0x98] sm:$0xff]
  %v37 = vld [vmem:[%s0 + $0xa0] sm:$0xff]
  %v38 = vld [vmem:[%s0 + $0xa8] sm:$0xff]
  %v39 = vld [vmem:[%s0 + $0xb0] sm:$0xff]
  %v40 = vld [vmem:[%s0 + $0xb8] sm:$0xff]
  %v41 = vld [vmem:[%s0 + $0xc0] sm:$0xff]
  %v42 = vld [vmem:[%s0 + $0xc8] sm:$0xff]
  %v43 = vld [vmem:[%s0 + $0xd0] sm:$0xff]
  %v44 = vld [vmem:[%s0 + $0xd8] sm:$0xff]
  %v45 = vld [vmem:[%s0 + $0xe0] sm:$0xff]
  %v46 = vld [vmem:[%s0 + $0xe8] sm:$0xff]
  %v47 = vld [vmem:[%s0 + $0xf0] sm:$0xff]
  %v48 = vld [vmem:[%s0 + $0xf8] sm:$0xff]
  %v49 = vld [vmem:[%s0 + $0x100] sm:$0xff]
  %v50 = vld [vmem:[%s0 + $0x108] sm:$0xff]
  %v51 = vld [vmem:[%s0 + $0x110] sm:$0xff]
  %v52 = vld [vmem:[%s0 + $0x118] sm:$0xff]
  %v53 = vld [vmem:[%s0 + $0x120] sm:$0xff]
  %v54 = vld [vmem:[%s0 + $0x128] sm:$0xff]
  %v55 = vld [vmem:[%s0 + $0x130] sm:$0xff]
  %v56 = vld [vmem:[%s0 + $0x138] sm:$0xff]
  %v57 = vld [vmem:[%s0 + $0x140] sm:$0xff]
  %v58 = vld [vmem:[%s0 + $0x148] sm:$0xff]
  %v59 = vld [vmem:[%s0 + $0x150] sm:$0xff]
  %v60 = vld [vmem:[%s0 + $0x158] sm:$0xff]
  %v61 = vld [vmem:[%s0 + $0x160] sm:$0xff]
  %v62 = vld [vmem:[%s0 + $0x168] sm:$0xff]
  %v63 = vld [vmem:[%s0 + $0x170] sm:$0xff]
  %v64 = vld [vmem:[%s0 + $0x178] sm:$0xff]
  %v65 = vld [vmem:[%s0 + $0x180] sm:$0xff]
  %v66 = vld [vmem:[%s0 + $0x188] sm:$0xff]
  %v67 = vld [vmem:[%s0 + $0x190] sm:$0xff]
  %v68 = vld [vmem:[%s0 + $0x198] sm:$0xff]
  %v69 = vld [vmem:[%s0 + $0x1a0] sm:$0xff]
  %v70 = vld [vmem:[%s0 + $0x1a8] sm:$0xff]
  %v71 = vadd.f32 %v17, %v18
  %v72 = vadd.f32 %v71, %v19
  %v73 = vadd.f32 %v72, %v20
  %v74 = vadd.f32 %v73, %v21
  %v75 = vadd.f32 %v74, %v22
  %v76 = vadd.f32 %v75, %v23
  %v77 = vadd.f32 %v76, %v24
  %v78 = vadd.f32 %v77, %v25
  %v79 = vadd.f32 %v78, %v26
  %v80 = vadd.f32 %v79, %v27
  %v81 = vadd.f32 %v80, %v28
  %v82 = vadd.f32 %v81, %v29
  %v83 = vadd.f32 %v82, %v30
  %v84 = vadd.f32 %v83, %v31
  %v85 = vadd.f32 %v84, %v32
  %v86 = vadd.f32 %v85, %v33
  %v87 = vadd.f32 %v86, %v34
  %v88 = vadd.f32 %v87, %v35
  %v89 = vadd.f32 %v88, %v36
  %v90 = vadd.f32 %v89, %v37
  %v91 = vadd.f32 %v90, %v38
  %v92 = vadd.f32 %v91, %v39
  %v93 = vadd.f32 %v92, %v40
  %v94 = vadd.f32 %v93, %v41
  %v95 = vadd.f32 %v94, %v42
  %v96 = vadd.f32 %v95, %v43
  %v97 = vadd.f32 %v96, %v44
  %v98 = vadd.f32 %v97, %v45
  %v99 = vadd.f32 %v98, %v46
  %v100 = vadd.f32 %v99, %v47
  %v101 = vadd.f32 %v100, %v48
  %v102 = vadd.f32 %v101, %v49
  %v103 = vadd.f32 %v102, %v50
  %v104 = vadd.f32 %v103, %v51
  %v105 = vadd.f32 %v104, %v52
  %v106 = vadd.f32 %v105, %v53
  %v107 = vadd.f32 %v106, %v54
  %v108 = vadd.f32 %v107, %v55
  %v109 = vadd.f32 %v108, %v56
  %v110 = vadd.f32 %v109, %v57
  %v111 = vadd.f32 %v110, %v58
  %v112 = vadd.f32 %v111, %v59
  %v113 = vadd.f32 %v112, %v60
  %v114 = vadd.f32 %v113, %v61
  %v115 = vadd.f32 %v114, %v62
  %v116 = vadd.f32 %v115, %v63
  %v117 = vadd.f32 %v116, %v64
  %v118 = vadd.f32 %v117, %v65
  %v119 = vadd.f32 %v118, %v66
  %v120 = vadd.f32 %v119, %v67
  %v121 = vadd.f32 %v120, %v68
  %v122 = vadd.f32 %v121, %v69
  %v123 = vadd.f32 %v122, %v70
  %124 = vadd.xlane.f32.xlu0 %v123
  %v125 = vpop.xlane.xlu0 %124
  %v126 = vrcp.pop 6912.0
  %v127 = vmul.f32 6912.0, %v126
  %v128 = vsub.f32 1.0, %v127
  %v129 = vmul.f32 %v126, %v128
  %v130 = vadd.f32 %v126, %v129
  %vm131 = vweird.f32 %v126
  %v132 = vsel %vm131, %v126, %v130
  %v133 = vmul.f32 %v125, %v132
  %v134 = vsub.f32 %v17, %v133
  %v135 = vsub.f32 %v18, %v133
  %v136 = vsub.f32 %v19, %v133
  %v137 = vsub.f32 %v20, %v133
  %v138 = vsub.f32 %v21, %v133
  %v139 = vsub.f32 %v22, %v133
  %v140 = vsub.f32 %v23, %v133
  %v141 = vsub.f32 %v24, %v133
  %v142 = vsub.f32 %v25, %v133
  %v143 = vsub.f32 %v26, %v133
  %v144 = vsub.f32 %v27, %v133
  %v145 = vsub.f32 %v28, %v133
  %v146 = vsub.f32 %v29, %v133
  %v147 = vsub.f32 %v30, %v133
  %v148 = vsub.f32 %v31, %v133
  %v149 = vsub.f32 %v32, %v133
  %v150 = vsub.f32 %v33, %v133
  %v151 = vsub.f32 %v34, %v133
  %v152 = vsub.f32 %v35, %v133
  %v153 = vsub.f32 %v36, %v133
  %v154 = vsub.f32 %v37, %v133
  %v155 = vsub.f32 %v38, %v133
  %v156 = vsub.f32 %v39, %v133
  %v157 = vsub.f32 %v40, %v133
  %v158 = vsub.f32 %v41, %v133
  %v159 = vsub.f32 %v42, %v133
  %v160 = vsub.f32 %v43, %v133
  %v161 = vsub.f32 %v44, %v133
  %v162 = vsub.f32 %v45, %v133
  %v163 = vsub.f32 %v46, %v133
  %v164 = vsub.f32 %v47, %v133
  %v165 = vsub.f32 %v48, %v133
  %v166 = vsub.f32 %v49, %v133
  %v167 = vsub.f32 %v50, %v133
  %v168 = vsub.f32 %v51, %v133
  %v169 = vsub.f32 %v52, %v133
  %v170 = vsub.f32 %v53, %v133
  %v171 = vsub.f32 %v54, %v133
  %v172 = vsub.f32 %v55, %v133
  %v173 = vsub.f32 %v56, %v133
  %v174 = vsub.f32 %v57, %v133
  %v175 = vsub.f32 %v58, %v133
  %v176 = vsub.f32 %v59, %v133
  %v177 = vsub.f32 %v60, %v133
  %v178 = vsub.f32 %v61, %v133
  %v179 = vsub.f32 %v62, %v133
  %v180 = vsub.f32 %v63, %v133
  %v181 = vsub.f32 %v64, %v133
  %v182 = vsub.f32 %v65, %v133
  %v183 = vsub.f32 %v66, %v133
  %v184 = vsub.f32 %v67, %v133
  %v185 = vsub.f32 %v68, %v133
  %v186 = vsub.f32 %v69, %v133
  %v187 = vsub.f32 %v70, %v133
  %v188 = vmul.f32 %v134, %v134
  %v189 = vmul.f32 %v135, %v135
  %v190 = vmul.f32 %v136, %v136
  %v191 = vmul.f32 %v137, %v137
  %v192 = vmul.f32 %v138, %v138
  %v193 = vmul.f32 %v139, %v139
  %v194 = vmul.f32 %v140, %v140
  %v195 = vmul.f32 %v141, %v141
  %v196 = vmul.f32 %v142, %v142
  %v197 = vmul.f32 %v143, %v143
  %v198 = vmul.f32 %v144, %v144
  %v199 = vmul.f32 %v145, %v145
  %v200 = vmul.f32 %v146, %v146
  %v201 = vmul.f32 %v147, %v147
  %v202 = vmul.f32 %v148, %v148
  %v203 = vmul.f32 %v149, %v149
  %v204 = vmul.f32 %v150, %v150
  %v205 = vmul.f32 %v151, %v151
  %v206 = vmul.f32 %v152, %v152
  %v207 = vmul.f32 %v153, %v153
  %v208 = vmul.f32 %v154, %v154
  %v209 = vmul.f32 %v155, %v155
  %v210 = vmul.f32 %v156, %v156
  %v211 = vmul.f32 %v157, %v157
  %v212 = vmul.f32 %v158, %v158
  %v213 = vmul.f32 %v159, %v159
  %v214 = vmul.f32 %v160, %v160
  %v215 = vmul.f32 %v161, %v161
  %v216 = vmul.f32 %v162, %v162
  %v217 = vmul.f32 %v163, %v163
  %v218 = vmul.f32 %v164, %v164
  %v219 = vmul.f32 %v165, %v165
  %v220 = vmul.f32 %v166, %v166
  %v221 = vmul.f32 %v167, %v167
  %v222 = vmul.f32 %v168, %v168
  %v223 = vmul.f32 %v169, %v169
  %v224 = vmul.f32 %v170, %v170
  %v225 = vmul.f32 %v171, %v171
  %v226 = vmul.f32 %v172, %v172
  %v227 = vmul.f32 %v173, %v173
  %v228 = vmul.f32 %v174, %v174
  %v229 = vmul.f32 %v175, %v175
  %v230 = vmul.f32 %v176, %v176
  %v231 = vmul.f32 %v177, %v177
  %v232 = vmul.f32 %v178, %v178
  %v233 = vmul.f32 %v179, %v179
  %v234 = vmul.f32 %v180, %v180
  %v235 = vmul.f32 %v181, %v181
  %v236 = vmul.f32 %v182, %v182
  %v237 = vmul.f32 %v183, %v183
  %v238 = vmul.f32 %v184, %v184
  %v239 = vmul.f32 %v185, %v185
  %v240 = vmul.f32 %v186, %v186
  %v241 = vmul.f32 %v187, %v187
  %v242 = vadd.f32 %v188, %v189
  %v243 = vadd.f32 %v242, %v190
  %v244 = vadd.f32 %v243, %v191
  %v245 = vadd.f32 %v244, %v192
  %v246 = vadd.f32 %v245, %v193
  %v247 = vadd.f32 %v246, %v194
  %v248 = vadd.f32 %v247, %v195
  %v249 = vadd.f32 %v248, %v196
  %v250 = vadd.f32 %v249, %v197
  %v251 = vadd.f32 %v250, %v198
  %v252 = vadd.f32 %v251, %v199
  %v253 = vadd.f32 %v252, %v200
  %v254 = vadd.f32 %v253, %v201
  %v255 = vadd.f32 %v254, %v202
  %v256 = vadd.f32 %v255, %v203
  %v257 = vadd.f32 %v256, %v204
  %v258 = vadd.f32 %v257, %v205
  %v259 = vadd.f32 %v258, %v206
  %v260 = vadd.f32 %v259, %v207
  %v261 = vadd.f32 %v260, %v208
  %v262 = vadd.f32 %v261, %v209
  %v263 = vadd.f32 %v262, %v210
  %v264 = vadd.f32 %v263, %v211
  %v265 = vadd.f32 %v264, %v212
  %v266 = vadd.f32 %v265, %v213
  %v267 = vadd.f32 %v266, %v214
  %v268 = vadd.f32 %v267, %v215
  %v269 = vadd.f32 %v268, %v216
  %v270 = vadd.f32 %v269, %v217
  %v271 = vadd.f32 %v270, %v218
  %v272 = vadd.f32 %v271, %v219
  %v273 = vadd.f32 %v272, %v220
  %v274 = vadd.f32 %v273, %v221
  %v275 = vadd.f32 %v274, %v222
  %v276 = vadd.f32 %v275, %v223
  %v277 = vadd.f32 %v276, %v224
  %v278 = vadd.f32 %v277, %v225
  %v279 = vadd.f32 %v278, %v226
  %v280 = vadd.f32 %v279, %v227
  %v281 = vadd.f32 %v280, %v228
  %v282 = vadd.f32 %v281, %v229
  %v283 = vadd.f32 %v282, %v230
  %v284 = vadd.f32 %v283, %v231
  %v285 = vadd.f32 %v284, %v232
  %v286 = vadd.f32 %v285, %v233
  %v287 = vadd.f32 %v286, %v234
  %v288 = vadd.f32 %v287, %v235
  %v289 = vadd.f32 %v288, %v236
  %v290 = vadd.f32 %v289, %v237
  %v291 = vadd.f32 %v290, %v238
  %v292 = vadd.f32 %v291, %v239
  %v293 = vadd.f32 %v292, %v240
  %v294 = vadd.f32 %v293, %v241
  %295 = vadd.xlane.f32.xlu0 %v294
  %v296 = vpop.xlane.xlu0 %295
  %v297 = vmul.f32 %v296, %v132
  %v298 = vadd.f32 %v297, 1e-05
  %v299 = vrsqrt.pop %v298
  %v300 = vmul.f32 %v299, %v298
  %v301 = vmul.f32 %v300, %v299
  %v302 = vmul.f32 0.5, %v301
  %v303 = vsub.f32 1.5, %v302
  %v304 = vmul.f32 %v299, %v303
  %vm305 = vweird.f32 %v298
  %vm306 = vweird.f32 %v299
  %vm307 = vmor %vm305, %vm306
  %v308 = vsel %vm307, %v299, %v304
  %v309 = vmul.f32 %v134, %v308
  %v310 = vmul.f32 %v135, %v308
  %v311 = vmul.f32 %v136, %v308
  %v312 = vmul.f32 %v137, %v308
  %v313 = vmul.f32 %v138, %v308
  %v314 = vmul.f32 %v139, %v308
  %v315 = vmul.f32 %v140, %v308
  %v316 = vmul.f32 %v141, %v308
  %v317 = vmul.f32 %v142, %v308
  %v318 = vmul.f32 %v143, %v308
  %v319 = vmul.f32 %v144, %v308
  %v320 = vmul.f32 %v145, %v308
  %v321 = vmul.f32 %v146, %v308
  %v322 = vmul.f32 %v147, %v308
  %v323 = vmul.f32 %v148, %v308
  %v324 = vmul.f32 %v149, %v308
  %v325 = vmul.f32 %v150, %v308
  %v326 = vmul.f32 %v151, %v308
  %v327 = vmul.f32 %v152, %v308
  %v328 = vmul.f32 %v153, %v308
  %v329 = vmul.f32 %v154, %v308
  %v330 = vmul.f32 %v155, %v308
  %v331 = vmul.f32 %v156, %v308
  %v332 = vmul.f32 %v157, %v308
  %v333 = vmul.f32 %v158, %v308
  %v334 = vmul.f32 %v159, %v308
  %v335 = vmul.f32 %v160, %v308
  %v336 = vmul.f32 %v161, %v308
  %v337 = vmul.f32 %v162, %v308
  %v338 = vmul.f32 %v163, %v308
  %v339 = vmul.f32 %v164, %v308
  %v340 = vmul.f32 %v165, %v308
  %v341 = vmul.f32 %v166, %v308
  %v342 = vmul.f32 %v167, %v308
  %v343 = vmul.f32 %v168, %v308
  %v344 = vmul.f32 %v169, %v308
  %v345 = vmul.f32 %v170, %v308
  %v346 = vmul.f32 %v171, %v308
  %v347 = vmul.f32 %v172, %v308
  %v348 = vmul.f32 %v173, %v308
  %v349 = vmul.f32 %v174, %v308
  %v350 = vmul.f32 %v175, %v308
  %v351 = vmul.f32 %v176, %v308
  %v352 = vmul.f32 %v177, %v308
  %v353 = vmul.f32 %v178, %v308
  %v354 = vmul.f32 %v179, %v308
  %v355 = vmul.f32 %v180, %v308
  %v356 = vmul.f32 %v181, %v308
  %v357 = vmul.f32 %v182, %v308
  %v358 = vmul.f32 %v183, %v308
  %v359 = vmul.f32 %v184, %v308
  %v360 = vmul.f32 %v185, %v308
  %v361 = vmul.f32 %v186, %v308
  %v362 = vmul.f32 %v187, %v308
  %v363 = vld [vmem:[%s1] sm:$0xff]
  %v364 = vadd.f32 %v363, 1.0
  %366 = vset.pattern.permute.xlu0 0
  %367 = vperm.xlu0 %366, %v364
  %v368 = vpop.permute.xlu0 %367
  %v370 = vmul.f32 %v368, %v309
  %v371 = vmul.f32 %v368, %v310
  %v372 = vmul.f32 %v368, %v311
  %v373 = vmul.f32 %v368, %v312
  %v374 = vmul.f32 %v368, %v313
  %v375 = vmul.f32 %v368, %v314
  %v376 = vmul.f32 %v368, %v315
  %v377 = vmul.f32 %v368, %v316
  %v378 = vmul.f32 %v368, %v317
  %v379 = vmul.f32 %v368, %v318
  %v380 = vmul.f32 %v368, %v319
  %v381 = vmul.f32 %v368, %v320
  %v382 = vmul.f32 %v368, %v321
  %v383 = vmul.f32 %v368, %v322
  %v384 = vmul.f32 %v368, %v323
  %v385 = vmul.f32 %v368, %v324
  %v386 = vmul.f32 %v368, %v325
  %v387 = vmul.f32 %v368, %v326
  %v388 = vmul.f32 %v368, %v327
  %v389 = vmul.f32 %v368, %v328
  %v390 = vmul.f32 %v368, %v329
  %v391 = vmul.f32 %v368, %v330
  %v392 = vmul.f32 %v368, %v331
  %v393 = vmul.f32 %v368, %v332
  %v394 = vmul.f32 %v368, %v333
  %v395 = vmul.f32 %v368, %v334
  %v396 = vmul.f32 %v368, %v335
  %v397 = vmul.f32 %v368, %v336
  %v398 = vmul.f32 %v368, %v337
  %v399 = vmul.f32 %v368, %v338
  %v400 = vmul.f32 %v368, %v339
  %v401 = vmul.f32 %v368, %v340
  %v402 = vmul.f32 %v368, %v341
  %v403 = vmul.f32 %v368, %v342
  %v404 = vmul.f32 %v368, %v343
  %v405 = vmul.f32 %v368, %v344
  %v406 = vmul.f32 %v368, %v345
  %v407 = vmul.f32 %v368, %v346
  %v408 = vmul.f32 %v368, %v347
  %v409 = vmul.f32 %v368, %v348
  %v410 = vmul.f32 %v368, %v349
  %v411 = vmul.f32 %v368, %v350
  %v412 = vmul.f32 %v368, %v351
  %v413 = vmul.f32 %v368, %v352
  %v414 = vmul.f32 %v368, %v353
  %v415 = vmul.f32 %v368, %v354
  %v416 = vmul.f32 %v368, %v355
  %v417 = vmul.f32 %v368, %v356
  %v418 = vmul.f32 %v368, %v357
  %v419 = vmul.f32 %v368, %v358
  %v420 = vmul.f32 %v368, %v359
  %v421 = vmul.f32 %v368, %v360
  %v422 = vmul.f32 %v368, %v361
  %v423 = vmul.f32 %v368, %v362
  %v424 = vld [vmem:[%s2] sm:$0xff]
  %426 = vset.pattern.permute.xlu0 0
  %427 = vperm.xlu0 %426, %v424
  %v428 = vpop.permute.xlu0 %427
  %v430 = vadd.f32 %v370, %v428
  %v431 = vadd.f32 %v371, %v428
  %v432 = vadd.f32 %v372, %v428
  %v433 = vadd.f32 %v373, %v428
  %v434 = vadd.f32 %v374, %v428
  %v435 = vadd.f32 %v375, %v428
  %v436 = vadd.f32 %v376, %v428
  %v437 = vadd.f32 %v377, %v428
  %v438 = vadd.f32 %v378, %v428
  %v439 = vadd.f32 %v379, %v428
  %v440 = vadd.f32 %v380, %v428
  %v441 = vadd.f32 %v381, %v428
  %v442 = vadd.f32 %v382, %v428
  %v443 = vadd.f32 %v383, %v428
  %v444 = vadd.f32 %v384, %v428
  %v445 = vadd.f32 %v385, %v428
  %v446 = vadd.f32 %v386, %v428
  %v447 = vadd.f32 %v387, %v428
  %v448 = vadd.f32 %v388, %v428
  %v449 = vadd.f32 %v389, %v428
  %v450 = vadd.f32 %v390, %v428
  %v451 = vadd.f32 %v391, %v428
  %v452 = vadd.f32 %v392, %v428
  %v453 = vadd.f32 %v393, %v428
  %v454 = vadd.f32 %v394, %v428
  %v455 = vadd.f32 %v395, %v428
  %v456 = vadd.f32 %v396, %v428
  %v457 = vadd.f32 %v397, %v428
  %v458 = vadd.f32 %v398, %v428
  %v459 = vadd.f32 %v399, %v428
  %v460 = vadd.f32 %v400, %v428
  %v461 = vadd.f32 %v401, %v428
  %v462 = vadd.f32 %v402, %v428
  %v463 = vadd.f32 %v403, %v428
  %v464 = vadd.f32 %v404, %v428
  %v465 = vadd.f32 %v405, %v428
  %v466 = vadd.f32 %v406, %v428
  %v467 = vadd.f32 %v407, %v428
  %v468 = vadd.f32 %v408, %v428
  %v469 = vadd.f32 %v409, %v428
  %v470 = vadd.f32 %v410, %v428
  %v471 = vadd.f32 %v411, %v428
  %v472 = vadd.f32 %v412, %v428
  %v473 = vadd.f32 %v413, %v428
  %v474 = vadd.f32 %v414, %v428
  %v475 = vadd.f32 %v415, %v428
  %v476 = vadd.f32 %v416, %v428
  %v477 = vadd.f32 %v417, %v428
  %v478 = vadd.f32 %v418, %v428
  %v479 = vadd.f32 %v419, %v428
  %v480 = vadd.f32 %v420, %v428
  %v481 = vadd.f32 %v421, %v428
  %v482 = vadd.f32 %v422, %v428
  %v483 = vadd.f32 %v423, %v428
  %vm484 = vcmp.ge.f32.partialorder %v430, 0.0
  %vm485 = vcmp.ge.f32.partialorder %v431, 0.0
  %vm486 = vcmp.ge.f32.partialorder %v432, 0.0
  %vm487 = vcmp.ge.f32.partialorder %v433, 0.0
  %vm488 = vcmp.ge.f32.partialorder %v434, 0.0
  %vm489 = vcmp.ge.f32.partialorder %v435, 0.0
  %vm490 = vcmp.ge.f32.partialorder %v436, 0.0
  %vm491 = vcmp.ge.f32.partialorder %v437, 0.0
  %vm492 = vcmp.ge.f32.partialorder %v438, 0.0
  %vm493 = vcmp.ge.f32.partialorder %v439, 0.0
  %vm494 = vcmp.ge.f32.partialorder %v440, 0.0
  %vm495 = vcmp.ge.f32.partialorder %v441, 0.0
  %vm496 = vcmp.ge.f32.partialorder %v442, 0.0
  %vm497 = vcmp.ge.f32.partialorder %v443, 0.0
  %vm498 = vcmp.ge.f32.partialorder %v444, 0.0
  %vm499 = vcmp.ge.f32.partialorder %v445, 0.0
  %vm500 = vcmp.ge.f32.partialorder %v446, 0.0
  %vm501 = vcmp.ge.f32.partialorder %v447, 0.0
  %vm502 = vcmp.ge.f32.partialorder %v448, 0.0
  %vm503 = vcmp.ge.f32.partialorder %v449, 0.0
  %vm504 = vcmp.ge.f32.partialorder %v450, 0.0
  %vm505 = vcmp.ge.f32.partialorder %v451, 0.0
  %vm506 = vcmp.ge.f32.partialorder %v452, 0.0
  %vm507 = vcmp.ge.f32.partialorder %v453, 0.0
  %vm508 = vcmp.ge.f32.partialorder %v454, 0.0
  %vm509 = vcmp.ge.f32.partialorder %v455, 0.0
  %vm510 = vcmp.ge.f32.partialorder %v456, 0.0
  %vm511 = vcmp.ge.f32.partialorder %v457, 0.0
  %vm512 = vcmp.ge.f32.partialorder %v458, 0.0
  %vm513 = vcmp.ge.f32.partialorder %v459, 0.0
  %vm514 = vcmp.ge.f32.partialorder %v460, 0.0
  %vm515 = vcmp.ge.f32.partialorder %v461, 0.0
  %vm516 = vcmp.ge.f32.partialorder %v462, 0.0
  %vm517 = vcmp.ge.f32.partialorder %v463, 0.0
  %vm518 = vcmp.ge.f32.partialorder %v464, 0.0
  %vm519 = vcmp.ge.f32.partialorder %v465, 0.0
  %vm520 = vcmp.ge.f32.partialorder %v466, 0.0
  %vm521 = vcmp.ge.f32.partialorder %v467, 0.0
  %vm522 = vcmp.ge.f32.partialorder %v468, 0.0
  %vm523 = vcmp.ge.f32.partialorder %v469, 0.0
  %vm524 = vcmp.ge.f32.partialorder %v470, 0.0
  %vm525 = vcmp.ge.f32.partialorder %v471, 0.0
  %vm526 = vcmp.ge.f32.partialorder %v472, 0.0
  %vm527 = vcmp.ge.f32.partialorder %v473, 0.0
  %vm528 = vcmp.ge.f32.partialorder %v474, 0.0
  %vm529 = vcmp.ge.f32.partialorder %v475, 0.0
  %vm530 = vcmp.ge.f32.partialorder %v476, 0.0
  %vm531 = vcmp.ge.f32.partialorder %v477, 0.0
  %vm532 = vcmp.ge.f32.partialorder %v478, 0.0
  %vm533 = vcmp.ge.f32.partialorder %v479, 0.0
  %vm534 = vcmp.ge.f32.partialorder %v480, 0.0
  %vm535 = vcmp.ge.f32.partialorder %v481, 0.0
  %vm536 = vcmp.ge.f32.partialorder %v482, 0.0
  %vm537 = vcmp.ge.f32.partialorder %v483, 0.0
  %v538 = vld [vmem:[%s3] sm:$0xff]
  %540 = vset.pattern.permute.xlu0 0
  %541 = vperm.xlu0 %540, %v538
  %v542 = vpop.permute.xlu0 %541
  %v544 = vmul.f32 %v542, %v430
  %v545 = vmul.f32 %v542, %v431
  %v546 = vmul.f32 %v542, %v432
  %v547 = vmul.f32 %v542, %v433
  %v548 = vmul.f32 %v542, %v434
  %v549 = vmul.f32 %v542, %v435
  %v550 = vmul.f32 %v542, %v436
  %v551 = vmul.f32 %v542, %v437
  %v552 = vmul.f32 %v542, %v438
  %v553 = vmul.f32 %v542, %v439
  %v554 = vmul.f32 %v542, %v440
  %v555 = vmul.f32 %v542, %v441
  %v556 = vmul.f32 %v542, %v442
  %v557 = vmul.f32 %v542, %v443
  %v558 = vmul.f32 %v542, %v444
  %v559 = vmul.f32 %v542, %v445
  %v560 = vmul.f32 %v542, %v446
  %v561 = vmul.f32 %v542, %v447
  %v562 = vmul.f32 %v542, %v448
  %v563 = vmul.f32 %v542, %v449
  %v564 = vmul.f32 %v542, %v450
  %v565 = vmul.f32 %v542, %v451
  %v566 = vmul.f32 %v542, %v452
  %v567 = vmul.f32 %v542, %v453
  %v568 = vmul.f32 %v542, %v454
  %v569 = vmul.f32 %v542, %v455
  %v570 = vmul.f32 %v542, %v456
  %v571 = vmul.f32 %v542, %v457
  %v572 = vmul.f32 %v542, %v458
  %v573 = vmul.f32 %v542, %v459
  %v574 = vmul.f32 %v542, %v460
  %v575 = vmul.f32 %v542, %v461
  %v576 = vmul.f32 %v542, %v462
  %v577 = vmul.f32 %v542, %v463
  %v578 = vmul.f32 %v542, %v464
  %v579 = vmul.f32 %v542, %v465
  %v580 = vmul.f32 %v542, %v466
  %v581 = vmul.f32 %v542, %v467
  %v582 = vmul.f32 %v542, %v468
  %v583 = vmul.f32 %v542, %v469
  %v584 = vmul.f32 %v542, %v470
  %v585 = vmul.f32 %v542, %v471
  %v586 = vmul.f32 %v542, %v472
  %v587 = vmul.f32 %v542, %v473
  %v588 = vmul.f32 %v542, %v474
  %v589 = vmul.f32 %v542, %v475
  %v590 = vmul.f32 %v542, %v476
  %v591 = vmul.f32 %v542, %v477
  %v592 = vmul.f32 %v542, %v478
  %v593 = vmul.f32 %v542, %v479
  %v594 = vmul.f32 %v542, %v480
  %v595 = vmul.f32 %v542, %v481
  %v596 = vmul.f32 %v542, %v482
  %v597 = vmul.f32 %v542, %v483
  %v598 = vsel %vm484, %v430, %v544
  %v599 = vsel %vm485, %v431, %v545
  %v600 = vsel %vm486, %v432, %v546
  %v601 = vsel %vm487, %v433, %v547
  %v602 = vsel %vm488, %v434, %v548
  %v603 = vsel %vm489, %v435, %v549
  %v604 = vsel %vm490, %v436, %v550
  %v605 = vsel %vm491, %v437, %v551
  %v606 = vsel %vm492, %v438, %v552
  %v607 = vsel %vm493, %v439, %v553
  %v608 = vsel %vm494, %v440, %v554
  %v609 = vsel %vm495, %v441, %v555
  %v610 = vsel %vm496, %v442, %v556
  %v611 = vsel %vm497, %v443, %v557
  %v612 = vsel %vm498, %v444, %v558
  %v613 = vsel %vm499, %v445, %v559
  %v614 = vsel %vm500, %v446, %v560
  %v615 = vsel %vm501, %v447, %v561
  %v616 = vsel %vm502, %v448, %v562
  %v617 = vsel %vm503, %v449, %v563
  %v618 = vsel %vm504, %v450, %v564
  %v619 = vsel %vm505, %v451, %v565
  %v620 = vsel %vm506, %v452, %v566
  %v621 = vsel %vm507, %v453, %v567
  %v622 = vsel %vm508, %v454, %v568
  %v623 = vsel %vm509, %v455, %v569
  %v624 = vsel %vm510, %v456, %v570
  %v625 = vsel %vm511, %v457, %v571
  %v626 = vsel %vm512, %v458, %v572
  %v627 = vsel %vm513, %v459, %v573
  %v628 = vsel %vm514, %v460, %v574
  %v629 = vsel %vm515, %v461, %v575
  %v630 = vsel %vm516, %v462, %v576
  %v631 = vsel %vm517, %v463, %v577
  %v632 = vsel %vm518, %v464, %v578
  %v633 = vsel %vm519, %v465, %v579
  %v634 = vsel %vm520, %v466, %v580
  %v635 = vsel %vm521, %v467, %v581
  %v636 = vsel %vm522, %v468, %v582
  %v637 = vsel %vm523, %v469, %v583
  %v638 = vsel %vm524, %v470, %v584
  %v639 = vsel %vm525, %v471, %v585
  %v640 = vsel %vm526, %v472, %v586
  %v641 = vsel %vm527, %v473, %v587
  %v642 = vsel %vm528, %v474, %v588
  %v643 = vsel %vm529, %v475, %v589
  %v644 = vsel %vm530, %v476, %v590
  %v645 = vsel %vm531, %v477, %v591
  %v646 = vsel %vm532, %v478, %v592
  %v647 = vsel %vm533, %v479, %v593
  %v648 = vsel %vm534, %v480, %v594
  %v649 = vsel %vm535, %v481, %v595
  %v650 = vsel %vm536, %v482, %v596
  %v651 = vsel %vm537, %v483, %v597
  %652 = vst [vmem:[%s4] sm:$0xff] %v598
  %653 = vst [vmem:[%s4 + $0x8] sm:$0xff] %v599
  %654 = vst [vmem:[%s4 + $0x10] sm:$0xff] %v600
  %655 = vst [vmem:[%s4 + $0x18] sm:$0xff] %v601
  %656 = vst [vmem:[%s4 + $0x20] sm:$0xff] %v602
  %657 = vst [vmem:[%s4 + $0x28] sm:$0xff] %v603
  %658 = vst [vmem:[%s4 + $0x30] sm:$0xff] %v604
  %659 = vst [vmem:[%s4 + $0x38] sm:$0xff] %v605
  %660 = vst [vmem:[%s4 + $0x40] sm:$0xff] %v606
  %661 = vst [vmem:[%s4 + $0x48] sm:$0xff] %v607
  %662 = vst [vmem:[%s4 + $0x50] sm:$0xff] %v608
  %663 = vst [vmem:[%s4 + $0x58] sm:$0xff] %v609
  %664 = vst [vmem:[%s4 + $0x60] sm:$0xff] %v610
  %665 = vst [vmem:[%s4 + $0x68] sm:$0xff] %v611
  %666 = vst [vmem:[%s4 + $0x70] sm:$0xff] %v612
  %667 = vst [vmem:[%s4 + $0x78] sm:$0xff] %v613
  %668 = vst [vmem:[%s4 + $0x80] sm:$0xff] %v614
  %669 = vst [vmem:[%s4 + $0x88] sm:$0xff] %v615
  %670 = vst [vmem:[%s4 + $0x90] sm:$0xff] %v616
  %671 = vst [vmem:[%s4 + $0x98] sm:$0xff] %v617
  %672 = vst [vmem:[%s4 + $0xa0] sm:$0xff] %v618
  %673 = vst [vmem:[%s4 + $0xa8] sm:$0xff] %v619
  %674 = vst [vmem:[%s4 + $0xb0] sm:$0xff] %v620
  %675 = vst [vmem:[%s4 + $0xb8] sm:$0xff] %v621
  %676 = vst [vmem:[%s4 + $0xc0] sm:$0xff] %v622
  %677 = vst [vmem:[%s4 + $0xc8] sm:$0xff] %v623
  %678 = vst [vmem:[%s4 + $0xd0] sm:$0xff] %v624
  %679 = vst [vmem:[%s4 + $0xd8] sm:$0xff] %v625
  %680 = vst [vmem:[%s4 + $0xe0] sm:$0xff] %v626
  %681 = vst [vmem:[%s4 + $0xe8] sm:$0xff] %v627
  %682 = vst [vmem:[%s4 + $0xf0] sm:$0xff] %v628
  %683 = vst [vmem:[%s4 + $0xf8] sm:$0xff] %v629
  %684 = vst [vmem:[%s4 + $0x100] sm:$0xff] %v630
  %685 = vst [vmem:[%s4 + $0x108] sm:$0xff] %v631
  %686 = vst [vmem:[%s4 + $0x110] sm:$0xff] %v632
  %687 = vst [vmem:[%s4 + $0x118] sm:$0xff] %v633
  %688 = vst [vmem:[%s4 + $0x120] sm:$0xff] %v634
  %689 = vst [vmem:[%s4 + $0x128] sm:$0xff] %v635
  %690 = vst [vmem:[%s4 + $0x130] sm:$0xff] %v636
  %691 = vst [vmem:[%s4 + $0x138] sm:$0xff] %v637
  %692 = vst [vmem:[%s4 + $0x140] sm:$0xff] %v638
  %693 = vst [vmem:[%s4 + $0x148] sm:$0xff] %v639
  %694 = vst [vmem:[%s4 + $0x150] sm:$0xff] %v640
  %695 = vst [vmem:[%s4 + $0x158] sm:$0xff] %v641
  %696 = vst [vmem:[%s4 + $0x160] sm:$0xff] %v642
  %697 = vst [vmem:[%s4 + $0x168] sm:$0xff] %v643
  %698 = vst [vmem:[%s4 + $0x170] sm:$0xff] %v644
  %699 = vst [vmem:[%s4 + $0x178] sm:$0xff] %v645
  %700 = vst [vmem:[%s4 + $0x180] sm:$0xff] %v646
  %701 = vst [vmem:[%s4 + $0x188] sm:$0xff] %v647
  %702 = vst [vmem:[%s4 + $0x190] sm:$0xff] %v648
  %703 = vst [vmem:[%s4 + $0x198] sm:$0xff] %v649
  %704 = vst [vmem:[%s4 + $0x1a0] sm:$0xff] %v650
  %705 = vst [vmem:[%s4 + $0x1a8] sm:$0xff] %v651
  // Predicated region
  $region18: #{_lambda_.20} parent=0 // pred_check
    _
  $region19: #{_lambda_.20} parent=0 // pred_check_branch
    %707 = sbr.rel (0) target = $region21
  $region20: #{_lambda_.20} parent=0 // pred_region
    _
  $region21: #{_lambda_.20} parent=0 // pred_fallthru
    _
  // Predicated region
  $region22: #{_lambda_.20} parent=0 // pred_check
    _
  $region23: #{_lambda_.20} parent=0 // pred_check_branch
    %709 = sbr.rel (0) target = $region25
  $region24: #{_lambda_.20} parent=0 // pred_region
    _
  $region25: #{_lambda_.20} parent=0 // pred_fallthru
    _

// kernel: _lambda_.21
$region0: #{_lambda_.21}
  #allocation0 [shape = 'u32[]', space=smem, size = 0x4, offset = 0x4, fixed_abs, tag = 'smem constant byte address 0x4 - core index']
  #allocation1 [shape = 'u32[72,128]{1,0:T(1,128)}', space=vmem, size = 0x9000, scoped, tag = 'internal scratch']
  %s0 = inlined_call_operand.vmem [shape: bf16[4,108], index: 0, kind: input, shape index: {}]
  %s1 = inlined_call_operand.vmem [shape: bf16[108,6912], index: 1, kind: input, shape index: {}]
  %s2 = inlined_call_operand.vmem [shape: f32[4,1], index: 2, kind: input, shape index: {}]
  %s3 = inlined_call_operand.vmem [shape: f32[4,6912], index: 3, kind: output, shape index: {}]
  %s4 = sld [smem:[#allocation0]]
  $region71: #{_lambda_.21} parent=0
    _
  %s6 = ssub.s32 1, %s4
  %s7 = scalar_select 0, %s6, %s4
  $region1: #{_lambda_.21} parent=0
    #allocation2 [shape = 'u8[516096]{0}', space=vmem, size = 0x7e000, scoped, tag = 'input window, operand 1']
    loop: start=0, step=1, limit=8
    $region2: #{_lambda_.21} parent=1 // loop_pre_header
      _
    $region3: #{_lambda_.21} parent=1 // loop_header
      %s9 = sphi 0, %s13
      %p10 = scmp.ge.s32.totalorder %s9, 8
      %s17 = sphi 0, %s17
      %s19 = sphi 0, %s17
      %s20 = sphi 0, %s19
      %s34 = sphi 0, %s20
      %s40 = sphi 0, %s42
      %s43 = sphi 0, %s40
      %s44 = sphi 0, %s43
      %s60 = sphi 0, %s44
      %s64 = sphi 0, %s64
      %s66 = sphi 0, %s64
      %s67 = sphi 0, %s66
      %s81 = sphi 0, %s67
      %s87 = sphi 0, %s89
      %s90 = sphi 0, %s87
      %s91 = sphi 0, %s90
      %s107 = sphi 0, %s91
    $region4: #{_lambda_.21} parent=1 // loop_header_branch
      %12 = sbr.rel (%p10) target = $region8
    $region5: #{_lambda_.21} parent=1 // loop_body
      %s14 = ssub.s32 %s9, 1
      %s15 = ssub.s32 %s9, 2
      %s16 = sadd.s32 %s9, 1
      %s18 = sadd.s32 %s17, 1
      %p21 = scmp.eq.s32.totalorder %s9, 5
      %p22 = scmp.ne.s32.totalorder %s17, %s19
      %p23 = scmp.eq.s32.totalorder %s9, 0
      %p24 = por %p22, %p23
      %p25 = scmp.ne.s32.totalorder %s17, %s19
      %p26 = scmp.eq.s32.totalorder %s14, 5
      %p27 = por %p25, %p26
      %p28 = scmp.ne.s32.totalorder %s19, %s20
      %p29 = scmp.eq.s32.totalorder %s14, 0
      %p30 = por %p28, %p29
      %p31 = scmp.ne.s32.totalorder %s19, %s20
      %p32 = scmp.eq.s32.totalorder %s15, 5
      %p33 = por %p31, %p32
      %p35 = scmp.ne.s32.totalorder %s20, %s34
      %p36 = scmp.eq.s32.totalorder %s15, 0
      %p37 = por %p35, %p36
      %s38 = ssub.s32 %s9, %s16
      %p39 = scmp.eq.s32.totalorder %s38, 0
      %s41 = sadd.s32 %s40, 1
      %s42 = scalar_select %p39, %s40, %s41
      %p45 = pneg %p39
      %p46 = scmp.eq.s32.totalorder %s9, 5
      %p47 = por %p45, %p46
      %p48 = scmp.ne.s32.totalorder %s40, %s43
      %p49 = scmp.eq.s32.totalorder %s9, 0
      %p50 = por %p48, %p49
      %p51 = scmp.ne.s32.totalorder %s40, %s43
      %p52 = scmp.eq.s32.totalorder %s14, 5
      %p53 = por %p51, %p52
      %p54 = scmp.ne.s32.totalorder %s43, %s44
      %p55 = scmp.eq.s32.totalorder %s14, 0
      %p56 = por %p54, %p55
      %p57 = scmp.ne.s32.totalorder %s43, %s44
      %p58 = scmp.eq.s32.totalorder %s15, 5
      %p59 = por %p57, %p58
      %p61 = scmp.ne.s32.totalorder %s44, %s60
      %p62 = scmp.eq.s32.totalorder %s15, 0
      %p63 = por %p61, %p62
      %s65 = sadd.s32 %s64, 1
      %p68 = scmp.eq.s32.totalorder %s9, 5
      %p69 = scmp.ne.s32.totalorder %s64, %s66
      %p70 = scmp.eq.s32.totalorder %s9, 0
      %p71 = por %p69, %p70
      %p72 = scmp.ne.s32.totalorder %s64, %s66
      %p73 = scmp.eq.s32.totalorder %s14, 5
      %p74 = por %p72, %p73
      %p75 = scmp.ne.s32.totalorder %s66, %s67
      %p76 = scmp.eq.s32.totalorder %s14, 0
      %p77 = por %p75, %p76
      %p78 = scmp.ne.s32.totalorder %s66, %s67
      %p79 = scmp.eq.s32.totalorder %s15, 5
      %p80 = por %p78, %p79
      %p82 = scmp.ne.s32.totalorder %s67, %s81
      %p83 = scmp.eq.s32.totalorder %s15, 0
      %p84 = por %p82, %p83
      %s85 = ssub.s32 %s9, %s16
      %p86 = scmp.eq.s32.totalorder %s85, 0
      %s88 = sadd.s32 %s87, 1
      %s89 = scalar_select %p86, %s87, %s88
      %p92 = pneg %p86
      %p93 = scmp.eq.s32.totalorder %s9, 5
      %p94 = por %p92, %p93
      %p95 = scmp.ne.s32.totalorder %s87, %s90
      %p96 = scmp.eq.s32.totalorder %s9, 0
      %p97 = por %p95, %p96
      %p98 = scmp.ne.s32.totalorder %s87, %s90
      %p99 = scmp.eq.s32.totalorder %s14, 5
      %p100 = por %p98, %p99
      %p101 = scmp.ne.s32.totalorder %s90, %s91
      %p102 = scmp.eq.s32.totalorder %s14, 0
      %p103 = por %p101, %p102
      %p104 = scmp.ne.s32.totalorder %s90, %s91
      %p105 = scmp.eq.s32.totalorder %s15, 5
      %p106 = por %p104, %p105
      %p108 = scmp.ne.s32.totalorder %s91, %s107
      %p109 = scmp.eq.s32.totalorder %s15, 0
      %p110 = por %p108, %p109
      %p111 = scmp.le.s32.totalorder 1, %s9
      %p112 = scmp.lt.s32.totalorder %s9, 7
      %p113 = pnand %p111, %p112
      %p114 = pneg %p113
      // Predicated region
      $region9: #{_lambda_.21} parent=5 // pred_check
        _
      $region10: #{_lambda_.21} parent=5 // pred_check_branch
        %116 = sbr.rel (%p113) target = $region12
      $region11: #{_lambda_.21} parent=5 // pred_region
        %s117 = ssub.s32 %s9, 1
        // Predicated region
        $region13: #{_lambda_.21} parent=11 // pred_check
          %p118 = pneg %p30
        $region14: #{_lambda_.21} parent=11 // pred_check_branch
          %120 = sbr.rel (%p118) target = $region16
        $region15: #{_lambda_.21} parent=11 // pred_region
          _
        $region16: #{_lambda_.21} parent=11 // pred_fallthru
          _
        // Predicated region
        $region17: #{_lambda_.21} parent=11 // pred_check
          %p121 = pneg %p77
        $region18: #{_lambda_.21} parent=11 // pred_check_branch
          %123 = sbr.rel (%p121) target = $region20
        $region19: #{_lambda_.21} parent=11 // pred_region
          _
        $region20: #{_lambda_.21} parent=11 // pred_fallthru
          _
      $region12: #{_lambda_.21} parent=5 // pred_fallthru
        _
      %p124 = scmp.lt.s32.totalorder %s9, 6
      // Predicated region
      $region21: #{_lambda_.21} parent=5 // pred_check
        %p125 = pneg %p124
      $region22: #{_lambda_.21} parent=5 // pred_check_branch
        %127 = sbr.rel (%p125) target = $region24
      $region23: #{_lambda_.21} parent=5 // pred_region
        // Predicated region
        $region25: #{_lambda_.21} parent=23 // pred_check
          %p128 = pneg %p50
        $region26: #{_lambda_.21} parent=23 // pred_check_branch
          %130 = sbr.rel (%p128) target = $region28
        $region27: #{_lambda_.21} parent=23 // pred_region
          %s131 = sand.u32 %s40, 1
          %s132 = sand.u32 %s40, 1
          %s133 = smul.addr %s132, 504
          %s134 = scalar_lea.vmem [#allocation2], %s133
          %s135 = smul.u32 9, %s9
          %s136 = smul.addr %s135, 4
          %s137 = scalar_lea.vmem %s1, %s136
          // Predicated region
          $region29: #{_lambda_.21} parent=27 // pred_check
            _
          $region30: #{_lambda_.21} parent=27 // pred_check_branch
            %139 = sbr.rel (0) target = $region32
          $region31: #{_lambda_.21} parent=27 // pred_region
            // Predicated region
            $region33: #{_lambda_.21} parent=31 // pred_check
              _
            $region34: #{_lambda_.21} parent=31 // pred_check_branch
              %141 = sbr.rel (0) target = $region36
            $region35: #{_lambda_.21} parent=31 // pred_region
              %s142 = scalar_lea.vmem %s137, 32
              %s143 = scalar_lea.vmem %s134, 32 [#allocation2]
              loop: start=0, step=1, limit=1
              $region37: #{_lambda_.21} parent=35 // loop_pre_header
                _
              $region38: #{_lambda_.21} parent=35 // loop_header
                %s145 = sphi 0, %s149
                %p146 = scmp.ge.s32.totalorder %s145, 1
                %s150 = sphi %s137, %s137
                %s151 = sphi %s134, %s134
              $region39: #{_lambda_.21} parent=35 // loop_header_branch
                %148 = sbr.rel (%p146) target = $region43
              $region40: #{_lambda_.21} parent=35 // loop_body
                %v152 = vld [vmem:[%s150] sm:$0xff]
                %153 = vst [vmem:[%s151] sm:$0xff] %v152
                %v154 = vld [vmem:[%s150 + $0x8] sm:$0xff]
                %155 = vst [vmem:[%s151 + $0x8] sm:$0xff] %v154
                %v156 = vld [vmem:[%s150 + $0x10] sm:$0xff]
                %157 = vst [vmem:[%s151 + $0x10] sm:$0xff] %v156
                %v158 = vld [vmem:[%s150 + $0x18] sm:$0xff]
                %159 = vst [vmem:[%s151 + $0x18] sm:$0xff] %v158
                %v160 = vld [vmem:[%s150 + $0xd8] sm:$0xff]
                %161 = vst [vmem:[%s151 + $0x24] sm:$0xff] %v160
                %v162 = vld [vmem:[%s150 + $0xe0] sm:$0xff]
                %163 = vst [vmem:[%s151 + $0x2c] sm:$0xff] %v162
                %v164 = vld [vmem:[%s150 + $0xe8] sm:$0xff]
                %165 = vst [vmem:[%s151 + $0x34] sm:$0xff] %v164
                %v166 = vld [vmem:[%s150 + $0xf0] sm:$0xff]
                %167 = vst [vmem:[%s151 + $0x3c] sm:$0xff] %v166
                %v168 = vld [vmem:[%s150 + $0x1b0] sm:$0xff]
                %169 = vst [vmem:[%s151 + $0x48] sm:$0xff] %v168
                %v170 = vld [vmem:[%s150 + $0x1b8] sm:$0xff]
                %171 = vst [vmem:[%s151 + $0x50] sm:$0xff] %v170
                %v172 = vld [vmem:[%s150 + $0x1c0] sm:$0xff]
                %173 = vst [vmem:[%s151 + $0x58] sm:$0xff] %v172
                %v174 = vld [vmem:[%s150 + $0x1c8] sm:$0xff]
                %175 = vst [vmem:[%s151 + $0x60] sm:$0xff] %v174
                %v176 = vld [vmem:[%s150 + $0x288] sm:$0xff]
                %177 = vst [vmem:[%s151 + $0x6c] sm:$0xff] %v176
                %v178 = vld [vmem:[%s150 + $0x290] sm:$0xff]
                %179 = vst [vmem:[%s151 + $0x74] sm:$0xff] %v178
                %v180 = vld [vmem:[%s150 + $0x298] sm:$0xff]
                %181 = vst [vmem:[%s151 + $0x7c] sm:$0xff] %v180
                %v182 = vld [vmem:[%s150 + $0x2a0] sm:$0xff]
                %183 = vst [vmem:[%s151 + $0x84] sm:$0xff] %v182
                %v184 = vld [vmem:[%s150 + $0x360] sm:$0xff]
                %185 = vst [vmem:[%s151 + $0x90] sm:$0xff] %v184
                %v186 = vld [vmem:[%s150 + $0x368] sm:$0xff]
                %187 = vst [vmem:[%s151 + $0x98] sm:$0xff] %v186
                %v188 = vld [vmem:[%s150 + $0x370] sm:$0xff]
                %189 = vst [vmem:[%s151 + $0xa0] sm:$0xff] %v188
                %v190 = vld [vmem:[%s150 + $0x378] sm:$0xff]
                %191 = vst [vmem:[%s151 + $0xa8] sm:$0xff] %v190
                %v192 = vld [vmem:[%s150 + $0x438] sm:$0xff]
                %193 = vst [vmem:[%s151 + $0xb4] sm:$0xff] %v192
                %v194 = vld [vmem:[%s150 + $0x440] sm:$0xff]
                %195 = vst [vmem:[%s151 + $0xbc] sm:$0xff] %v194
                %v196 = vld [vmem:[%s150 + $0x448] sm:$0xff]
                %197 = vst [vmem:[%s151 + $0xc4] sm:$0xff] %v196
                %v198 = vld [vmem:[%s150 + $0x450] sm:$0xff]
                %199 = vst [vmem:[%s151 + $0xcc] sm:$0xff] %v198
                %v200 = vld [vmem:[%s150 + $0x510] sm:$0xff]
                %201 = vst [vmem:[%s151 + $0xd8] sm:$0xff] %v200
                %v202 = vld [vmem:[%s150 + $0x518] sm:$0xff]
                %203 = vst [vmem:[%s151 + $0xe0] sm:$0xff] %v202
                %v204 = vld [vmem:[%s150 + $0x520] sm:$0xff]
                %205 = vst [vmem:[%s151 + $0xe8] sm:$0xff] %v204
                %v206 = vld [vmem:[%s150 + $0x528] sm:$0xff]
                %207 = vst [vmem:[%s151 + $0xf0] sm:$0xff] %v206
                %v208 = vld [vmem:[%s150 + $0x5e8] sm:$0xff]
                %209 = vst [vmem:[%s151 + $0xfc] sm:$0xff] %v208
                %v210 = vld [vmem:[%s150 + $0x5f0] sm:$0xff]
                %211 = vst [vmem:[%s151 + $0x104] sm:$0xff] %v210
                %v212 = vld [vmem:[%s150 + $0x5f8] sm:$0xff]
                %213 = vst [vmem:[%s151 + $0x10c] sm:$0xff] %v212
                %v214 = vld [vmem:[%s150 + $0x600] sm:$0xff]
                %215 = vst [vmem:[%s151 + $0x114] sm:$0xff] %v214
                %v216 = vld [vmem:[%s150 + $0x6c0] sm:$0xff]
                %217 = vst [vmem:[%s151 + $0x120] sm:$0xff] %v216
                %v218 = vld [vmem:[%s150 + $0x6c8] sm:$0xff]
                %219 = vst [vmem:[%s151 + $0x128] sm:$0xff] %v218
                %v220 = vld [vmem:[%s150 + $0x6d0] sm:$0xff]
                %221 = vst [vmem:[%s151 + $0x130] sm:$0xff] %v220
                %v222 = vld [vmem:[%s150 + $0x6d8] sm:$0xff]
                %223 = vst [vmem:[%s151 + $0x138] sm:$0xff] %v222
                %v224 = vld [vmem:[%s150 + $0x798] sm:$0xff]
                %225 = vst [vmem:[%s151 + $0x144] sm:$0xff] %v224
                %v226 = vld [vmem:[%s150 + $0x7a0] sm:$0xff]
                %227 = vst [vmem:[%s151 + $0x14c] sm:$0xff] %v226
                %v228 = vld [vmem:[%s150 + $0x7a8] sm:$0xff]
                %229 = vst [vmem:[%s151 + $0x154] sm:$0xff] %v228
                %v230 = vld [vmem:[%s150 + $0x7b0] sm:$0xff]
                %231 = vst [vmem:[%s151 + $0x15c] sm:$0xff] %v230
                %v232 = vld [vmem:[%s150 + $0x870] sm:$0xff]
                %233 = vst [vmem:[%s151 + $0x168] sm:$0xff] %v232
                %v234 = vld [vmem:[%s150 + $0x878] sm:$0xff]
                %235 = vst [vmem:[%s151 + $0x170] sm:$0xff] %v234
                %v236 = vld [vmem:[%s150 + $0x880] sm:$0xff]
                %237 = vst [vmem:[%s151 + $0x178] sm:$0xff] %v236
                %v238 = vld [vmem:[%s150 + $0x888] sm:$0xff]
                %239 = vst [vmem:[%s151 + $0x180] sm:$0xff] %v238
                %v240 = vld [vmem:[%s150 + $0x948] sm:$0xff]
                %241 = vst [vmem:[%s151 + $0x18c] sm:$0xff] %v240
                %v242 = vld [vmem:[%s150 + $0x950] sm:$0xff]
                %243 = vst [vmem:[%s151 + $0x194] sm:$0xff] %v242
                %v244 = vld [vmem:[%s150 + $0x958] sm:$0xff]
                %245 = vst [vmem:[%s151 + $0x19c] sm:$0xff] %v244
                %v246 = vld [vmem:[%s150 + $0x960] sm:$0xff]
                %247 = vst [vmem:[%s151 + $0x1a4] sm:$0xff] %v246
                %v248 = vld [vmem:[%s150 + $0xa20] sm:$0xff]
                %249 = vst [vmem:[%s151 + $0x1b0] sm:$0xff] %v248
                %v250 = vld [vmem:[%s150 + $0xa28] sm:$0xff]
                %251 = vst [vmem:[%s151 + $0x1b8] sm:$0xff] %v250
                %v252 = vld [vmem:[%s150 + $0xa30] sm:$0xff]
                %253 = vst [vmem:[%s151 + $0x1c0] sm:$0xff] %v252
                %v254 = vld [vmem:[%s150 + $0xa38] sm:$0xff]
                %255 = vst [vmem:[%s151 + $0x1c8] sm:$0xff] %v254
                %v256 = vld [vmem:[%s150 + $0xaf8] sm:$0xff]
                %257 = vst [vmem:[%s151 + $0x1d4] sm:$0xff] %v256
                %v258 = vld [vmem:[%s150 + $0xb00] sm:$0xff]
                %259 = vst [vmem:[%s151 + $0x1dc] sm:$0xff] %v258
                %v260 = vld [vmem:[%s150 + $0xb08] sm:$0xff]
                %261 = vst [vmem:[%s151 + $0x1e4] sm:$0xff] %v260
                %v262 = vld [vmem:[%s150 + $0xb10] sm:$0xff]
                %263 = vst [vmem:[%s151 + $0x1ec] sm:$0xff] %v262
              $region41: #{_lambda_.21} parent=35 // loop_footer
                %s149 = sadd.s32 1, %s145
              $region42: #{_lambda_.21} parent=35 // loop_footer_branch
                %144 = sbr.rel target = $region38
              $region43: #{_lambda_.21} parent=35 // loop_exit
                _
              %s265 = ssub.s32 16, 1
              loop: start=0, step=1, limit=1
              $region44: #{_lambda_.21} parent=35 // loop_pre_header
                _
              $region45: #{_lambda_.21} parent=35 // loop_header
                %s267 = sphi 0, %s271
                %p268 = scmp.ge.s32.totalorder %s267, 1
                %s272 = sphi %s142, %s142
                %s273 = sphi %s143, %s143
              $region46: #{_lambda_.21} parent=35 // loop_header_branch
                %270 = sbr.rel (%p268) target = $region50
              $region47: #{_lambda_.21} parent=35 // loop_body
                %v274 = vld [vmem:[%s272] sm:%s265]
                %275 = vst [vmem:[%s273] sm:%s265] %v274
                %v276 = vld [vmem:[%s272 + $0xd8] sm:%s265]
                %277 = vst [vmem:[%s273 + $0x24] sm:%s265] %v276
                %v278 = vld [vmem:[%s272 + $0x1b0] sm:%s265]
                %279 = vst [vmem:[%s273 + $0x48] sm:%s265] %v278
                %v280 = vld [vmem:[%s272 + $0x288] sm:%s265]
                %281 = vst [vmem:[%s273 + $0x6c] sm:%s265] %v280
                %v282 = vld [vmem:[%s272 + $0x360] sm:%s265]
                %283 = vst [vmem:[%s273 + $0x90] sm:%s265] %v282
                %v284 = vld [vmem:[%s272 + $0x438] sm:%s265]
                %285 = vst [vmem:[%s273 + $0xb4] sm:%s265] %v284
                %v286 = vld [vmem:[%s272 + $0x510] sm:%s265]
                %287 = vst [vmem:[%s273 + $0xd8] sm:%s265] %v286
                %v288 = vld [vmem:[%s272 + $0x5e8] sm:%s265]
                %289 = vst [vmem:[%s273 + $0xfc] sm:%s265] %v288
                %v290 = vld [vmem:[%s272 + $0x6c0] sm:%s265]
                %291 = vst [vmem:[%s273 + $0x120] sm:%s265] %v290
                %v292 = vld [vmem:[%s272 + $0x798] sm:%s265]
                %293 = vst [vmem:[%s273 + $0x144] sm:%s265] %v292
                %v294 = vld [vmem:[%s272 + $0x870] sm:%s265]
                %295 = vst [vmem:[%s273 + $0x168] sm:%s265] %v294
                %v296 = vld [vmem:[%s272 + $0x948] sm:%s265]
                %297 = vst [vmem:[%s273 + $0x18c] sm:%s265] %v296
                %v298 = vld [vmem:[%s272 + $0xa20] sm:%s265]
                %299 = vst [vmem:[%s273 + $0x1b0] sm:%s265] %v298
                %v300 = vld [vmem:[%s272 + $0xaf8] sm:%s265]
                %301 = vst [vmem:[%s273 + $0x1d4] sm:%s265] %v300
              $region48: #{_lambda_.21} parent=35 // loop_footer
                %s271 = sadd.s32 1, %s267
              $region49: #{_lambda_.21} parent=35 // loop_footer_branch
                %266 = sbr.rel target = $region45
              $region50: #{_lambda_.21} parent=35 // loop_exit
                _
            $region36: #{_lambda_.21} parent=31 // pred_fallthru
              _
          $region32: #{_lambda_.21} parent=27 // pred_fallthru
            _
          %302 = vnop
        $region28: #{_lambda_.21} parent=23 // pred_fallthru
          _
      $region24: #{_lambda_.21} parent=5 // pred_fallthru
        _
      %p303 = scmp.le.s32.totalorder 1, %s9
      %p304 = scmp.lt.s32.totalorder %s9, 7
      %p305 = pnand %p303, %p304
      %p306 = pneg %p305
      // Predicated region
      $region51: #{_lambda_.21} parent=5 // pred_check
        _
      $region52: #{_lambda_.21} parent=5 // pred_check_branch
        %308 = sbr.rel (%p305) target = $region54
      $region53: #{_lambda_.21} parent=5 // pred_region
        %s309 = ssub.s32 %s9, 1
        %s310 = sand.u32 %s43, 1
        %s311 = sand.u32 %s43, 1
        %s312 = smul.addr %s311, 504
        %s313 = scalar_lea.vmem [#allocation2], %s312
        // Predicated region
        $region55: #{_lambda_.21} parent=53 // pred_check
          %p314 = pneg %p56
        $region56: #{_lambda_.21} parent=53 // pred_check_branch
          %316 = sbr.rel (%p314) target = $region58
        $region57: #{_lambda_.21} parent=53 // pred_region
          _
        $region58: #{_lambda_.21} parent=53 // pred_fallthru
          _
        %p317 = pneg %p30
        %p318 = pneg %p27
        %s319 = sand.u32 %s43, 1
        %s320 = sand.u32 %s43, 1
        %s321 = smul.addr %s320, 504
        %s322 = scalar_lea.vmem [#allocation2], %s321
        %p323 = pneg %p56
        %p324 = pneg %p53
        %p325 = pneg %p77
        %p326 = pneg %p74
        %p327 = pneg %p103
        %p328 = pneg %p100
        %s329 = smul.u32 9, %s14
        %p330 = scmp.lt.s32.totalorder %s329, 53
        %s331 = scalar_select %p330, %s329, 53
        %s332 = smul.addr %s331, 4
        %s333 = scalar_lea.vmem %s3, %s332
        %s334 = smul.u32 9, %s14
        %s335 = smul.u32 9, %s14
        %p336 = scmp.lt.s32.totalorder %s335, 53
        %s337 = scalar_select %p336, %s335, 53
        %s338 = smul.addr %s337, 4
        %s339 = scalar_lea.vmem %s3, %s338
        %s340 = smul.u32 9, %s14
        %v342 = vld [vmem:[%s0] sm:$0x3]
        %v343 = vld [vmem:[%s313] sm:$0xff]
        %v344 = vld [vmem:[%s313 + $0x8] sm:$0xff]
        %v345 = vld [vmem:[%s313 + $0x10] sm:$0xff]
        %v346 = vld [vmem:[%s313 + $0x18] sm:$0xff]
        %v347 = vld [vmem:[%s313 + $0x20] sm:$0xf]
        %v348 = vld [vmem:[%s313 + $0x24] sm:$0xff]
        %v349 = vld [vmem:[%s313 + $0x2c] sm:$0xff]
        %v350 = vld [vmem:[%s313 + $0x34] sm:$0xff]
        %v351 = vld [vmem:[%s313 + $0x3c] sm:$0xff]
        %v352 = vld [vmem:[%s313 + $0x44] sm:$0xf]
        %v353 = vld [vmem:[%s313 + $0x48] sm:$0xff]
        %v354 = vld [vmem:[%s313 + $0x50] sm:$0xff]
        %v355 = vld [vmem:[%s313 + $0x58] sm:$0xff]
        %v356 = vld [vmem:[%s313 + $0x60] sm:$0xff]
        %v357 = vld [vmem:[%s313 + $0x68] sm:$0xf]
        %v358 = vld [vmem:[%s313 + $0x6c] sm:$0xff]
        %v359 = vld [vmem:[%s313 + $0x74] sm:$0xff]
        %v360 = vld [vmem:[%s313 + $0x7c] sm:$0xff]
        %v361 = vld [vmem:[%s313 + $0x84] sm:$0xff]
        %v362 = vld [vmem:[%s313 + $0x8c] sm:$0xf]
        %v363 = vld [vmem:[%s313 + $0x90] sm:$0xff]
        %v364 = vld [vmem:[%s313 + $0x98] sm:$0xff]
        %v365 = vld [vmem:[%s313 + $0xa0] sm:$0xff]
        %v366 = vld [vmem:[%s313 + $0xa8] sm:$0xff]
        %v367 = vld [vmem:[%s313 + $0xb0] sm:$0xf]
        %v368 = vld [vmem:[%s313 + $0xb4] sm:$0xff]
        %v369 = vld [vmem:[%s313 + $0xbc] sm:$0xff]
        %v370 = vld [vmem:[%s313 + $0xc4] sm:$0xff]
        %v371 = vld [vmem:[%s313 + $0xcc] sm:$0xff]
        %v372 = vld [vmem:[%s313 + $0xd4] sm:$0xf]
        %v373 = vld [vmem:[%s313 + $0xd8] sm:$0xff]
        %v374 = vld [vmem:[%s313 + $0xe0] sm:$0xff]
        %v375 = vld [vmem:[%s313 + $0xe8] sm:$0xff]
        %v376 = vld [vmem:[%s313 + $0xf0] sm:$0xff]
        %v377 = vld [vmem:[%s313 + $0xf8] sm:$0xf]
        %v378 = vld [vmem:[%s313 + $0xfc] sm:$0xff]
        %v379 = vld [vmem:[%s313 + $0x104] sm:$0xff]
        %v380 = vld [vmem:[%s313 + $0x10c] sm:$0xff]
        %v381 = vld [vmem:[%s313 + $0x114] sm:$0xff]
        %v382 = vld [vmem:[%s313 + $0x11c] sm:$0xf]
        %v383 = vld [vmem:[%s313 + $0x120] sm:$0xff]
        %v384 = vld [vmem:[%s313 + $0x128] sm:$0xff]
        %v385 = vld [vmem:[%s313 + $0x130] sm:$0xff]
        %v386 = vld [vmem:[%s313 + $0x138] sm:$0xff]
        %v387 = vld [vmem:[%s313 + $0x140] sm:$0xf]
        %v388 = vld [vmem:[%s313 + $0x144] sm:$0xff]
        %v389 = vld [vmem:[%s313 + $0x14c] sm:$0xff]
        %v390 = vld [vmem:[%s313 + $0x154] sm:$0xff]
        %v391 = vld [vmem:[%s313 + $0x15c] sm:$0xff]
        %v392 = vld [vmem:[%s313 + $0x164] sm:$0xf]
        %v393 = vld [vmem:[%s313 + $0x168] sm:$0xff]
        %v394 = vld [vmem:[%s313 + $0x170] sm:$0xff]
        %v395 = vld [vmem:[%s313 + $0x178] sm:$0xff]
        %v396 = vld [vmem:[%s313 + $0x180] sm:$0xff]
        %v397 = vld [vmem:[%s313 + $0x188] sm:$0xf]
        %v398 = vld [vmem:[%s313 + $0x18c] sm:$0xff]
        %v399 = vld [vmem:[%s313 + $0x194] sm:$0xff]
        %v400 = vld [vmem:[%s313 + $0x19c] sm:$0xff]
        %v401 = vld [vmem:[%s313 + $0x1a4] sm:$0xff]
        %v402 = vld [vmem:[%s313 + $0x1ac] sm:$0xf]
        %v403 = vld [vmem:[%s313 + $0x1b0] sm:$0xff]
        %v404 = vld [vmem:[%s313 + $0x1b8] sm:$0xff]
        %v405 = vld [vmem:[%s313 + $0x1c0] sm:$0xff]
        %v406 = vld [vmem:[%s313 + $0x1c8] sm:$0xff]
        %v407 = vld [vmem:[%s313 + $0x1d0] sm:$0xf]
        %v408 = vld [vmem:[%s313 + $0x1d4] sm:$0x33]
        %v409 = vld [vmem:[%s313 + $0x1dc] sm:$0x33]
        %v410 = vld [vmem:[%s313 + $0x1e4] sm:$0x33]
        %v411 = vld [vmem:[%s313 + $0x1ec] sm:$0x33]
        %v412 = vld [vmem:[%s313 + $0x1f4] sm:$0x3]
        %v413 = vld [vmem:[%s2] sm:$0xf]
        %415 = vset.pattern.permute.xlu0 0
        %416 = vperm.xlu0 %415, %v413
        %v417 = vpop.permute.xlu0 %416
        %v489 = vunpack.c.l.b16 %v343
        %v490 = vunpack.c.h.b16 %v343
        %v491 = vunpack.c.l.b16 %v344
        %v492 = vunpack.c.h.b16 %v344
        %v493 = vunpack.c.l.b16 %v345
        %v494 = vunpack.c.h.b16 %v345
        %v495 = vunpack.c.l.b16 %v346
        %v496 = vunpack.c.h.b16 %v346
        %v497 = vunpack.c.l.b16 %v347
        %v498 = vunpack.c.l.b16 %v348
        %v499 = vunpack.c.h.b16 %v348
        %v500 = vunpack.c.l.b16 %v349
        %v501 = vunpack.c.h.b16 %v349
        %v502 = vunpack.c.l.b16 %v350
        %v503 = vunpack.c.h.b16 %v350
        %v504 = vunpack.c.l.b16 %v351
        %v505 = vunpack.c.h.b16 %v351
        %v506 = vunpack.c.l.b16 %v352
        %v507 = vunpack.c.l.b16 %v353
        %v508 = vunpack.c.h.b16 %v353
        %v509 = vunpack.c.l.b16 %v354
        %v510 = vunpack.c.h.b16 %v354
        %v511 = vunpack.c.l.b16 %v355
        %v512 = vunpack.c.h.b16 %v355
        %v513 = vunpack.c.l.b16 %v356
        %v514 = vunpack.c.h.b16 %v356
        %v515 = vunpack.c.l.b16 %v357
        %v516 = vunpack.c.l.b16 %v358
        %v517 = vunpack.c.h.b16 %v358
        %v518 = vunpack.c.l.b16 %v359
        %v519 = vunpack.c.h.b16 %v359
        %v520 = vunpack.c.l.b16 %v360
        %v521 = vunpack.c.h.b16 %v360
        %v522 = vunpack.c.l.b16 %v361
        %v523 = vunpack.c.h.b16 %v361
        %v524 = vunpack.c.l.b16 %v362
        %v525 = vunpack.c.l.b16 %v363
        %v526 = vunpack.c.h.b16 %v363
        %v527 = vunpack.c.l.b16 %v364
        %v528 = vunpack.c.h.b16 %v364
        %v529 = vunpack.c.l.b16 %v365
        %v530 = vunpack.c.h.b16 %v365
        %v531 = vunpack.c.l.b16 %v366
        %v532 = vunpack.c.h.b16 %v366
        %v533 = vunpack.c.l.b16 %v367
        %v534 = vunpack.c.l.b16 %v368
        %v535 = vunpack.c.h.b16 %v368
        %v536 = vunpack.c.l.b16 %v369
        %v537 = vunpack.c.h.b16 %v369
        %v538 = vunpack.c.l.b16 %v370
        %v539 = vunpack.c.h.b16 %v370
        %v540 = vunpack.c.l.b16 %v371
        %v541 = vunpack.c.h.b16 %v371
        %v542 = vunpack.c.l.b16 %v372
        %v543 = vunpack.c.l.b16 %v373
        %v544 = vunpack.c.h.b16 %v373
        %v545 = vunpack.c.l.b16 %v374
        %v546 = vunpack.c.h.b16 %v374
        %v547 = vunpack.c.l.b16 %v375
        %v548 = vunpack.c.h.b16 %v375
        %v549 = vunpack.c.l.b16 %v376
        %v550 = vunpack.c.h.b16 %v376
        %v551 = vunpack.c.l.b16 %v377
        %v552 = vunpack.c.l.b16 %v378
        %v553 = vunpack.c.h.b16 %v378
        %v554 = vunpack.c.l.b16 %v379
        %v555 = vunpack.c.h.b16 %v379
        %v556 = vunpack.c.l.b16 %v380
        %v557 = vunpack.c.h.b16 %v380
        %v558 = vunpack.c.l.b16 %v381
        %v559 = vunpack.c.h.b16 %v381
        %v560 = vunpack.c.l.b16 %v382
        %v561 = vunpack.c.l.b16 %v383
        %v562 = vunpack.c.h.b16 %v383
        %v563 = vunpack.c.l.b16 %v384
        %v564 = vunpack.c.h.b16 %v384
        %v565 = vunpack.c.l.b16 %v385
        %v566 = vunpack.c.h.b16 %v385
        %v567 = vunpack.c.l.b16 %v386
        %v568 = vunpack.c.h.b16 %v386
        %v569 = vunpack.c.l.b16 %v387
        %v570 = vunpack.c.l.b16 %v388
        %v571 = vunpack.c.h.b16 %v388
        %v572 = vunpack.c.l.b16 %v389
        %v573 = vunpack.c.h.b16 %v389
        %v574 = vunpack.c.l.b16 %v390
        %v575 = vunpack.c.h.b16 %v390
        %v576 = vunpack.c.l.b16 %v391
        %v577 = vunpack.c.h.b16 %v391
        %v578 = vunpack.c.l.b16 %v392
        %v579 = vunpack.c.l.b16 %v393
        %v580 = vunpack.c.h.b16 %v393
        %v581 = vunpack.c.l.b16 %v394
        %v582 = vunpack.c.h.b16 %v394
        %v583 = vunpack.c.l.b16 %v395
        %v584 = vunpack.c.h.b16 %v395
        %v585 = vunpack.c.l.b16 %v396
        %v586 = vunpack.c.h.b16 %v396
        %v587 = vunpack.c.l.b16 %v397
        %v588 = vunpack.c.l.b16 %v398
        %v589 = vunpack.c.h.b16 %v398
        %v590 = vunpack.c.l.b16 %v399
        %v591 = vunpack.c.h.b16 %v399
        %v592 = vunpack.c.l.b16 %v400
        %v593 = vunpack.c.h.b16 %v400
        %v594 = vunpack.c.l.b16 %v401
        %v595 = vunpack.c.h.b16 %v401
        %v596 = vunpack.c.l.b16 %v402
        %v597 = vunpack.c.l.b16 %v403
        %v598 = vunpack.c.h.b16 %v403
        %v599 = vunpack.c.l.b16 %v404
        %v600 = vunpack.c.h.b16 %v404
        %v601 = vunpack.c.l.b16 %v405
        %v602 = vunpack.c.h.b16 %v405
        %v603 = vunpack.c.l.b16 %v406
        %v604 = vunpack.c.h.b16 %v406
        %v605 = vunpack.c.l.b16 %v407
        %v606 = vunpack.c.l.b16 %v408
        %v607 = vunpack.c.h.b16 %v408
        %v608 = vunpack.c.l.b16 %v409
        %v609 = vunpack.c.h.b16 %v409
        %v610 = vunpack.c.l.b16 %v410
        %v611 = vunpack.c.h.b16 %v410
        %v612 = vunpack.c.l.b16 %v411
        %v613 = vunpack.c.h.b16 %v411
        %v614 = vunpack.c.l.b16 %v412
        %v615 = vpack.c.b16 %v498, %v489
        %v616 = vpack.c.b16 %v499, %v490
        %v617 = vpack.c.b16 %v500, %v491
        %v618 = vpack.c.b16 %v501, %v492
        %v619 = vpack.c.b16 %v502, %v493
        %v620 = vpack.c.b16 %v503, %v494
        %v621 = vpack.c.b16 %v504, %v495
        %v622 = vpack.c.b16 %v505, %v496
        %v623 = vpack.c.b16 %v506, %v497
        %v624 = vpack.c.b16 %v516, %v507
        %v625 = vpack.c.b16 %v517, %v508
        %v626 = vpack.c.b16 %v518, %v509
        %v627 = vpack.c.b16 %v519, %v510
        %v628 = vpack.c.b16 %v520, %v511
        %v629 = vpack.c.b16 %v521, %v512
        %v630 = vpack.c.b16 %v522, %v513
        %v631 = vpack.c.b16 %v523, %v514
        %v632 = vpack.c.b16 %v524, %v515
        %v633 = vpack.c.b16 %v534, %v525
        %v634 = vpack.c.b16 %v535, %v526
        %v635 = vpack.c.b16 %v536, %v527
        %v636 = vpack.c.b16 %v537, %v528
        %v637 = vpack.c.b16 %v538, %v529
        %v638 = vpack.c.b16 %v539, %v530
        %v639 = vpack.c.b16 %v540, %v531
        %v640 = vpack.c.b16 %v541, %v532
        %v641 = vpack.c.b16 %v542, %v533
        %v642 = vpack.c.b16 %v552, %v543
        %v643 = vpack.c.b16 %v553, %v544
        %v644 = vpack.c.b16 %v554, %v545
        %v645 = vpack.c.b16 %v555, %v546
        %v646 = vpack.c.b16 %v556, %v547
        %v647 = vpack.c.b16 %v557, %v548
        %v648 = vpack.c.b16 %v558, %v549
        %v649 = vpack.c.b16 %v559, %v550
        %v650 = vpack.c.b16 %v560, %v551
        %v651 = vpack.c.b16 %v570, %v561
        %v652 = vpack.c.b16 %v571, %v562
        %v653 = vpack.c.b16 %v572, %v563
        %v654 = vpack.c.b16 %v573, %v564
        %v655 = vpack.c.b16 %v574, %v565
        %v656 = vpack.c.b16 %v575, %v566
        %v657 = vpack.c.b16 %v576, %v567
        %v658 = vpack.c.b16 %v577, %v568
        %v659 = vpack.c.b16 %v578, %v569
        %v660 = vpack.c.b16 %v588, %v579
        %v661 = vpack.c.b16 %v589, %v580
        %v662 = vpack.c.b16 %v590, %v581
        %v663 = vpack.c.b16 %v591, %v582
        %v664 = vpack.c.b16 %v592, %v583
        %v665 = vpack.c.b16 %v593, %v584
        %v666 = vpack.c.b16 %v594, %v585
        %v667 = vpack.c.b16 %v595, %v586
        %v668 = vpack.c.b16 %v596, %v587
        %v669 = vpack.c.b16 %v606, %v597
        %v670 = vpack.c.b16 %v607, %v598
        %v671 = vpack.c.b16 %v608, %v599
        %v672 = vpack.c.b16 %v609, %v600
        %v673 = vpack.c.b16 %v610, %v601
        %v674 = vpack.c.b16 %v611, %v602
        %v675 = vpack.c.b16 %v612, %v603
        %v676 = vpack.c.b16 %v613, %v604
        %v677 = vpack.c.b16 %v614, %v605
        %vm732 = vcmask 883712
        %v734 = vsel %vm732, %v342, 0
        %vm736 = vcmask 1045504
        %v738 = vsel %vm736, %v669, 0
        %v741 = vsel %vm736, %v670, 0
        %v744 = vsel %vm736, %v671, 0
        %v747 = vsel %vm736, %v672, 0
        %v750 = vsel %vm736, %v673, 0
        %v753 = vsel %vm736, %v674, 0
        %v756 = vsel %vm736, %v675, 0
        %v759 = vsel %vm736, %v676, 0
        %v762 = vsel %vm736, %v677, 0
        %764 = vmatpush.bf16.msra.mxu0 0
        %765 = vmatpush.bf16.msra.mxu0 %v738
        %766 = vmatpush.bf16.msra.mxu0 %v660
        %767 = vmatpush.bf16.msra.mxu0 %v651
        %768 = vmatpush.bf16.msra.mxu0 %v642
        %769 = vmatpush.bf16.msra.mxu0 %v633
        %770 = vmatpush.bf16.msra.mxu0 %v624
        %771 = vmatpush.bf16.msra.mxu0 %v615
        %772 = vmatmul.bf16.gmra.mxu0 %v734
        %v773 = vpop.f32.mrf.mxu0
        %v774 = vadd.f32 %v417, %v773
        %v775 = vpop.f32.mrf.mxu0
        %776 = vdwg.mxu0
        %777 = vmatpush.bf16.msra.mxu0 0
        %778 = vmatpush.bf16.msra.mxu0 %v741
        %779 = vmatpush.bf16.msra.mxu0 %v661
        %780 = vmatpush.bf16.msra.mxu0 %v652
        %781 = vmatpush.bf16.msra.mxu0 %v643
        %782 = vmatpush.bf16.msra.mxu0 %v634
        %783 = vmatpush.bf16.msra.mxu0 %v625
        %784 = vmatpush.bf16.msra.mxu0 %v616
        %785 = vmatmul.bf16.gmra.mxu0 %v734
        %v786 = vpop.f32.mrf.mxu0
        %v787 = vadd.f32 %v417, %v786
        %v788 = vpop.f32.mrf.mxu0
        %789 = vdwg.mxu0
        %790 = vmatpush.bf16.msra.mxu0 0
        %791 = vmatpush.bf16.msra.mxu0 %v744
        %792 = vmatpush.bf16.msra.mxu0 %v662
        %793 = vmatpush.bf16.msra.mxu0 %v653
        %794 = vmatpush.bf16.msra.mxu0 %v644
        %795 = vmatpush.bf16.msra.mxu0 %v635
        %796 = vmatpush.bf16.msra.mxu0 %v626
        %797 = vmatpush.bf16.msra.mxu0 %v617
        %798 = vmatmul.bf16.gmra.mxu0 %v734
        %v799 = vpop.f32.mrf.mxu0
        %v800 = vadd.f32 %v417, %v799
        %v801 = vpop.f32.mrf.mxu0
        %802 = vdwg.mxu0
        %803 = vmatpush.bf16.msra.mxu0 0
        %804 = vmatpush.bf16.msra.mxu0 %v747
        %805 = vmatpush.bf16.msra.mxu0 %v663
        %806 = vmatpush.bf16.msra.mxu0 %v654
        %807 = vmatpush.bf16.msra.mxu0 %v645
        %808 = vmatpush.bf16.msra.mxu0 %v636
        %809 = vmatpush.bf16.msra.mxu0 %v627
        %810 = vmatpush.bf16.msra.mxu0 %v618
        %811 = vmatmul.bf16.gmra.mxu0 %v734
        %v812 = vpop.f32.mrf.mxu0
        %v813 = vadd.f32 %v417, %v812
        %v814 = vpop.f32.mrf.mxu0
        %815 = vdwg.mxu0
        %816 = vmatpush.bf16.msra.mxu0 0
        %817 = vmatpush.bf16.msra.mxu0 %v750
        %818 = vmatpush.bf16.msra.mxu0 %v664
        %819 = vmatpush.bf16.msra.mxu0 %v655
        %820 = vmatpush.bf16.msra.mxu0 %v646
        %821 = vmatpush.bf16.msra.mxu0 %v637
        %822 = vmatpush.bf16.msra.mxu0 %v628
        %823 = vmatpush.bf16.msra.mxu0 %v619
        %824 = vmatmul.bf16.gmra.mxu0 %v734
        %v825 = vpop.f32.mrf.mxu0
        %v826 = vadd.f32 %v417, %v825
        %v827 = vpop.f32.mrf.mxu0
        %828 = vdwg.mxu0
        %829 = vmatpush.bf16.msra.mxu0 0
        %830 = vmatpush.bf16.msra.mxu0 %v753
        %831 = vmatpush.bf16.msra.mxu0 %v665
        %832 = vmatpush.bf16.msra.mxu0 %v656
        %833 = vmatpush.bf16.msra.mxu0 %v647
        %834 = vmatpush.bf16.msra.mxu0 %v638
        %835 = vmatpush.bf16.msra.mxu0 %v629
        %836 = vmatpush.bf16.msra.mxu0 %v620
        %837 = vmatmul.bf16.gmra.mxu0 %v734
        %v838 = vpop.f32.mrf.mxu0
        %v839 = vadd.f32 %v417, %v838
        %v840 = vpop.f32.mrf.mxu0
        %841 = vdwg.mxu0
        %842 = vmatpush.bf16.msra.mxu0 0
        %843 = vmatpush.bf16.msra.mxu0 %v756
        %844 = vmatpush.bf16.msra.mxu0 %v666
        %845 = vmatpush.bf16.msra.mxu0 %v657
        %846 = vmatpush.bf16.msra.mxu0 %v648
        %847 = vmatpush.bf16.msra.mxu0 %v639
        %848 = vmatpush.bf16.msra.mxu0 %v630
        %849 = vmatpush.bf16.msra.mxu0 %v621
        %850 = vmatmul.bf16.gmra.mxu0 %v734
        %v851 = vpop.f32.mrf.mxu0
        %v852 = vadd.f32 %v417, %v851
        %v853 = vpop.f32.mrf.mxu0
        %854 = vdwg.mxu0
        %855 = vmatpush.bf16.msra.mxu0 0
        %856 = vmatpush.bf16.msra.mxu0 %v759
        %857 = vmatpush.bf16.msra.mxu0 %v667
        %858 = vmatpush.bf16.msra.mxu0 %v658
        %859 = vmatpush.bf16.msra.mxu0 %v649
        %860 = vmatpush.bf16.msra.mxu0 %v640
        %861 = vmatpush.bf16.msra.mxu0 %v631
        %862 = vmatpush.bf16.msra.mxu0 %v622
        %863 = vmatmul.bf16.gmra.mxu0 %v734
        %v864 = vpop.f32.mrf.mxu0
        %v865 = vadd.f32 %v417, %v864
        %v866 = vpop.f32.mrf.mxu0
        %867 = vdwg.mxu0
        %868 = vmatpush.bf16.msra.mxu0 0
        %869 = vmatpush.bf16.msra.mxu0 %v762
        %870 = vmatpush.bf16.msra.mxu0 %v668
        %871 = vmatpush.bf16.msra.mxu0 %v659
        %872 = vmatpush.bf16.msra.mxu0 %v650
        %873 = vmatpush.bf16.msra.mxu0 %v641
        %874 = vmatpush.bf16.msra.mxu0 %v632
        %875 = vmatpush.bf16.msra.mxu0 %v623
        %876 = vmatmul.bf16.gmra.mxu0 %v734
        %v877 = vpop.f32.mrf.mxu0
        %v878 = vadd.f32 %v417, %v877
        %v879 = vpop.f32.mrf.mxu0
        %880 = vdwg.mxu0
        %v889 = vrot.slane %v787, 4
        %v890 = vrot.slane %v813, 4
        %v891 = vrot.slane %v839, 4
        %v892 = vrot.slane %v865, 4
        %vm893 = vcmask 1043456
        %v894 = vsel %vm893, %v774, %v889
        %v895 = vsel %vm893, %v800, %v890
        %v896 = vsel %vm893, %v826, %v891
        %v897 = vsel %vm893, %v852, %v892
        %902 = vst [vmem:[%s339] sm:$0xff] %v894
        %903 = vst [vmem:[%s339 + $0x8] sm:$0xff] %v895
        %904 = vst [vmem:[%s339 + $0x10] sm:$0xff] %v896
        %905 = vst [vmem:[%s339 + $0x18] sm:$0xff] %v897
        %906 = vst [vmem:[%s339 + $0x20] sm:$0xf] %v878
        %s907 = smul.u32 9, %s14
        %p908 = scmp.lt.s32.totalorder %s907, 53
        %s909 = scalar_select %p908, %s907, 53
        %s910 = smul.addr %s909, 4
        %s911 = scalar_lea.vmem %s3, %s910
        // Predicated region
        $region59: #{_lambda_.21} parent=53 // pred_check
          %p912 = pneg %p100
        $region60: #{_lambda_.21} parent=53 // pred_check_branch
          %914 = sbr.rel (%p912) target = $region62
        $region61: #{_lambda_.21} parent=53 // pred_region
          %s915 = smul.u32 9, %s14
        $region62: #{_lambda_.21} parent=53 // pred_fallthru
          _
      $region54: #{_lambda_.21} parent=5 // pred_fallthru
        _
      %p916 = scmp.le.s32.totalorder 2, %s9
      // Predicated region
      $region63: #{_lambda_.21} parent=5 // pred_check
        %p917 = pneg %p916
      $region64: #{_lambda_.21} parent=5 // pred_check_branch
        %919 = sbr.rel (%p917) target = $region66
      $region65: #{_lambda_.21} parent=5 // pred_region
        %s920 = ssub.s32 %s9, 2
        // Predicated region
        $region67: #{_lambda_.21} parent=65 // pred_check
          %p921 = pneg %p106
        $region68: #{_lambda_.21} parent=65 // pred_check_branch
          %923 = sbr.rel (%p921) target = $region70
        $region69: #{_lambda_.21} parent=65 // pred_region
          %s924 = smul.u32 9, %s15
          %p925 = scmp.lt.s32.totalorder %s924, 53
          %s926 = scalar_select %p925, %s924, 53
          %s927 = smul.addr %s926, 4
          %s928 = scalar_lea.vmem %s3, %s927
        $region70: #{_lambda_.21} parent=65 // pred_fallthru
          _
      $region66: #{_lambda_.21} parent=5 // pred_fallthru
        _
    $region6: #{_lambda_.21} parent=1 // loop_footer
      %s13 = sadd.s32 1, %s9
    $region7: #{_lambda_.21} parent=1 // loop_footer_branch
      %8 = sbr.rel target = $region3
    $region8: #{_lambda_.21} parent=1 // loop_exit
      _

// kernel: _lambda_.27
$region0: #{_lambda_.27}
  #allocation0 [shape = 'u32[]', space=smem, size = 0x4, offset = 0x4, fixed_abs, tag = 'smem constant byte address 0x4 - core index']
  #allocation1 [shape = 'u32[72,128]{1,0:T(1,128)}', space=vmem, size = 0x9000, scoped, tag = 'internal scratch']
  %s0 = inlined_call_operand.vmem [shape: f32[8,576], index: 0, kind: input, shape index: {}]
  %s1 = inlined_call_operand.vmem [shape: f32[8,1], index: 1, kind: input, shape index: {}]
  %s2 = inlined_call_operand.vmem [shape: f32[8,1], index: 2, kind: input, shape index: {}]
  %s3 = inlined_call_operand.vmem [shape: f32[8,1], index: 3, kind: input, shape index: {}]
  %s4 = inlined_call_operand.vmem [shape: f32[8,576], index: 4, kind: output, shape index: {}]
  %s5 = sld [smem:[#allocation0]]
  $region26: #{_lambda_.27} parent=0
    _
  %s7 = ssub.s32 1, %s5
  %s8 = scalar_select 0, %s7, %s5
  // Predicated region
  $region2: #{_lambda_.27} parent=0 // pred_check
    _
  $region3: #{_lambda_.27} parent=0 // pred_check_branch
    %10 = sbr.rel (0) target = $region5
  $region4: #{_lambda_.27} parent=0 // pred_region
    _
  $region5: #{_lambda_.27} parent=0 // pred_fallthru
    _
  // Predicated region
  $region6: #{_lambda_.27} parent=0 // pred_check
    _
  $region7: #{_lambda_.27} parent=0 // pred_check_branch
    %12 = sbr.rel (0) target = $region9
  $region8: #{_lambda_.27} parent=0 // pred_region
    _
  $region9: #{_lambda_.27} parent=0 // pred_fallthru
    _
  // Predicated region
  $region10: #{_lambda_.27} parent=0 // pred_check
    _
  $region11: #{_lambda_.27} parent=0 // pred_check_branch
    %14 = sbr.rel (0) target = $region13
  $region12: #{_lambda_.27} parent=0 // pred_region
    _
  $region13: #{_lambda_.27} parent=0 // pred_fallthru
    _
  // Predicated region
  $region14: #{_lambda_.27} parent=0 // pred_check
    _
  $region15: #{_lambda_.27} parent=0 // pred_check_branch
    %16 = sbr.rel (0) target = $region17
  $region16: #{_lambda_.27} parent=0 // pred_region
    _
  $region17: #{_lambda_.27} parent=0 // pred_fallthru
    _
  %v17 = vld [vmem:[%s0] sm:$0xff]
  %v18 = vld [vmem:[%s0 + $0x8] sm:$0xff]
  %v19 = vld [vmem:[%s0 + $0x10] sm:$0xff]
  %v20 = vld [vmem:[%s0 + $0x18] sm:$0xff]
  %v21 = vld [vmem:[%s0 + $0x20] sm:$0xff]
  %v22 = vadd.f32 %v17, %v18
  %v23 = vadd.f32 %v22, %v19
  %v24 = vadd.f32 %v23, %v20
  %vm25 = vcmask 523264
  %v26 = vsel %vm25, %v21, 0.0
  %v27 = vadd.f32 %v24, %v26
  %28 = vadd.xlane.f32.xlu0 %v27
  %v29 = vpop.xlane.xlu0 %28
  %v30 = vrcp.pop 576.0
  %v31 = vmul.f32 576.0, %v30
  %v32 = vsub.f32 1.0, %v31
  %v33 = vmul.f32 %v30, %v32
  %v34 = vadd.f32 %v30, %v33
  %vm35 = vweird.f32 %v30
  %v36 = vsel %vm35, %v30, %v34
  %v37 = vmul.f32 %v29, %v36
  %v38 = vsub.f32 %v17, %v37
  %v39 = vsub.f32 %v18, %v37
  %v40 = vsub.f32 %v19, %v37
  %v41 = vsub.f32 %v20, %v37
  %v42 = vsub.f32 %v21, %v37
  %v43 = vmul.f32 %v38, %v38
  %v44 = vmul.f32 %v39, %v39
  %v45 = vmul.f32 %v40, %v40
  %v46 = vmul.f32 %v41, %v41
  %v47 = vmul.f32 %v42, %v42
  %v48 = vadd.f32 %v43, %v44
  %v49 = vadd.f32 %v48, %v45
  %v50 = vadd.f32 %v49, %v46
  %v51 = vsel %vm25, %v47, 0.0
  %v52 = vadd.f32 %v50, %v51
  %53 = vadd.xlane.f32.xlu0 %v52
  %v54 = vpop.xlane.xlu0 %53
  %v55 = vmul.f32 %v54, %v36
  %v56 = vadd.f32 %v55, 1e-05
  %v57 = vrsqrt.pop %v56
  %v58 = vmul.f32 %v57, %v56
  %v59 = vmul.f32 %v58, %v57
  %v60 = vmul.f32 0.5, %v59
  %v61 = vsub.f32 1.5, %v60
  %v62 = vmul.f32 %v57, %v61
  %vm63 = vweird.f32 %v56
  %vm64 = vweird.f32 %v57
  %vm65 = vmor %vm63, %vm64
  %v66 = vsel %vm65, %v57, %v62
  %v67 = vmul.f32 %v38, %v66
  %v68 = vmul.f32 %v39, %v66
  %v69 = vmul.f32 %v40, %v66
  %v70 = vmul.f32 %v41, %v66
  %v71 = vmul.f32 %v42, %v66
  %v72 = vld [vmem:[%s1] sm:$0xff]
  %v73 = vadd.f32 %v72, 1.0
  %75 = vset.pattern.permute.xlu0 0
  %76 = vperm.xlu0 %75, %v73
  %v77 = vpop.permute.xlu0 %76
  %v79 = vmul.f32 %v77, %v67
  %v80 = vmul.f32 %v77, %v68
  %v81 = vmul.f32 %v77, %v69
  %v82 = vmul.f32 %v77, %v70
  %v83 = vmul.f32 %v77, %v71
  %v84 = vld [vmem:[%s2] sm:$0xff]
  %86 = vset.pattern.permute.xlu0 0
  %87 = vperm.xlu0 %86, %v84
  %v88 = vpop.permute.xlu0 %87
  %v90 = vadd.f32 %v79, %v88
  %v91 = vadd.f32 %v80, %v88
  %v92 = vadd.f32 %v81, %v88
  %v93 = vadd.f32 %v82, %v88
  %v94 = vadd.f32 %v83, %v88
  %vm95 = vcmp.ge.f32.partialorder %v90, 0.0
  %vm96 = vcmp.ge.f32.partialorder %v91, 0.0
  %vm97 = vcmp.ge.f32.partialorder %v92, 0.0
  %vm98 = vcmp.ge.f32.partialorder %v93, 0.0
  %vm99 = vcmp.ge.f32.partialorder %v94, 0.0
  %v100 = vld [vmem:[%s3] sm:$0xff]
  %102 = vset.pattern.permute.xlu0 0
  %103 = vperm.xlu0 %102, %v100
  %v104 = vpop.permute.xlu0 %103
  %v106 = vmul.f32 %v104, %v90
  %v107 = vmul.f32 %v104, %v91
  %v108 = vmul.f32 %v104, %v92
  %v109 = vmul.f32 %v104, %v93
  %v110 = vmul.f32 %v104, %v94
  %v111 = vsel %vm95, %v90, %v106
  %v112 = vsel %vm96, %v91, %v107
  %v113 = vsel %vm97, %v92, %v108
  %v114 = vsel %vm98, %v93, %v109
  %v115 = vsel %vm99, %v94, %v110
  %116 = vst [vmem:[%s4] sm:$0xff] %v111
  %117 = vst [vmem:[%s4 + $0x8] sm:$0xff] %v112
  %118 = vst [vmem:[%s4 + $0x10] sm:$0xff] %v113
  %119 = vst [vmem:[%s4 + $0x18] sm:$0xff] %v114
  %120 = vst.msk [vmem:[%s4 + $0x20] sm:$0xff] %vm25, %v115
  // Predicated region
  $region18: #{_lambda_.27} parent=0 // pred_check
    _
  $region19: #{_lambda_.27} parent=0 // pred_check_branch
    %122 = sbr.rel (0) target = $region21
  $region20: #{_lambda_.27} parent=0 // pred_region
    _
  $region21: #{_lambda_.27} parent=0 // pred_fallthru
    _
  // Predicated region
  $region22: #{_lambda_.27} parent=0 // pred_check
    _
  $region23: #{_lambda_.27} parent=0 // pred_check_branch
    %124 = sbr.rel (0) target = $region25
  $region24: #{_lambda_.27} parent=0 // pred_region
    _
  $region25: #{_lambda_.27} parent=0 // pred_fallthru
    _

// kernel: _lambda_.33
$region0: #{_lambda_.33}
  #allocation0 [shape = 'u32[]', space=smem, size = 0x4, offset = 0x4, fixed_abs, tag = 'smem constant byte address 0x4 - core index']
  #allocation1 [shape = 'u32[72,128]{1,0:T(1,128)}', space=vmem, size = 0x9000, scoped, tag = 'internal scratch']
  %s0 = inlined_call_operand.vmem [shape: bf16[4,216], index: 0, kind: input, shape index: {}]
  %s1 = inlined_call_operand.vmem [shape: bf16[216,6912], index: 1, kind: input, shape index: {}]
  %s2 = inlined_call_operand.vmem [shape: f32[4,1], index: 2, kind: input, shape index: {}]
  %s3 = inlined_call_operand.vmem [shape: f32[4,6912], index: 3, kind: output, shape index: {}]
  %s4 = sld [smem:[#allocation0]]
  $region71: #{_lambda_.33} parent=0
    _
  %s6 = ssub.s32 1, %s4
  %s7 = scalar_select 0, %s6, %s4
  $region1: #{_lambda_.33} parent=0
    #allocation2 [shape = 'u8[995328]{0}', space=vmem, size = 0xf3000, scoped, tag = 'input window, operand 1']
    loop: start=0, step=1, limit=8
    $region2: #{_lambda_.33} parent=1 // loop_pre_header
      _
    $region3: #{_lambda_.33} parent=1 // loop_header
      %s9 = sphi 0, %s13
      %p10 = scmp.ge.s32.totalorder %s9, 8
      %s17 = sphi 0, %s17
      %s19 = sphi 0, %s17
      %s20 = sphi 0, %s19
      %s34 = sphi 0, %s20
      %s40 = sphi 0, %s42
      %s43 = sphi 0, %s40
      %s44 = sphi 0, %s43
      %s60 = sphi 0, %s44
      %s64 = sphi 0, %s64
      %s66 = sphi 0, %s64
      %s67 = sphi 0, %s66
      %s81 = sphi 0, %s67
      %s87 = sphi 0, %s89
      %s90 = sphi 0, %s87
      %s91 = sphi 0, %s90
      %s107 = sphi 0, %s91
    $region4: #{_lambda_.33} parent=1 // loop_header_branch
      %12 = sbr.rel (%p10) target = $region8
    $region5: #{_lambda_.33} parent=1 // loop_body
      %s14 = ssub.s32 %s9, 1
      %s15 = ssub.s32 %s9, 2
      %s16 = sadd.s32 %s9, 1
      %s18 = sadd.s32 %s17, 1
      %p21 = scmp.eq.s32.totalorder %s9, 5
      %p22 = scmp.ne.s32.totalorder %s17, %s19
      %p23 = scmp.eq.s32.totalorder %s9, 0
      %p24 = por %p22, %p23
      %p25 = scmp.ne.s32.totalorder %s17, %s19
      %p26 = scmp.eq.s32.totalorder %s14, 5
      %p27 = por %p25, %p26
      %p28 = scmp.ne.s32.totalorder %s19, %s20
      %p29 = scmp.eq.s32.totalorder %s14, 0
      %p30 = por %p28, %p29
      %p31 = scmp.ne.s32.totalorder %s19, %s20
      %p32 = scmp.eq.s32.totalorder %s15, 5
      %p33 = por %p31, %p32
      %p35 = scmp.ne.s32.totalorder %s20, %s34
      %p36 = scmp.eq.s32.totalorder %s15, 0
      %p37 = por %p35, %p36
      %s38 = ssub.s32 %s9, %s16
      %p39 = scmp.eq.s32.totalorder %s38, 0
      %s41 = sadd.s32 %s40, 1
      %s42 = scalar_select %p39, %s40, %s41
      %p45 = pneg %p39
      %p46 = scmp.eq.s32.totalorder %s9, 5
      %p47 = por %p45, %p46
      %p48 = scmp.ne.s32.totalorder %s40, %s43
      %p49 = scmp.eq.s32.totalorder %s9, 0
      %p50 = por %p48, %p49
      %p51 = scmp.ne.s32.totalorder %s40, %s43
      %p52 = scmp.eq.s32.totalorder %s14, 5
      %p53 = por %p51, %p52
      %p54 = scmp.ne.s32.totalorder %s43, %s44
      %p55 = scmp.eq.s32.totalorder %s14, 0
      %p56 = por %p54, %p55
      %p57 = scmp.ne.s32.totalorder %s43, %s44
      %p58 = scmp.eq.s32.totalorder %s15, 5
      %p59 = por %p57, %p58
      %p61 = scmp.ne.s32.totalorder %s44, %s60
      %p62 = scmp.eq.s32.totalorder %s15, 0
      %p63 = por %p61, %p62
      %s65 = sadd.s32 %s64, 1
      %p68 = scmp.eq.s32.totalorder %s9, 5
      %p69 = scmp.ne.s32.totalorder %s64, %s66
      %p70 = scmp.eq.s32.totalorder %s9, 0
      %p71 = por %p69, %p70
      %p72 = scmp.ne.s32.totalorder %s64, %s66
      %p73 = scmp.eq.s32.totalorder %s14, 5
      %p74 = por %p72, %p73
      %p75 = scmp.ne.s32.totalorder %s66, %s67
      %p76 = scmp.eq.s32.totalorder %s14, 0
      %p77 = por %p75, %p76
      %p78 = scmp.ne.s32.totalorder %s66, %s67
      %p79 = scmp.eq.s32.totalorder %s15, 5
      %p80 = por %p78, %p79
      %p82 = scmp.ne.s32.totalorder %s67, %s81
      %p83 = scmp.eq.s32.totalorder %s15, 0
      %p84 = por %p82, %p83
      %s85 = ssub.s32 %s9, %s16
      %p86 = scmp.eq.s32.totalorder %s85, 0
      %s88 = sadd.s32 %s87, 1
      %s89 = scalar_select %p86, %s87, %s88
      %p92 = pneg %p86
      %p93 = scmp.eq.s32.totalorder %s9, 5
      %p94 = por %p92, %p93
      %p95 = scmp.ne.s32.totalorder %s87, %s90
      %p96 = scmp.eq.s32.totalorder %s9, 0
      %p97 = por %p95, %p96
      %p98 = scmp.ne.s32.totalorder %s87, %s90
      %p99 = scmp.eq.s32.totalorder %s14, 5
      %p100 = por %p98, %p99
      %p101 = scmp.ne.s32.totalorder %s90, %s91
      %p102 = scmp.eq.s32.totalorder %s14, 0
      %p103 = por %p101, %p102
      %p104 = scmp.ne.s32.totalorder %s90, %s91
      %p105 = scmp.eq.s32.totalorder %s15, 5
      %p106 = por %p104, %p105
      %p108 = scmp.ne.s32.totalorder %s91, %s107
      %p109 = scmp.eq.s32.totalorder %s15, 0
      %p110 = por %p108, %p109
      %p111 = scmp.le.s32.totalorder 1, %s9
      %p112 = scmp.lt.s32.totalorder %s9, 7
      %p113 = pnand %p111, %p112
      %p114 = pneg %p113
      // Predicated region
      $region9: #{_lambda_.33} parent=5 // pred_check
        _
      $region10: #{_lambda_.33} parent=5 // pred_check_branch
        %116 = sbr.rel (%p113) target = $region12
      $region11: #{_lambda_.33} parent=5 // pred_region
        %s117 = ssub.s32 %s9, 1
        // Predicated region
        $region13: #{_lambda_.33} parent=11 // pred_check
          %p118 = pneg %p30
        $region14: #{_lambda_.33} parent=11 // pred_check_branch
          %120 = sbr.rel (%p118) target = $region16
        $region15: #{_lambda_.33} parent=11 // pred_region
          _
        $region16: #{_lambda_.33} parent=11 // pred_fallthru
          _
        // Predicated region
        $region17: #{_lambda_.33} parent=11 // pred_check
          %p121 = pneg %p77
        $region18: #{_lambda_.33} parent=11 // pred_check_branch
          %123 = sbr.rel (%p121) target = $region20
        $region19: #{_lambda_.33} parent=11 // pred_region
          _
        $region20: #{_lambda_.33} parent=11 // pred_fallthru
          _
      $region12: #{_lambda_.33} parent=5 // pred_fallthru
        _
      %p124 = scmp.lt.s32.totalorder %s9, 6
      // Predicated region
      $region21: #{_lambda_.33} parent=5 // pred_check
        %p125 = pneg %p124
      $region22: #{_lambda_.33} parent=5 // pred_check_branch
        %127 = sbr.rel (%p125) target = $region24
      $region23: #{_lambda_.33} parent=5 // pred_region
        // Predicated region
        $region25: #{_lambda_.33} parent=23 // pred_check
          %p128 = pneg %p50
        $region26: #{_lambda_.33} parent=23 // pred_check_branch
          %130 = sbr.rel (%p128) target = $region28
        $region27: #{_lambda_.33} parent=23 // pred_region
          %s131 = sand.u32 %s40, 1
          %s132 = sand.u32 %s40, 1
          %s133 = smul.addr %s132, 972
          %s134 = scalar_lea.vmem [#allocation2], %s133
          %s135 = smul.u32 9, %s9
          %s136 = smul.addr %s135, 4
          %s137 = scalar_lea.vmem %s1, %s136
          // Predicated region
          $region29: #{_lambda_.33} parent=27 // pred_check
            _
          $region30: #{_lambda_.33} parent=27 // pred_check_branch
            %139 = sbr.rel (0) target = $region32
          $region31: #{_lambda_.33} parent=27 // pred_region
            // Predicated region
            $region33: #{_lambda_.33} parent=31 // pred_check
              _
            $region34: #{_lambda_.33} parent=31 // pred_check_branch
              %141 = sbr.rel (0) target = $region36
            $region35: #{_lambda_.33} parent=31 // pred_region
              %s142 = scalar_lea.vmem %s137, 32
              %s143 = scalar_lea.vmem %s134, 32 [#allocation2]
              loop: start=0, step=1, limit=1
              $region37: #{_lambda_.33} parent=35 // loop_pre_header
                _
              $region38: #{_lambda_.33} parent=35 // loop_header
                %s145 = sphi 0, %s149
                %p146 = scmp.ge.s32.totalorder %s145, 1
                %s150 = sphi %s137, %s137
                %s151 = sphi %s134, %s134
              $region39: #{_lambda_.33} parent=35 // loop_header_branch
                %148 = sbr.rel (%p146) target = $region43
              $region40: #{_lambda_.33} parent=35 // loop_body
                %v152 = vld [vmem:[%s150] sm:$0xff]
                %153 = vst [vmem:[%s151] sm:$0xff] %v152
                %v154 = vld [vmem:[%s150 + $0x8] sm:$0xff]
                %155 = vst [vmem:[%s151 + $0x8] sm:$0xff] %v154
                %v156 = vld [vmem:[%s150 + $0x10] sm:$0xff]
                %157 = vst [vmem:[%s151 + $0x10] sm:$0xff] %v156
                %v158 = vld [vmem:[%s150 + $0x18] sm:$0xff]
                %159 = vst [vmem:[%s151 + $0x18] sm:$0xff] %v158
                %v160 = vld [vmem:[%s150 + $0xd8] sm:$0xff]
                %161 = vst [vmem:[%s151 + $0x24] sm:$0xff] %v160
                %v162 = vld [vmem:[%s150 + $0xe0] sm:$0xff]
                %163 = vst [vmem:[%s151 + $0x2c] sm:$0xff] %v162
                %v164 = vld [vmem:[%s150 + $0xe8] sm:$0xff]
                %165 = vst [vmem:[%s151 + $0x34] sm:$0xff] %v164
                %v166 = vld [vmem:[%s150 + $0xf0] sm:$0xff]
                %167 = vst [vmem:[%s151 + $0x3c] sm:$0xff] %v166
                %v168 = vld [vmem:[%s150 + $0x1b0] sm:$0xff]
                %169 = vst [vmem:[%s151 + $0x48] sm:$0xff] %v168
                %v170 = vld [vmem:[%s150 + $0x1b8] sm:$0xff]
                %171 = vst [vmem:[%s151 + $0x50] sm:$0xff] %v170
                %v172 = vld [vmem:[%s150 + $0x1c0] sm:$0xff]
                %173 = vst [vmem:[%s151 + $0x58] sm:$0xff] %v172
                %v174 = vld [vmem:[%s150 + $0x1c8] sm:$0xff]
                %175 = vst [vmem:[%s151 + $0x60] sm:$0xff] %v174
                %v176 = vld [vmem:[%s150 + $0x288] sm:$0xff]
                %177 = vst [vmem:[%s151 + $0x6c] sm:$0xff] %v176
                %v178 = vld [vmem:[%s150 + $0x290] sm:$0xff]
                %179 = vst [vmem:[%s151 + $0x74] sm:$0xff] %v178
                %v180 = vld [vmem:[%s150 + $0x298] sm:$0xff]
                %181 = vst [vmem:[%s151 + $0x7c] sm:$0xff] %v180
                %v182 = vld [vmem:[%s150 + $0x2a0] sm:$0xff]
                %183 = vst [vmem:[%s151 + $0x84] sm:$0xff] %v182
                %v184 = vld [vmem:[%s150 + $0x360] sm:$0xff]
                %185 = vst [vmem:[%s151 + $0x90] sm:$0xff] %v184
                %v186 = vld [vmem:[%s150 + $0x368] sm:$0xff]
                %187 = vst [vmem:[%s151 + $0x98] sm:$0xff] %v186
                %v188 = vld [vmem:[%s150 + $0x370] sm:$0xff]
                %189 = vst [vmem:[%s151 + $0xa0] sm:$0xff] %v188
                %v190 = vld [vmem:[%s150 + $0x378] sm:$0xff]
                %191 = vst [vmem:[%s151 + $0xa8] sm:$0xff] %v190
                %v192 = vld [vmem:[%s150 + $0x438] sm:$0xff]
                %193 = vst [vmem:[%s151 + $0xb4] sm:$0xff] %v192
                %v194 = vld [vmem:[%s150 + $0x440] sm:$0xff]
                %195 = vst [vmem:[%s151 + $0xbc] sm:$0xff] %v194
                %v196 = vld [vmem:[%s150 + $0x448] sm:$0xff]
                %197 = vst [vmem:[%s151 + $0xc4] sm:$0xff] %v196
                %v198 = vld [vmem:[%s150 + $0x450] sm:$0xff]
                %199 = vst [vmem:[%s151 + $0xcc] sm:$0xff] %v198
                %v200 = vld [vmem:[%s150 + $0x510] sm:$0xff]
                %201 = vst [vmem:[%s151 + $0xd8] sm:$0xff] %v200
                %v202 = vld [vmem:[%s150 + $0x518] sm:$0xff]
                %203 = vst [vmem:[%s151 + $0xe0] sm:$0xff] %v202
                %v204 = vld [vmem:[%s150 + $0x520] sm:$0xff]
                %205 = vst [vmem:[%s151 + $0xe8] sm:$0xff] %v204
                %v206 = vld [vmem:[%s150 + $0x528] sm:$0xff]
                %207 = vst [vmem:[%s151 + $0xf0] sm:$0xff] %v206
                %v208 = vld [vmem:[%s150 + $0x5e8] sm:$0xff]
                %209 = vst [vmem:[%s151 + $0xfc] sm:$0xff] %v208
                %v210 = vld [vmem:[%s150 + $0x5f0] sm:$0xff]
                %211 = vst [vmem:[%s151 + $0x104] sm:$0xff] %v210
                %v212 = vld [vmem:[%s150 + $0x5f8] sm:$0xff]
                %213 = vst [vmem:[%s151 + $0x10c] sm:$0xff] %v212
                %v214 = vld [vmem:[%s150 + $0x600] sm:$0xff]
                %215 = vst [vmem:[%s151 + $0x114] sm:$0xff] %v214
                %v216 = vld [vmem:[%s150 + $0x6c0] sm:$0xff]
                %217 = vst [vmem:[%s151 + $0x120] sm:$0xff] %v216
                %v218 = vld [vmem:[%s150 + $0x6c8] sm:$0xff]
                %219 = vst [vmem:[%s151 + $0x128] sm:$0xff] %v218
                %v220 = vld [vmem:[%s150 + $0x6d0] sm:$0xff]
                %221 = vst [vmem:[%s151 + $0x130] sm:$0xff] %v220
                %v222 = vld [vmem:[%s150 + $0x6d8] sm:$0xff]
                %223 = vst [vmem:[%s151 + $0x138] sm:$0xff] %v222
                %v224 = vld [vmem:[%s150 + $0x798] sm:$0xff]
                %225 = vst [vmem:[%s151 + $0x144] sm:$0xff] %v224
                %v226 = vld [vmem:[%s150 + $0x7a0] sm:$0xff]
                %227 = vst [vmem:[%s151 + $0x14c] sm:$0xff] %v226
                %v228 = vld [vmem:[%s150 + $0x7a8] sm:$0xff]
                %229 = vst [vmem:[%s151 + $0x154] sm:$0xff] %v228
                %v230 = vld [vmem:[%s150 + $0x7b0] sm:$0xff]
                %231 = vst [vmem:[%s151 + $0x15c] sm:$0xff] %v230
                %v232 = vld [vmem:[%s150 + $0x870] sm:$0xff]
                %233 = vst [vmem:[%s151 + $0x168] sm:$0xff] %v232
                %v234 = vld [vmem:[%s150 + $0x878] sm:$0xff]
                %235 = vst [vmem:[%s151 + $0x170] sm:$0xff] %v234
                %v236 = vld [vmem:[%s150 + $0x880] sm:$0xff]
                %237 = vst [vmem:[%s151 + $0x178] sm:$0xff] %v236
                %v238 = vld [vmem:[%s150 + $0x888] sm:$0xff]
                %239 = vst [vmem:[%s151 + $0x180] sm:$0xff] %v238
                %v240 = vld [vmem:[%s150 + $0x948] sm:$0xff]
                %241 = vst [vmem:[%s151 + $0x18c] sm:$0xff] %v240
                %v242 = vld [vmem:[%s150 + $0x950] sm:$0xff]
                %243 = vst [vmem:[%s151 + $0x194] sm:$0xff] %v242
                %v244 = vld [vmem:[%s150 + $0x958] sm:$0xff]
                %245 = vst [vmem:[%s151 + $0x19c] sm:$0xff] %v244
                %v246 = vld [vmem:[%s150 + $0x960] sm:$0xff]
                %247 = vst [vmem:[%s151 + $0x1a4] sm:$0xff] %v246
                %v248 = vld [vmem:[%s150 + $0xa20] sm:$0xff]
                %249 = vst [vmem:[%s151 + $0x1b0] sm:$0xff] %v248
                %v250 = vld [vmem:[%s150 + $0xa28] sm:$0xff]
                %251 = vst [vmem:[%s151 + $0x1b8] sm:$0xff] %v250
                %v252 = vld [vmem:[%s150 + $0xa30] sm:$0xff]
                %253 = vst [vmem:[%s151 + $0x1c0] sm:$0xff] %v252
                %v254 = vld [vmem:[%s150 + $0xa38] sm:$0xff]
                %255 = vst [vmem:[%s151 + $0x1c8] sm:$0xff] %v254
                %v256 = vld [vmem:[%s150 + $0xaf8] sm:$0xff]
                %257 = vst [vmem:[%s151 + $0x1d4] sm:$0xff] %v256
                %v258 = vld [vmem:[%s150 + $0xb00] sm:$0xff]
                %259 = vst [vmem:[%s151 + $0x1dc] sm:$0xff] %v258
                %v260 = vld [vmem:[%s150 + $0xb08] sm:$0xff]
                %261 = vst [vmem:[%s151 + $0x1e4] sm:$0xff] %v260
                %v262 = vld [vmem:[%s150 + $0xb10] sm:$0xff]
                %263 = vst [vmem:[%s151 + $0x1ec] sm:$0xff] %v262
                %v264 = vld [vmem:[%s150 + $0xbd0] sm:$0xff]
                %265 = vst [vmem:[%s151 + $0x1f8] sm:$0xff] %v264
                %v266 = vld [vmem:[%s150 + $0xbd8] sm:$0xff]
                %267 = vst [vmem:[%s151 + $0x200] sm:$0xff] %v266
                %v268 = vld [vmem:[%s150 + $0xbe0] sm:$0xff]
                %269 = vst [vmem:[%s151 + $0x208] sm:$0xff] %v268
                %v270 = vld [vmem:[%s150 + $0xbe8] sm:$0xff]
                %271 = vst [vmem:[%s151 + $0x210] sm:$0xff] %v270
                %v272 = vld [vmem:[%s150 + $0xca8] sm:$0xff]
                %273 = vst [vmem:[%s151 + $0x21c] sm:$0xff] %v272
                %v274 = vld [vmem:[%s150 + $0xcb0] sm:$0xff]
                %275 = vst [vmem:[%s151 + $0x224] sm:$0xff] %v274
                %v276 = vld [vmem:[%s150 + $0xcb8] sm:$0xff]
                %277 = vst [vmem:[%s151 + $0x22c] sm:$0xff] %v276
                %v278 = vld [vmem:[%s150 + $0xcc0] sm:$0xff]
                %279 = vst [vmem:[%s151 + $0x234] sm:$0xff] %v278
                %v280 = vld [vmem:[%s150 + $0xd80] sm:$0xff]
                %281 = vst [vmem:[%s151 + $0x240] sm:$0xff] %v280
                %v282 = vld [vmem:[%s150 + $0xd88] sm:$0xff]
                %283 = vst [vmem:[%s151 + $0x248] sm:$0xff] %v282
                %v284 = vld [vmem:[%s150 + $0xd90] sm:$0xff]
                %285 = vst [vmem:[%s151 + $0x250] sm:$0xff] %v284
                %v286 = vld [vmem:[%s150 + $0xd98] sm:$0xff]
                %287 = vst [vmem:[%s151 + $0x258] sm:$0xff] %v286
                %v288 = vld [vmem:[%s150 + $0xe58] sm:$0xff]
                %289 = vst [vmem:[%s151 + $0x264] sm:$0xff] %v288
                %v290 = vld [vmem:[%s150 + $0xe60] sm:$0xff]
                %291 = vst [vmem:[%s151 + $0x26c] sm:$0xff] %v290
                %v292 = vld [vmem:[%s150 + $0xe68] sm:$0xff]
                %293 = vst [vmem:[%s151 + $0x274] sm:$0xff] %v292
                %v294 = vld [vmem:[%s150 + $0xe70] sm:$0xff]
                %295 = vst [vmem:[%s151 + $0x27c] sm:$0xff] %v294
                %v296 = vld [vmem:[%s150 + $0xf30] sm:$0xff]
                %297 = vst [vmem:[%s151 + $0x288] sm:$0xff] %v296
                %v298 = vld [vmem:[%s150 + $0xf38] sm:$0xff]
                %299 = vst [vmem:[%s151 + $0x290] sm:$0xff] %v298
                %v300 = vld [vmem:[%s150 + $0xf40] sm:$0xff]
                %301 = vst [vmem:[%s151 + $0x298] sm:$0xff] %v300
                %v302 = vld [vmem:[%s150 + $0xf48] sm:$0xff]
                %303 = vst [vmem:[%s151 + $0x2a0] sm:$0xff] %v302
                %v304 = vld [vmem:[%s150 + $0x1008] sm:$0xff]
                %305 = vst [vmem:[%s151 + $0x2ac] sm:$0xff] %v304
                %v306 = vld [vmem:[%s150 + $0x1010] sm:$0xff]
                %307 = vst [vmem:[%s151 + $0x2b4] sm:$0xff] %v306
                %v308 = vld [vmem:[%s150 + $0x1018] sm:$0xff]
                %309 = vst [vmem:[%s151 + $0x2bc] sm:$0xff] %v308
                %v310 = vld [vmem:[%s150 + $0x1020] sm:$0xff]
                %311 = vst [vmem:[%s151 + $0x2c4] sm:$0xff] %v310
                %v312 = vld [vmem:[%s150 + $0x10e0] sm:$0xff]
                %313 = vst [vmem:[%s151 + $0x2d0] sm:$0xff] %v312
                %v314 = vld [vmem:[%s150 + $0x10e8] sm:$0xff]
                %315 = vst [vmem:[%s151 + $0x2d8] sm:$0xff] %v314
                %v316 = vld [vmem:[%s150 + $0x10f0] sm:$0xff]
                %317 = vst [vmem:[%s151 + $0x2e0] sm:$0xff] %v316
                %v318 = vld [vmem:[%s150 + $0x10f8] sm:$0xff]
                %319 = vst [vmem:[%s151 + $0x2e8] sm:$0xff] %v318
                %v320 = vld [vmem:[%s150 + $0x11b8] sm:$0xff]
                %321 = vst [vmem:[%s151 + $0x2f4] sm:$0xff] %v320
                %v322 = vld [vmem:[%s150 + $0x11c0] sm:$0xff]
                %323 = vst [vmem:[%s151 + $0x2fc] sm:$0xff] %v322
                %v324 = vld [vmem:[%s150 + $0x11c8] sm:$0xff]
                %325 = vst [vmem:[%s151 + $0x304] sm:$0xff] %v324
                %v326 = vld [vmem:[%s150 + $0x11d0] sm:$0xff]
                %327 = vst [vmem:[%s151 + $0x30c] sm:$0xff] %v326
                %v328 = vld [vmem:[%s150 + $0x1290] sm:$0xff]
                %329 = vst [vmem:[%s151 + $0x318] sm:$0xff] %v328
                %v330 = vld [vmem:[%s150 + $0x1298] sm:$0xff]
                %331 = vst [vmem:[%s151 + $0x320] sm:$0xff] %v330
                %v332 = vld [vmem:[%s150 + $0x12a0] sm:$0xff]
                %333 = vst [vmem:[%s151 + $0x328] sm:$0xff] %v332
                %v334 = vld [vmem:[%s150 + $0x12a8] sm:$0xff]
                %335 = vst [vmem:[%s151 + $0x330] sm:$0xff] %v334
                %v336 = vld [vmem:[%s150 + $0x1368] sm:$0xff]
                %337 = vst [vmem:[%s151 + $0x33c] sm:$0xff] %v336
                %v338 = vld [vmem:[%s150 + $0x1370] sm:$0xff]
                %339 = vst [vmem:[%s151 + $0x344] sm:$0xff] %v338
                %v340 = vld [vmem:[%s150 + $0x1378] sm:$0xff]
                %341 = vst [vmem:[%s151 + $0x34c] sm:$0xff] %v340
                %v342 = vld [vmem:[%s150 + $0x1380] sm:$0xff]
                %343 = vst [vmem:[%s151 + $0x354] sm:$0xff] %v342
                %v344 = vld [vmem:[%s150 + $0x1440] sm:$0xff]
                %345 = vst [vmem:[%s151 + $0x360] sm:$0xff] %v344
                %v346 = vld [vmem:[%s150 + $0x1448] sm:$0xff]
                %347 = vst [vmem:[%s151 + $0x368] sm:$0xff] %v346
                %v348 = vld [vmem:[%s150 + $0x1450] sm:$0xff]
                %349 = vst [vmem:[%s151 + $0x370] sm:$0xff] %v348
                %v350 = vld [vmem:[%s150 + $0x1458] sm:$0xff]
                %351 = vst [vmem:[%s151 + $0x378] sm:$0xff] %v350
                %v352 = vld [vmem:[%s150 + $0x1518] sm:$0xff]
                %353 = vst [vmem:[%s151 + $0x384] sm:$0xff] %v352
                %v354 = vld [vmem:[%s150 + $0x1520] sm:$0xff]
                %355 = vst [vmem:[%s151 + $0x38c] sm:$0xff] %v354
                %v356 = vld [vmem:[%s150 + $0x1528] sm:$0xff]
                %357 = vst [vmem:[%s151 + $0x394] sm:$0xff] %v356
                %v358 = vld [vmem:[%s150 + $0x1530] sm:$0xff]
                %359 = vst [vmem:[%s151 + $0x39c] sm:$0xff] %v358
                %v360 = vld [vmem:[%s150 + $0x15f0] sm:$0xff]
                %361 = vst [vmem:[%s151 + $0x3a8] sm:$0xff] %v360
                %v362 = vld [vmem:[%s150 + $0x15f8] sm:$0xff]
                %363 = vst [vmem:[%s151 + $0x3b0] sm:$0xff] %v362
                %v364 = vld [vmem:[%s150 + $0x1600] sm:$0xff]
                %365 = vst [vmem:[%s151 + $0x3b8] sm:$0xff] %v364
                %v366 = vld [vmem:[%s150 + $0x1608] sm:$0xff]
                %367 = vst [vmem:[%s151 + $0x3c0] sm:$0xff] %v366
              $region41: #{_lambda_.33} parent=35 // loop_footer
                %s149 = sadd.s32 1, %s145
              $region42: #{_lambda_.33} parent=35 // loop_footer_branch
                %144 = sbr.rel target = $region38
              $region43: #{_lambda_.33} parent=35 // loop_exit
                _
              %s369 = ssub.s32 16, 1
              loop: start=0, step=1, limit=1
              $region44: #{_lambda_.33} parent=35 // loop_pre_header
                _
              $region45: #{_lambda_.33} parent=35 // loop_header
                %s371 = sphi 0, %s375
                %p372 = scmp.ge.s32.totalorder %s371, 1
                %s376 = sphi %s142, %s142
                %s377 = sphi %s143, %s143
              $region46: #{_lambda_.33} parent=35 // loop_header_branch
                %374 = sbr.rel (%p372) target = $region50
              $region47: #{_lambda_.33} parent=35 // loop_body
                %v378 = vld [vmem:[%s376] sm:%s369]
                %379 = vst [vmem:[%s377] sm:%s369] %v378
                %v380 = vld [vmem:[%s376 + $0xd8] sm:%s369]
                %381 = vst [vmem:[%s377 + $0x24] sm:%s369] %v380
                %v382 = vld [vmem:[%s376 + $0x1b0] sm:%s369]
                %383 = vst [vmem:[%s377 + $0x48] sm:%s369] %v382
                %v384 = vld [vmem:[%s376 + $0x288] sm:%s369]
                %385 = vst [vmem:[%s377 + $0x6c] sm:%s369] %v384
                %v386 = vld [vmem:[%s376 + $0x360] sm:%s369]
                %387 = vst [vmem:[%s377 + $0x90] sm:%s369] %v386
                %v388 = vld [vmem:[%s376 + $0x438] sm:%s369]
                %389 = vst [vmem:[%s377 + $0xb4] sm:%s369] %v388
                %v390 = vld [vmem:[%s376 + $0x510] sm:%s369]
                %391 = vst [vmem:[%s377 + $0xd8] sm:%s369] %v390
                %v392 = vld [vmem:[%s376 + $0x5e8] sm:%s369]
                %393 = vst [vmem:[%s377 + $0xfc] sm:%s369] %v392
                %v394 = vld [vmem:[%s376 + $0x6c0] sm:%s369]
                %395 = vst [vmem:[%s377 + $0x120] sm:%s369] %v394
                %v396 = vld [vmem:[%s376 + $0x798] sm:%s369]
                %397 = vst [vmem:[%s377 + $0x144] sm:%s369] %v396
                %v398 = vld [vmem:[%s376 + $0x870] sm:%s369]
                %399 = vst [vmem:[%s377 + $0x168] sm:%s369] %v398
                %v400 = vld [vmem:[%s376 + $0x948] sm:%s369]
                %401 = vst [vmem:[%s377 + $0x18c] sm:%s369] %v400
                %v402 = vld [vmem:[%s376 + $0xa20] sm:%s369]
                %403 = vst [vmem:[%s377 + $0x1b0] sm:%s369] %v402
                %v404 = vld [vmem:[%s376 + $0xaf8] sm:%s369]
                %405 = vst [vmem:[%s377 + $0x1d4] sm:%s369] %v404
                %v406 = vld [vmem:[%s376 + $0xbd0] sm:%s369]
                %407 = vst [vmem:[%s377 + $0x1f8] sm:%s369] %v406
                %v408 = vld [vmem:[%s376 + $0xca8] sm:%s369]
                %409 = vst [vmem:[%s377 + $0x21c] sm:%s369] %v408
                %v410 = vld [vmem:[%s376 + $0xd80] sm:%s369]
                %411 = vst [vmem:[%s377 + $0x240] sm:%s369] %v410
                %v412 = vld [vmem:[%s376 + $0xe58] sm:%s369]
                %413 = vst [vmem:[%s377 + $0x264] sm:%s369] %v412
                %v414 = vld [vmem:[%s376 + $0xf30] sm:%s369]
                %415 = vst [vmem:[%s377 + $0x288] sm:%s369] %v414
                %v416 = vld [vmem:[%s376 + $0x1008] sm:%s369]
                %417 = vst [vmem:[%s377 + $0x2ac] sm:%s369] %v416
                %v418 = vld [vmem:[%s376 + $0x10e0] sm:%s369]
                %419 = vst [vmem:[%s377 + $0x2d0] sm:%s369] %v418
                %v420 = vld [vmem:[%s376 + $0x11b8] sm:%s369]
                %421 = vst [vmem:[%s377 + $0x2f4] sm:%s369] %v420
                %v422 = vld [vmem:[%s376 + $0x1290] sm:%s369]
                %423 = vst [vmem:[%s377 + $0x318] sm:%s369] %v422
                %v424 = vld [vmem:[%s376 + $0x1368] sm:%s369]
                %425 = vst [vmem:[%s377 + $0x33c] sm:%s369] %v424
                %v426 = vld [vmem:[%s376 + $0x1440] sm:%s369]
                %427 = vst [vmem:[%s377 + $0x360] sm:%s369] %v426
                %v428 = vld [vmem:[%s376 + $0x1518] sm:%s369]
                %429 = vst [vmem:[%s377 + $0x384] sm:%s369] %v428
                %v430 = vld [vmem:[%s376 + $0x15f0] sm:%s369]
                %431 = vst [vmem:[%s377 + $0x3a8] sm:%s369] %v430
              $region48: #{_lambda_.33} parent=35 // loop_footer
                %s375 = sadd.s32 1, %s371
              $region49: #{_lambda_.33} parent=35 // loop_footer_branch
                %370 = sbr.rel target = $region45
              $region50: #{_lambda_.33} parent=35 // loop_exit
                _
            $region36: #{_lambda_.33} parent=31 // pred_fallthru
              _
          $region32: #{_lambda_.33} parent=27 // pred_fallthru
            _
          %432 = vnop
        $region28: #{_lambda_.33} parent=23 // pred_fallthru
          _
      $region24: #{_lambda_.33} parent=5 // pred_fallthru
        _
      %p433 = scmp.le.s32.totalorder 1, %s9
      %p434 = scmp.lt.s32.totalorder %s9, 7
      %p435 = pnand %p433, %p434
      %p436 = pneg %p435
      // Predicated region
      $region51: #{_lambda_.33} parent=5 // pred_check
        _
      $region52: #{_lambda_.33} parent=5 // pred_check_branch
        %438 = sbr.rel (%p435) target = $region54
      $region53: #{_lambda_.33} parent=5 // pred_region
        %s439 = ssub.s32 %s9, 1
        %s440 = sand.u32 %s43, 1
        %s441 = sand.u32 %s43, 1
        %s442 = smul.addr %s441, 972
        %s443 = scalar_lea.vmem [#allocation2], %s442
        // Predicated region
        $region55: #{_lambda_.33} parent=53 // pred_check
          %p444 = pneg %p56
        $region56: #{_lambda_.33} parent=53 // pred_check_branch
          %446 = sbr.rel (%p444) target = $region58
        $region57: #{_lambda_.33} parent=53 // pred_region
          _
        $region58: #{_lambda_.33} parent=53 // pred_fallthru
          _
        %p447 = pneg %p30
        %p448 = pneg %p27
        %s449 = sand.u32 %s43, 1
        %s450 = sand.u32 %s43, 1
        %s451 = smul.addr %s450, 972
        %s452 = scalar_lea.vmem [#allocation2], %s451
        %p453 = pneg %p56
        %p454 = pneg %p53
        %p455 = pneg %p77
        %p456 = pneg %p74
        %p457 = pneg %p103
        %p458 = pneg %p100
        %s459 = smul.u32 9, %s14
        %p460 = scmp.lt.s32.totalorder %s459, 53
        %s461 = scalar_select %p460, %s459, 53
        %s462 = smul.addr %s461, 4
        %s463 = scalar_lea.vmem %s3, %s462
        %s464 = smul.u32 9, %s14
        %s465 = smul.u32 9, %s14
        %p466 = scmp.lt.s32.totalorder %s465, 53
        %s467 = scalar_select %p466, %s465, 53
        %s468 = smul.addr %s467, 4
        %s469 = scalar_lea.vmem %s3, %s468
        %s470 = smul.u32 9, %s14
        %v472 = vld [vmem:[%s0] sm:$0xf]
        %v473 = vld [vmem:[%s443] sm:$0xff]
        %v474 = vld [vmem:[%s443 + $0x8] sm:$0xff]
        %v475 = vld [vmem:[%s443 + $0x10] sm:$0xff]
        %v476 = vld [vmem:[%s443 + $0x18] sm:$0xff]
        %v477 = vld [vmem:[%s443 + $0x20] sm:$0xf]
        %v478 = vld [vmem:[%s443 + $0x24] sm:$0xff]
        %v479 = vld [vmem:[%s443 + $0x2c] sm:$0xff]
        %v480 = vld [vmem:[%s443 + $0x34] sm:$0xff]
        %v481 = vld [vmem:[%s443 + $0x3c] sm:$0xff]
        %v482 = vld [vmem:[%s443 + $0x44] sm:$0xf]
        %v483 = vld [vmem:[%s443 + $0x48] sm:$0xff]
        %v484 = vld [vmem:[%s443 + $0x50] sm:$0xff]
        %v485 = vld [vmem:[%s443 + $0x58] sm:$0xff]
        %v486 = vld [vmem:[%s443 + $0x60] sm:$0xff]
        %v487 = vld [vmem:[%s443 + $0x68] sm:$0xf]
        %v488 = vld [vmem:[%s443 + $0x6c] sm:$0xff]
        %v489 = vld [vmem:[%s443 + $0x74] sm:$0xff]
        %v490 = vld [vmem:[%s443 + $0x7c] sm:$0xff]
        %v491 = vld [vmem:[%s443 + $0x84] sm:$0xff]
        %v492 = vld [vmem:[%s443 + $0x8c] sm:$0xf]
        %v493 = vld [vmem:[%s443 + $0x90] sm:$0xff]
        %v494 = vld [vmem:[%s443 + $0x98] sm:$0xff]
        %v495 = vld [vmem:[%s443 + $0xa0] sm:$0xff]
        %v496 = vld [vmem:[%s443 + $0xa8] sm:$0xff]
        %v497 = vld [vmem:[%s443 + $0xb0] sm:$0xf]
        %v498 = vld [vmem:[%s443 + $0xb4] sm:$0xff]
        %v499 = vld [vmem:[%s443 + $0xbc] sm:$0xff]
        %v500 = vld [vmem:[%s443 + $0xc4] sm:$0xff]
        %v501 = vld [vmem:[%s443 + $0xcc] sm:$0xff]
        %v502 = vld [vmem:[%s443 + $0xd4] sm:$0xf]
        %v503 = vld [vmem:[%s443 + $0xd8] sm:$0xff]
        %v504 = vld [vmem:[%s443 + $0xe0] sm:$0xff]
        %v505 = vld [vmem:[%s443 + $0xe8] sm:$0xff]
        %v506 = vld [vmem:[%s443 + $0xf0] sm:$0xff]
        %v507 = vld [vmem:[%s443 + $0xf8] sm:$0xf]
        %v508 = vld [vmem:[%s443 + $0xfc] sm:$0xff]
        %v509 = vld [vmem:[%s443 + $0x104] sm:$0xff]
        %v510 = vld [vmem:[%s443 + $0x10c] sm:$0xff]
        %v511 = vld [vmem:[%s443 + $0x114] sm:$0xff]
        %v512 = vld [vmem:[%s443 + $0x11c] sm:$0xf]
        %v513 = vld [vmem:[%s443 + $0x120] sm:$0xff]
        %v514 = vld [vmem:[%s443 + $0x128] sm:$0xff]
        %v515 = vld [vmem:[%s443 + $0x130] sm:$0xff]
        %v516 = vld [vmem:[%s443 + $0x138] sm:$0xff]
        %v517 = vld [vmem:[%s443 + $0x140] sm:$0xf]
        %v518 = vld [vmem:[%s443 + $0x144] sm:$0xff]
        %v519 = vld [vmem:[%s443 + $0x14c] sm:$0xff]
        %v520 = vld [vmem:[%s443 + $0x154] sm:$0xff]
        %v521 = vld [vmem:[%s443 + $0x15c] sm:$0xff]
        %v522 = vld [vmem:[%s443 + $0x164] sm:$0xf]
        %v523 = vld [vmem:[%s443 + $0x168] sm:$0xff]
        %v524 = vld [vmem:[%s443 + $0x170] sm:$0xff]
        %v525 = vld [vmem:[%s443 + $0x178] sm:$0xff]
        %v526 = vld [vmem:[%s443 + $0x180] sm:$0xff]
        %v527 = vld [vmem:[%s443 + $0x188] sm:$0xf]
        %v528 = vld [vmem:[%s443 + $0x18c] sm:$0xff]
        %v529 = vld [vmem:[%s443 + $0x194] sm:$0xff]
        %v530 = vld [vmem:[%s443 + $0x19c] sm:$0xff]
        %v531 = vld [vmem:[%s443 + $0x1a4] sm:$0xff]
        %v532 = vld [vmem:[%s443 + $0x1ac] sm:$0xf]
        %v533 = vld [vmem:[%s443 + $0x1b0] sm:$0xff]
        %v534 = vld [vmem:[%s443 + $0x1b8] sm:$0xff]
        %v535 = vld [vmem:[%s443 + $0x1c0] sm:$0xff]
        %v536 = vld [vmem:[%s443 + $0x1c8] sm:$0xff]
        %v537 = vld [vmem:[%s443 + $0x1d0] sm:$0xf]
        %v538 = vld [vmem:[%s443 + $0x1d4] sm:$0xff]
        %v539 = vld [vmem:[%s443 + $0x1dc] sm:$0xff]
        %v540 = vld [vmem:[%s443 + $0x1e4] sm:$0xff]
        %v541 = vld [vmem:[%s443 + $0x1ec] sm:$0xff]
        %v542 = vld [vmem:[%s443 + $0x1f4] sm:$0xf]
        %v543 = vld [vmem:[%s443 + $0x1f8] sm:$0xff]
        %v544 = vld [vmem:[%s443 + $0x200] sm:$0xff]
        %v545 = vld [vmem:[%s443 + $0x208] sm:$0xff]
        %v546 = vld [vmem:[%s443 + $0x210] sm:$0xff]
        %v547 = vld [vmem:[%s443 + $0x218] sm:$0xf]
        %v548 = vld [vmem:[%s443 + $0x21c] sm:$0xff]
        %v549 = vld [vmem:[%s443 + $0x224] sm:$0xff]
        %v550 = vld [vmem:[%s443 + $0x22c] sm:$0xff]
        %v551 = vld [vmem:[%s443 + $0x234] sm:$0xff]
        %v552 = vld [vmem:[%s443 + $0x23c] sm:$0xf]
        %v553 = vld [vmem:[%s443 + $0x240] sm:$0xff]
        %v554 = vld [vmem:[%s443 + $0x248] sm:$0xff]
        %v555 = vld [vmem:[%s443 + $0x250] sm:$0xff]
        %v556 = vld [vmem:[%s443 + $0x258] sm:$0xff]
        %v557 = vld [vmem:[%s443 + $0x260] sm:$0xf]
        %v558 = vld [vmem:[%s443 + $0x264] sm:$0xff]
        %v559 = vld [vmem:[%s443 + $0x26c] sm:$0xff]
        %v560 = vld [vmem:[%s443 + $0x274] sm:$0xff]
        %v561 = vld [vmem:[%s443 + $0x27c] sm:$0xff]
        %v562 = vld [vmem:[%s443 + $0x284] sm:$0xf]
        %v563 = vld [vmem:[%s443 + $0x288] sm:$0xff]
        %v564 = vld [vmem:[%s443 + $0x290] sm:$0xff]
        %v565 = vld [vmem:[%s443 + $0x298] sm:$0xff]
        %v566 = vld [vmem:[%s443 + $0x2a0] sm:$0xff]
        %v567 = vld [vmem:[%s443 + $0x2a8] sm:$0xf]
        %v568 = vld [vmem:[%s443 + $0x2ac] sm:$0xff]
        %v569 = vld [vmem:[%s443 + $0x2b4] sm:$0xff]
        %v570 = vld [vmem:[%s443 + $0x2bc] sm:$0xff]
        %v571 = vld [vmem:[%s443 + $0x2c4] sm:$0xff]
        %v572 = vld [vmem:[%s443 + $0x2cc] sm:$0xf]
        %v573 = vld [vmem:[%s443 + $0x2d0] sm:$0xff]
        %v574 = vld [vmem:[%s443 + $0x2d8] sm:$0xff]
        %v575 = vld [vmem:[%s443 + $0x2e0] sm:$0xff]
        %v576 = vld [vmem:[%s443 + $0x2e8] sm:$0xff]
        %v577 = vld [vmem:[%s443 + $0x2f0] sm:$0xf]
        %v578 = vld [vmem:[%s443 + $0x2f4] sm:$0xff]
        %v579 = vld [vmem:[%s443 + $0x2fc] sm:$0xff]
        %v580 = vld [vmem:[%s443 + $0x304] sm:$0xff]
        %v581 = vld [vmem:[%s443 + $0x30c] sm:$0xff]
        %v582 = vld [vmem:[%s443 + $0x314] sm:$0xf]
        %v583 = vld [vmem:[%s443 + $0x318] sm:$0xff]
        %v584 = vld [vmem:[%s443 + $0x320] sm:$0xff]
        %v585 = vld [vmem:[%s443 + $0x328] sm:$0xff]
        %v586 = vld [vmem:[%s443 + $0x330] sm:$0xff]
        %v587 = vld [vmem:[%s443 + $0x338] sm:$0xf]
        %v588 = vld [vmem:[%s443 + $0x33c] sm:$0xff]
        %v589 = vld [vmem:[%s443 + $0x344] sm:$0xff]
        %v590 = vld [vmem:[%s443 + $0x34c] sm:$0xff]
        %v591 = vld [vmem:[%s443 + $0x354] sm:$0xff]
        %v592 = vld [vmem:[%s443 + $0x35c] sm:$0xf]
        %v593 = vld [vmem:[%s443 + $0x360] sm:$0xff]
        %v594 = vld [vmem:[%s443 + $0x368] sm:$0xff]
        %v595 = vld [vmem:[%s443 + $0x370] sm:$0xff]
        %v596 = vld [vmem:[%s443 + $0x378] sm:$0xff]
        %v597 = vld [vmem:[%s443 + $0x380] sm:$0xf]
        %v598 = vld [vmem:[%s443 + $0x384] sm:$0xff]
        %v599 = vld [vmem:[%s443 + $0x38c] sm:$0xff]
        %v600 = vld [vmem:[%s443 + $0x394] sm:$0xff]
        %v601 = vld [vmem:[%s443 + $0x39c] sm:$0xff]
        %v602 = vld [vmem:[%s443 + $0x3a4] sm:$0xf]
        %v603 = vld [vmem:[%s443 + $0x3a8] sm:$0xff]
        %v604 = vld [vmem:[%s443 + $0x3b0] sm:$0xff]
        %v605 = vld [vmem:[%s443 + $0x3b8] sm:$0xff]
        %v606 = vld [vmem:[%s443 + $0x3c0] sm:$0xff]
        %v607 = vld [vmem:[%s443 + $0x3c8] sm:$0xf]
        %v608 = vld [vmem:[%s2] sm:$0xf]
        %610 = vset.pattern.permute.xlu0 0
        %611 = vperm.xlu0 %610, %v608
        %v612 = vpop.permute.xlu0 %611
        %615 = vst [vmem:[#allocation1] ss:$4 sm:$0xff] %v472
        %v616 = vld.sshfl [vmem:[#allocation1] sm:$0xff pattern:$0x73625140]
        %v617 = vld.sshfl [vmem:[#allocation1 + $0x8] sm:$0xff pattern:$0x73625140]
        %v754 = vunpack.c.l.b16 %v473
        %v755 = vunpack.c.h.b16 %v473
        %v756 = vunpack.c.l.b16 %v474
        %v757 = vunpack.c.h.b16 %v474
        %v758 = vunpack.c.l.b16 %v475
        %v759 = vunpack.c.h.b16 %v475
        %v760 = vunpack.c.l.b16 %v476
        %v761 = vunpack.c.h.b16 %v476
        %v762 = vunpack.c.l.b16 %v477
        %v763 = vunpack.c.l.b16 %v478
        %v764 = vunpack.c.h.b16 %v478
        %v765 = vunpack.c.l.b16 %v479
        %v766 = vunpack.c.h.b16 %v479
        %v767 = vunpack.c.l.b16 %v480
        %v768 = vunpack.c.h.b16 %v480
        %v769 = vunpack.c.l.b16 %v481
        %v770 = vunpack.c.h.b16 %v481
        %v771 = vunpack.c.l.b16 %v482
        %v772 = vunpack.c.l.b16 %v483
        %v773 = vunpack.c.h.b16 %v483
        %v774 = vunpack.c.l.b16 %v484
        %v775 = vunpack.c.h.b16 %v484
        %v776 = vunpack.c.l.b16 %v485
        %v777 = vunpack.c.h.b16 %v485
        %v778 = vunpack.c.l.b16 %v486
        %v779 = vunpack.c.h.b16 %v486
        %v780 = vunpack.c.l.b16 %v487
        %v781 = vunpack.c.l.b16 %v488
        %v782 = vunpack.c.h.b16 %v488
        %v783 = vunpack.c.l.b16 %v489
        %v784 = vunpack.c.h.b16 %v489
        %v785 = vunpack.c.l.b16 %v490
        %v786 = vunpack.c.h.b16 %v490
        %v787 = vunpack.c.l.b16 %v491
        %v788 = vunpack.c.h.b16 %v491
        %v789 = vunpack.c.l.b16 %v492
        %v790 = vunpack.c.l.b16 %v493
        %v791 = vunpack.c.h.b16 %v493
        %v792 = vunpack.c.l.b16 %v494
        %v793 = vunpack.c.h.b16 %v494
        %v794 = vunpack.c.l.b16 %v495
        %v795 = vunpack.c.h.b16 %v495
        %v796 = vunpack.c.l.b16 %v496
        %v797 = vunpack.c.h.b16 %v496
        %v798 = vunpack.c.l.b16 %v497
        %v799 = vunpack.c.l.b16 %v498
        %v800 = vunpack.c.h.b16 %v498
        %v801 = vunpack.c.l.b16 %v499
        %v802 = vunpack.c.h.b16 %v499
        %v803 = vunpack.c.l.b16 %v500
        %v804 = vunpack.c.h.b16 %v500
        %v805 = vunpack.c.l.b16 %v501
        %v806 = vunpack.c.h.b16 %v501
        %v807 = vunpack.c.l.b16 %v502
        %v808 = vunpack.c.l.b16 %v503
        %v809 = vunpack.c.h.b16 %v503
        %v810 = vunpack.c.l.b16 %v504
        %v811 = vunpack.c.h.b16 %v504
        %v812 = vunpack.c.l.b16 %v505
        %v813 = vunpack.c.h.b16 %v505
        %v814 = vunpack.c.l.b16 %v506
        %v815 = vunpack.c.h.b16 %v506
        %v816 = vunpack.c.l.b16 %v507
        %v817 = vunpack.c.l.b16 %v508
        %v818 = vunpack.c.h.b16 %v508
        %v819 = vunpack.c.l.b16 %v509
        %v820 = vunpack.c.h.b16 %v509
        %v821 = vunpack.c.l.b16 %v510
        %v822 = vunpack.c.h.b16 %v510
        %v823 = vunpack.c.l.b16 %v511
        %v824 = vunpack.c.h.b16 %v511
        %v825 = vunpack.c.l.b16 %v512
        %v826 = vunpack.c.l.b16 %v513
        %v827 = vunpack.c.h.b16 %v513
        %v828 = vunpack.c.l.b16 %v514
        %v829 = vunpack.c.h.b16 %v514
        %v830 = vunpack.c.l.b16 %v515
        %v831 = vunpack.c.h.b16 %v515
        %v832 = vunpack.c.l.b16 %v516
        %v833 = vunpack.c.h.b16 %v516
        %v834 = vunpack.c.l.b16 %v517
        %v835 = vunpack.c.l.b16 %v518
        %v836 = vunpack.c.h.b16 %v518
        %v837 = vunpack.c.l.b16 %v519
        %v838 = vunpack.c.h.b16 %v519
        %v839 = vunpack.c.l.b16 %v520
        %v840 = vunpack.c.h.b16 %v520
        %v841 = vunpack.c.l.b16 %v521
        %v842 = vunpack.c.h.b16 %v521
        %v843 = vunpack.c.l.b16 %v522
        %v844 = vunpack.c.l.b16 %v523
        %v845 = vunpack.c.h.b16 %v523
        %v846 = vunpack.c.l.b16 %v524
        %v847 = vunpack.c.h.b16 %v524
        %v848 = vunpack.c.l.b16 %v525
        %v849 = vunpack.c.h.b16 %v525
        %v850 = vunpack.c.l.b16 %v526
        %v851 = vunpack.c.h.b16 %v526
        %v852 = vunpack.c.l.b16 %v527
        %v853 = vunpack.c.l.b16 %v528
        %v854 = vunpack.c.h.b16 %v528
        %v855 = vunpack.c.l.b16 %v529
        %v856 = vunpack.c.h.b16 %v529
        %v857 = vunpack.c.l.b16 %v530
        %v858 = vunpack.c.h.b16 %v530
        %v859 = vunpack.c.l.b16 %v531
        %v860 = vunpack.c.h.b16 %v531
        %v861 = vunpack.c.l.b16 %v532
        %v862 = vunpack.c.l.b16 %v533
        %v863 = vunpack.c.h.b16 %v533
        %v864 = vunpack.c.l.b16 %v534
        %v865 = vunpack.c.h.b16 %v534
        %v866 = vunpack.c.l.b16 %v535
        %v867 = vunpack.c.h.b16 %v535
        %v868 = vunpack.c.l.b16 %v536
        %v869 = vunpack.c.h.b16 %v536
        %v870 = vunpack.c.l.b16 %v537
        %v871 = vunpack.c.l.b16 %v538
        %v872 = vunpack.c.h.b16 %v538
        %v873 = vunpack.c.l.b16 %v539
        %v874 = vunpack.c.h.b16 %v539
        %v875 = vunpack.c.l.b16 %v540
        %v876 = vunpack.c.h.b16 %v540
        %v877 = vunpack.c.l.b16 %v541
        %v878 = vunpack.c.h.b16 %v541
        %v879 = vunpack.c.l.b16 %v542
        %v880 = vunpack.c.l.b16 %v543
        %v881 = vunpack.c.h.b16 %v543
        %v882 = vunpack.c.l.b16 %v544
        %v883 = vunpack.c.h.b16 %v544
        %v884 = vunpack.c.l.b16 %v545
        %v885 = vunpack.c.h.b16 %v545
        %v886 = vunpack.c.l.b16 %v546
        %v887 = vunpack.c.h.b16 %v546
        %v888 = vunpack.c.l.b16 %v547
        %v889 = vunpack.c.l.b16 %v548
        %v890 = vunpack.c.h.b16 %v548
        %v891 = vunpack.c.l.b16 %v549
        %v892 = vunpack.c.h.b16 %v549
        %v893 = vunpack.c.l.b16 %v550
        %v894 = vunpack.c.h.b16 %v550
        %v895 = vunpack.c.l.b16 %v551
        %v896 = vunpack.c.h.b16 %v551
        %v897 = vunpack.c.l.b16 %v552
        %v898 = vunpack.c.l.b16 %v553
        %v899 = vunpack.c.h.b16 %v553
        %v900 = vunpack.c.l.b16 %v554
        %v901 = vunpack.c.h.b16 %v554
        %v902 = vunpack.c.l.b16 %v555
        %v903 = vunpack.c.h.b16 %v555
        %v904 = vunpack.c.l.b16 %v556
        %v905 = vunpack.c.h.b16 %v556
        %v906 = vunpack.c.l.b16 %v557
        %v907 = vunpack.c.l.b16 %v558
        %v908 = vunpack.c.h.b16 %v558
        %v909 = vunpack.c.l.b16 %v559
        %v910 = vunpack.c.h.b16 %v559
        %v911 = vunpack.c.l.b16 %v560
        %v912 = vunpack.c.h.b16 %v560
        %v913 = vunpack.c.l.b16 %v561
        %v914 = vunpack.c.h.b16 %v561
        %v915 = vunpack.c.l.b16 %v562
        %v916 = vunpack.c.l.b16 %v563
        %v917 = vunpack.c.h.b16 %v563
        %v918 = vunpack.c.l.b16 %v564
        %v919 = vunpack.c.h.b16 %v564
        %v920 = vunpack.c.l.b16 %v565
        %v921 = vunpack.c.h.b16 %v565
        %v922 = vunpack.c.l.b16 %v566
        %v923 = vunpack.c.h.b16 %v566
        %v924 = vunpack.c.l.b16 %v567
        %v925 = vunpack.c.l.b16 %v568
        %v926 = vunpack.c.h.b16 %v568
        %v927 = vunpack.c.l.b16 %v569
        %v928 = vunpack.c.h.b16 %v569
        %v929 = vunpack.c.l.b16 %v570
        %v930 = vunpack.c.h.b16 %v570
        %v931 = vunpack.c.l.b16 %v571
        %v932 = vunpack.c.h.b16 %v571
        %v933 = vunpack.c.l.b16 %v572
        %v934 = vunpack.c.l.b16 %v573
        %v935 = vunpack.c.h.b16 %v573
        %v936 = vunpack.c.l.b16 %v574
        %v937 = vunpack.c.h.b16 %v574
        %v938 = vunpack.c.l.b16 %v575
        %v939 = vunpack.c.h.b16 %v575
        %v940 = vunpack.c.l.b16 %v576
        %v941 = vunpack.c.h.b16 %v576
        %v942 = vunpack.c.l.b16 %v577
        %v943 = vunpack.c.l.b16 %v578
        %v944 = vunpack.c.h.b16 %v578
        %v945 = vunpack.c.l.b16 %v579
        %v946 = vunpack.c.h.b16 %v579
        %v947 = vunpack.c.l.b16 %v580
        %v948 = vunpack.c.h.b16 %v580
        %v949 = vunpack.c.l.b16 %v581
        %v950 = vunpack.c.h.b16 %v581
        %v951 = vunpack.c.l.b16 %v582
        %v952 = vunpack.c.l.b16 %v583
        %v953 = vunpack.c.h.b16 %v583
        %v954 = vunpack.c.l.b16 %v584
        %v955 = vunpack.c.h.b16 %v584
        %v956 = vunpack.c.l.b16 %v585
        %v957 = vunpack.c.h.b16 %v585
        %v958 = vunpack.c.l.b16 %v586
        %v959 = vunpack.c.h.b16 %v586
        %v960 = vunpack.c.l.b16 %v587
        %v961 = vunpack.c.l.b16 %v588
        %v962 = vunpack.c.h.b16 %v588
        %v963 = vunpack.c.l.b16 %v589
        %v964 = vunpack.c.h.b16 %v589
        %v965 = vunpack.c.l.b16 %v590
        %v966 = vunpack.c.h.b16 %v590
        %v967 = vunpack.c.l.b16 %v591
        %v968 = vunpack.c.h.b16 %v591
        %v969 = vunpack.c.l.b16 %v592
        %v970 = vunpack.c.l.b16 %v593
        %v971 = vunpack.c.h.b16 %v593
        %v972 = vunpack.c.l.b16 %v594
        %v973 = vunpack.c.h.b16 %v594
        %v974 = vunpack.c.l.b16 %v595
        %v975 = vunpack.c.h.b16 %v595
        %v976 = vunpack.c.l.b16 %v596
        %v977 = vunpack.c.h.b16 %v596
        %v978 = vunpack.c.l.b16 %v597
        %v979 = vunpack.c.l.b16 %v598
        %v980 = vunpack.c.h.b16 %v598
        %v981 = vunpack.c.l.b16 %v599
        %v982 = vunpack.c.h.b16 %v599
        %v983 = vunpack.c.l.b16 %v600
        %v984 = vunpack.c.h.b16 %v600
        %v985 = vunpack.c.l.b16 %v601
        %v986 = vunpack.c.h.b16 %v601
        %v987 = vunpack.c.l.b16 %v602
        %v988 = vunpack.c.l.b16 %v603
        %v989 = vunpack.c.h.b16 %v603
        %v990 = vunpack.c.l.b16 %v604
        %v991 = vunpack.c.h.b16 %v604
        %v992 = vunpack.c.l.b16 %v605
        %v993 = vunpack.c.h.b16 %v605
        %v994 = vunpack.c.l.b16 %v606
        %v995 = vunpack.c.h.b16 %v606
        %v996 = vunpack.c.l.b16 %v607
        %v997 = vpack.c.b16 %v763, %v754
        %v998 = vpack.c.b16 %v764, %v755
        %v999 = vpack.c.b16 %v765, %v756
        %v1000 = vpack.c.b16 %v766, %v757
        %v1001 = vpack.c.b16 %v767, %v758
        %v1002 = vpack.c.b16 %v768, %v759
        %v1003 = vpack.c.b16 %v769, %v760
        %v1004 = vpack.c.b16 %v770, %v761
        %v1005 = vpack.c.b16 %v771, %v762
        %v1006 = vpack.c.b16 %v781, %v772
        %v1007 = vpack.c.b16 %v782, %v773
        %v1008 = vpack.c.b16 %v783, %v774
        %v1009 = vpack.c.b16 %v784, %v775
        %v1010 = vpack.c.b16 %v785, %v776
        %v1011 = vpack.c.b16 %v786, %v777
        %v1012 = vpack.c.b16 %v787, %v778
        %v1013 = vpack.c.b16 %v788, %v779
        %v1014 = vpack.c.b16 %v789, %v780
        %v1015 = vpack.c.b16 %v799, %v790
        %v1016 = vpack.c.b16 %v800, %v791
        %v1017 = vpack.c.b16 %v801, %v792
        %v1018 = vpack.c.b16 %v802, %v793
        %v1019 = vpack.c.b16 %v803, %v794
        %v1020 = vpack.c.b16 %v804, %v795
        %v1021 = vpack.c.b16 %v805, %v796
        %v1022 = vpack.c.b16 %v806, %v797
        %v1023 = vpack.c.b16 %v807, %v798
        %v1024 = vpack.c.b16 %v817, %v808
        %v1025 = vpack.c.b16 %v818, %v809
        %v1026 = vpack.c.b16 %v819, %v810
        %v1027 = vpack.c.b16 %v820, %v811
        %v1028 = vpack.c.b16 %v821, %v812
        %v1029 = vpack.c.b16 %v822, %v813
        %v1030 = vpack.c.b16 %v823, %v814
        %v1031 = vpack.c.b16 %v824, %v815
        %v1032 = vpack.c.b16 %v825, %v816
        %v1033 = vpack.c.b16 %v835, %v826
        %v1034 = vpack.c.b16 %v836, %v827
        %v1035 = vpack.c.b16 %v837, %v828
        %v1036 = vpack.c.b16 %v838, %v829
        %v1037 = vpack.c.b16 %v839, %v830
        %v1038 = vpack.c.b16 %v840, %v831
        %v1039 = vpack.c.b16 %v841, %v832
        %v1040 = vpack.c.b16 %v842, %v833
        %v1041 = vpack.c.b16 %v843, %v834
        %v1042 = vpack.c.b16 %v853, %v844
        %v1043 = vpack.c.b16 %v854, %v845
        %v1044 = vpack.c.b16 %v855, %v846
        %v1045 = vpack.c.b16 %v856, %v847
        %v1046 = vpack.c.b16 %v857, %v848
        %v1047 = vpack.c.b16 %v858, %v849
        %v1048 = vpack.c.b16 %v859, %v850
        %v1049 = vpack.c.b16 %v860, %v851
        %v1050 = vpack.c.b16 %v861, %v852
        %v1051 = vpack.c.b16 %v871, %v862
        %v1052 = vpack.c.b16 %v872, %v863
        %v1053 = vpack.c.b16 %v873, %v864
        %v1054 = vpack.c.b16 %v874, %v865
        %v1055 = vpack.c.b16 %v875, %v866
        %v1056 = vpack.c.b16 %v876, %v867
        %v1057 = vpack.c.b16 %v877, %v868
        %v1058 = vpack.c.b16 %v878, %v869
        %v1059 = vpack.c.b16 %v879, %v870
        %v1060 = vpack.c.b16 %v889, %v880
        %v1061 = vpack.c.b16 %v890, %v881
        %v1062 = vpack.c.b16 %v891, %v882
        %v1063 = vpack.c.b16 %v892, %v883
        %v1064 = vpack.c.b16 %v893, %v884
        %v1065 = vpack.c.b16 %v894, %v885
        %v1066 = vpack.c.b16 %v895, %v886
        %v1067 = vpack.c.b16 %v896, %v887
        %v1068 = vpack.c.b16 %v897, %v888
        %v1069 = vpack.c.b16 %v907, %v898
        %v1070 = vpack.c.b16 %v908, %v899
        %v1071 = vpack.c.b16 %v909, %v900
        %v1072 = vpack.c.b16 %v910, %v901
        %v1073 = vpack.c.b16 %v911, %v902
        %v1074 = vpack.c.b16 %v912, %v903
        %v1075 = vpack.c.b16 %v913, %v904
        %v1076 = vpack.c.b16 %v914, %v905
        %v1077 = vpack.c.b16 %v915, %v906
        %v1078 = vpack.c.b16 %v925, %v916
        %v1079 = vpack.c.b16 %v926, %v917
        %v1080 = vpack.c.b16 %v927, %v918
        %v1081 = vpack.c.b16 %v928, %v919
        %v1082 = vpack.c.b16 %v929, %v920
        %v1083 = vpack.c.b16 %v930, %v921
        %v1084 = vpack.c.b16 %v931, %v922
        %v1085 = vpack.c.b16 %v932, %v923
        %v1086 = vpack.c.b16 %v933, %v924
        %v1087 = vpack.c.b16 %v943, %v934
        %v1088 = vpack.c.b16 %v944, %v935
        %v1089 = vpack.c.b16 %v945, %v936
        %v1090 = vpack.c.b16 %v946, %v937
        %v1091 = vpack.c.b16 %v947, %v938
        %v1092 = vpack.c.b16 %v948, %v939
        %v1093 = vpack.c.b16 %v949, %v940
        %v1094 = vpack.c.b16 %v950, %v941
        %v1095 = vpack.c.b16 %v951, %v942
        %v1096 = vpack.c.b16 %v961, %v952
        %v1097 = vpack.c.b16 %v962, %v953
        %v1098 = vpack.c.b16 %v963, %v954
        %v1099 = vpack.c.b16 %v964, %v955
        %v1100 = vpack.c.b16 %v965, %v956
        %v1101 = vpack.c.b16 %v966, %v957
        %v1102 = vpack.c.b16 %v967, %v958
        %v1103 = vpack.c.b16 %v968, %v959
        %v1104 = vpack.c.b16 %v969, %v960
        %v1105 = vpack.c.b16 %v979, %v970
        %v1106 = vpack.c.b16 %v980, %v971
        %v1107 = vpack.c.b16 %v981, %v972
        %v1108 = vpack.c.b16 %v982, %v973
        %v1109 = vpack.c.b16 %v983, %v974
        %v1110 = vpack.c.b16 %v984, %v975
        %v1111 = vpack.c.b16 %v985, %v976
        %v1112 = vpack.c.b16 %v986, %v977
        %v1113 = vpack.c.b16 %v987, %v978
        %v1114 = vpack.c.b16 %v988, %v988
        %v1115 = vpack.c.b16 %v989, %v989
        %v1116 = vpack.c.b16 %v990, %v990
        %v1117 = vpack.c.b16 %v991, %v991
        %v1118 = vpack.c.b16 %v992, %v992
        %v1119 = vpack.c.b16 %v993, %v993
        %v1120 = vpack.c.b16 %v994, %v994
        %v1121 = vpack.c.b16 %v995, %v995
        %v1122 = vpack.c.b16 %v996, %v996
        %vm1240 = vcmask 719872
        %v1241 = vsel %vm1240, %v617, 0
        %vm1243 = vcmask 1043456
        %v1245 = vsel %vm1243, %v1114, 0
        %v1248 = vsel %vm1243, %v1115, 0
        %v1251 = vsel %vm1243, %v1116, 0
        %v1254 = vsel %vm1243, %v1117, 0
        %v1257 = vsel %vm1243, %v1118, 0
        %v1260 = vsel %vm1243, %v1119, 0
        %v1263 = vsel %vm1243, %v1120, 0
        %v1266 = vsel %vm1243, %v1121, 0
        %v1269 = vsel %vm1243, %v1122, 0
        %1271 = vmatpush.bf16.msra.mxu0 %v1060
        %1272 = vmatpush.bf16.msra.mxu0 %v1051
        %1273 = vmatpush.bf16.msra.mxu0 %v1042
        %1274 = vmatpush.bf16.msra.mxu0 %v1033
        %1275 = vmatpush.bf16.msra.mxu0 %v1024
        %1276 = vmatpush.bf16.msra.mxu0 %v1015
        %1277 = vmatpush.bf16.msra.mxu0 %v1006
        %1278 = vmatpush.bf16.msra.mxu0 %v997
        %1279 = vmatmul.bf16.gmra.mxu0 %v616
        %v1280 = vpop.f32.mrf.mxu0
        %v1281 = vadd.f32 %v612, %v1280
        %v1282 = vpop.f32.mrf.mxu0
        %1283 = vdwg.mxu0
        %1284 = vmatpush.bf16.msra.mxu0 0
        %1285 = vmatpush.bf16.msra.mxu0 0
        %1286 = vmatpush.bf16.msra.mxu0 %v1245
        %1287 = vmatpush.bf16.msra.mxu0 %v1105
        %1288 = vmatpush.bf16.msra.mxu0 %v1096
        %1289 = vmatpush.bf16.msra.mxu0 %v1087
        %1290 = vmatpush.bf16.msra.mxu0 %v1078
        %1291 = vmatpush.bf16.msra.mxu0 %v1069
        %1292 = vmatmul.bf16.gmra.mxu0 %v1241
        %v1293 = vpop.f32.mrf.mxu0
        %v1294 = vadd.f32 %v1281, %v1293
        %v1295 = vpop.f32.mrf.mxu0
        %1296 = vdwg.mxu0
        %1297 = vmatpush.bf16.msra.mxu0 %v1061
        %1298 = vmatpush.bf16.msra.mxu0 %v1052
        %1299 = vmatpush.bf16.msra.mxu0 %v1043
        %1300 = vmatpush.bf16.msra.mxu0 %v1034
        %1301 = vmatpush.bf16.msra.mxu0 %v1025
        %1302 = vmatpush.bf16.msra.mxu0 %v1016
        %1303 = vmatpush.bf16.msra.mxu0 %v1007
        %1304 = vmatpush.bf16.msra.mxu0 %v998
        %1305 = vmatmul.bf16.gmra.mxu0 %v616
        %v1306 = vpop.f32.mrf.mxu0
        %v1307 = vadd.f32 %v612, %v1306
        %v1308 = vpop.f32.mrf.mxu0
        %1309 = vdwg.mxu0
        %1310 = vmatpush.bf16.msra.mxu0 0
        %1311 = vmatpush.bf16.msra.mxu0 0
        %1312 = vmatpush.bf16.msra.mxu0 %v1248
        %1313 = vmatpush.bf16.msra.mxu0 %v1106
        %1314 = vmatpush.bf16.msra.mxu0 %v1097
        %1315 = vmatpush.bf16.msra.mxu0 %v1088
        %1316 = vmatpush.bf16.msra.mxu0 %v1079
        %1317 = vmatpush.bf16.msra.mxu0 %v1070
        %1318 = vmatmul.bf16.gmra.mxu0 %v1241
        %v1319 = vpop.f32.mrf.mxu0
        %v1320 = vadd.f32 %v1307, %v1319
        %v1321 = vpop.f32.mrf.mxu0
        %1322 = vdwg.mxu0
        %1323 = vmatpush.bf16.msra.mxu0 %v1062
        %1324 = vmatpush.bf16.msra.mxu0 %v1053
        %1325 = vmatpush.bf16.msra.mxu0 %v1044
        %1326 = vmatpush.bf16.msra.mxu0 %v1035
        %1327 = vmatpush.bf16.msra.mxu0 %v1026
        %1328 = vmatpush.bf16.msra.mxu0 %v1017
        %1329 = vmatpush.bf16.msra.mxu0 %v1008
        %1330 = vmatpush.bf16.msra.mxu0 %v999
        %1331 = vmatmul.bf16.gmra.mxu0 %v616
        %v1332 = vpop.f32.mrf.mxu0
        %v1333 = vadd.f32 %v612, %v1332
        %v1334 = vpop.f32.mrf.mxu0
        %1335 = vdwg.mxu0
        %1336 = vmatpush.bf16.msra.mxu0 0
        %1337 = vmatpush.bf16.msra.mxu0 0
        %1338 = vmatpush.bf16.msra.mxu0 %v1251
        %1339 = vmatpush.bf16.msra.mxu0 %v1107
        %1340 = vmatpush.bf16.msra.mxu0 %v1098
        %1341 = vmatpush.bf16.msra.mxu0 %v1089
        %1342 = vmatpush.bf16.msra.mxu0 %v1080
        %1343 = vmatpush.bf16.msra.mxu0 %v1071
        %1344 = vmatmul.bf16.gmra.mxu0 %v1241
        %v1345 = vpop.f32.mrf.mxu0
        %v1346 = vadd.f32 %v1333, %v1345
        %v1347 = vpop.f32.mrf.mxu0
        %1348 = vdwg.mxu0
        %1349 = vmatpush.bf16.msra.mxu0 %v1063
        %1350 = vmatpush.bf16.msra.mxu0 %v1054
        %1351 = vmatpush.bf16.msra.mxu0 %v1045
        %1352 = vmatpush.bf16.msra.mxu0 %v1036
        %1353 = vmatpush.bf16.msra.mxu0 %v1027
        %1354 = vmatpush.bf16.msra.mxu0 %v1018
        %1355 = vmatpush.bf16.msra.mxu0 %v1009
        %1356 = vmatpush.bf16.msra.mxu0 %v1000
        %1357 = vmatmul.bf16.gmra.mxu0 %v616
        %v1358 = vpop.f32.mrf.mxu0
        %v1359 = vadd.f32 %v612, %v1358
        %v1360 = vpop.f32.mrf.mxu0
        %1361 = vdwg.mxu0
        %1362 = vmatpush.bf16.msra.mxu0 0
        %1363 = vmatpush.bf16.msra.mxu0 0
        %1364 = vmatpush.bf16.msra.mxu0 %v1254
        %1365 = vmatpush.bf16.msra.mxu0 %v1108
        %1366 = vmatpush.bf16.msra.mxu0 %v1099
        %1367 = vmatpush.bf16.msra.mxu0 %v1090
        %1368 = vmatpush.bf16.msra.mxu0 %v1081
        %1369 = vmatpush.bf16.msra.mxu0 %v1072
        %1370 = vmatmul.bf16.gmra.mxu0 %v1241
        %v1371 = vpop.f32.mrf.mxu0
        %v1372 = vadd.f32 %v1359, %v1371
        %v1373 = vpop.f32.mrf.mxu0
        %1374 = vdwg.mxu0
        %1375 = vmatpush.bf16.msra.mxu0 %v1064
        %1376 = vmatpush.bf16.msra.mxu0 %v1055
        %1377 = vmatpush.bf16.msra.mxu0 %v1046
        %1378 = vmatpush.bf16.msra.mxu0 %v1037
        %1379 = vmatpush.bf16.msra.mxu0 %v1028
        %1380 = vmatpush.bf16.msra.mxu0 %v1019
        %1381 = vmatpush.bf16.msra.mxu0 %v1010
        %1382 = vmatpush.bf16.msra.mxu0 %v1001
        %1383 = vmatmul.bf16.gmra.mxu0 %v616
        %v1384 = vpop.f32.mrf.mxu0
        %v1385 = vadd.f32 %v612, %v1384
        %v1386 = vpop.f32.mrf.mxu0
        %1387 = vdwg.mxu0
        %1388 = vmatpush.bf16.msra.mxu0 0
        %1389 = vmatpush.bf16.msra.mxu0 0
        %1390 = vmatpush.bf16.msra.mxu0 %v1257
        %1391 = vmatpush.bf16.msra.mxu0 %v1109
        %1392 = vmatpush.bf16.msra.mxu0 %v1100
        %1393 = vmatpush.bf16.msra.mxu0 %v1091
        %1394 = vmatpush.bf16.msra.mxu0 %v1082
        %1395 = vmatpush.bf16.msra.mxu0 %v1073
        %1396 = vmatmul.bf16.gmra.mxu0 %v1241
        %v1397 = vpop.f32.mrf.mxu0
        %v1398 = vadd.f32 %v1385, %v1397
        %v1399 = vpop.f32.mrf.mxu0
        %1400 = vdwg.mxu0
        %1401 = vmatpush.bf16.msra.mxu0 %v1065
        %1402 = vmatpush.bf16.msra.mxu0 %v1056
        %1403 = vmatpush.bf16.msra.mxu0 %v1047
        %1404 = vmatpush.bf16.msra.mxu0 %v1038
        %1405 = vmatpush.bf16.msra.mxu0 %v1029
        %1406 = vmatpush.bf16.msra.mxu0 %v1020
        %1407 = vmatpush.bf16.msra.mxu0 %v1011
        %1408 = vmatpush.bf16.msra.mxu0 %v1002
        %1409 = vmatmul.bf16.gmra.mxu0 %v616
        %v1410 = vpop.f32.mrf.mxu0
        %v1411 = vadd.f32 %v612, %v1410
        %v1412 = vpop.f32.mrf.mxu0
        %1413 = vdwg.mxu0
        %1414 = vmatpush.bf16.msra.mxu0 0
        %1415 = vmatpush.bf16.msra.mxu0 0
        %1416 = vmatpush.bf16.msra.mxu0 %v1260
        %1417 = vmatpush.bf16.msra.mxu0 %v1110
        %1418 = vmatpush.bf16.msra.mxu0 %v1101
        %1419 = vmatpush.bf16.msra.mxu0 %v1092
        %1420 = vmatpush.bf16.msra.mxu0 %v1083
        %1421 = vmatpush.bf16.msra.mxu0 %v1074
        %1422 = vmatmul.bf16.gmra.mxu0 %v1241
        %v1423 = vpop.f32.mrf.mxu0
        %v1424 = vadd.f32 %v1411, %v1423
        %v1425 = vpop.f32.mrf.mxu0
        %1426 = vdwg.mxu0
        %1427 = vmatpush.bf16.msra.mxu0 %v1066
        %1428 = vmatpush.bf16.msra.mxu0 %v1057
        %1429 = vmatpush.bf16.msra.mxu0 %v1048
        %1430 = vmatpush.bf16.msra.mxu0 %v1039
        %1431 = vmatpush.bf16.msra.mxu0 %v1030
        %1432 = vmatpush.bf16.msra.mxu0 %v1021
        %1433 = vmatpush.bf16.msra.mxu0 %v1012
        %1434 = vmatpush.bf16.msra.mxu0 %v1003
        %1435 = vmatmul.bf16.gmra.mxu0 %v616
        %v1436 = vpop.f32.mrf.mxu0
        %v1437 = vadd.f32 %v612, %v1436
        %v1438 = vpop.f32.mrf.mxu0
        %1439 = vdwg.mxu0
        %1440 = vmatpush.bf16.msra.mxu0 0
        %1441 = vmatpush.bf16.msra.mxu0 0
        %1442 = vmatpush.bf16.msra.mxu0 %v1263
        %1443 = vmatpush.bf16.msra.mxu0 %v1111
        %1444 = vmatpush.bf16.msra.mxu0 %v1102
        %1445 = vmatpush.bf16.msra.mxu0 %v1093
        %1446 = vmatpush.bf16.msra.mxu0 %v1084
        %1447 = vmatpush.bf16.msra.mxu0 %v1075
        %1448 = vmatmul.bf16.gmra.mxu0 %v1241
        %v1449 = vpop.f32.mrf.mxu0
        %v1450 = vadd.f32 %v1437, %v1449
        %v1451 = vpop.f32.mrf.mxu0
        %1452 = vdwg.mxu0
        %1453 = vmatpush.bf16.msra.mxu0 %v1067
        %1454 = vmatpush.bf16.msra.mxu0 %v1058
        %1455 = vmatpush.bf16.msra.mxu0 %v1049
        %1456 = vmatpush.bf16.msra.mxu0 %v1040
        %1457 = vmatpush.bf16.msra.mxu0 %v1031
        %1458 = vmatpush.bf16.msra.mxu0 %v1022
        %1459 = vmatpush.bf16.msra.mxu0 %v1013
        %1460 = vmatpush.bf16.msra.mxu0 %v1004
        %1461 = vmatmul.bf16.gmra.mxu0 %v616
        %v1462 = vpop.f32.mrf.mxu0
        %v1463 = vadd.f32 %v612, %v1462
        %v1464 = vpop.f32.mrf.mxu0
        %1465 = vdwg.mxu0
        %1466 = vmatpush.bf16.msra.mxu0 0
        %1467 = vmatpush.bf16.msra.mxu0 0
        %1468 = vmatpush.bf16.msra.mxu0 %v1266
        %1469 = vmatpush.bf16.msra.mxu0 %v1112
        %1470 = vmatpush.bf16.msra.mxu0 %v1103
        %1471 = vmatpush.bf16.msra.mxu0 %v1094
        %1472 = vmatpush.bf16.msra.mxu0 %v1085
        %1473 = vmatpush.bf16.msra.mxu0 %v1076
        %1474 = vmatmul.bf16.gmra.mxu0 %v1241
        %v1475 = vpop.f32.mrf.mxu0
        %v1476 = vadd.f32 %v1463, %v1475
        %v1477 = vpop.f32.mrf.mxu0
        %1478 = vdwg.mxu0
        %1479 = vmatpush.bf16.msra.mxu0 %v1068
        %1480 = vmatpush.bf16.msra.mxu0 %v1059
        %1481 = vmatpush.bf16.msra.mxu0 %v1050
        %1482 = vmatpush.bf16.msra.mxu0 %v1041
        %1483 = vmatpush.bf16.msra.mxu0 %v1032
        %1484 = vmatpush.bf16.msra.mxu0 %v1023
        %1485 = vmatpush.bf16.msra.mxu0 %v1014
        %1486 = vmatpush.bf16.msra.mxu0 %v1005
        %1487 = vmatmul.bf16.gmra.mxu0 %v616
        %v1488 = vpop.f32.mrf.mxu0
        %v1489 = vadd.f32 %v612, %v1488
        %v1490 = vpop.f32.mrf.mxu0
        %1491 = vdwg.mxu0
        %1492 = vmatpush.bf16.msra.mxu0 0
        %1493 = vmatpush.bf16.msra.mxu0 0
        %1494 = vmatpush.bf16.msra.mxu0 %v1269
        %1495 = vmatpush.bf16.msra.mxu0 %v1113
        %1496 = vmatpush.bf16.msra.mxu0 %v1104
        %1497 = vmatpush.bf16.msra.mxu0 %v1095
        %1498 = vmatpush.bf16.msra.mxu0 %v1086
        %1499 = vmatpush.bf16.msra.mxu0 %v1077
        %1500 = vmatmul.bf16.gmra.mxu0 %v1241
        %v1501 = vpop.f32.mrf.mxu0
        %v1502 = vadd.f32 %v1489, %v1501
        %v1503 = vpop.f32.mrf.mxu0
        %1504 = vdwg.mxu0
        %v1513 = vrot.slane %v1320, 4
        %v1514 = vrot.slane %v1372, 4
        %v1515 = vrot.slane %v1424, 4
        %v1516 = vrot.slane %v1476, 4
        %v1517 = vsel %vm1243, %v1294, %v1513
        %v1518 = vsel %vm1243, %v1346, %v1514
        %v1519 = vsel %vm1243, %v1398, %v1515
        %v1520 = vsel %vm1243, %v1450, %v1516
        %1525 = vst [vmem:[%s469] sm:$0xff] %v1517
        %1526 = vst [vmem:[%s469 + $0x8] sm:$0xff] %v1518
        %1527 = vst [vmem:[%s469 + $0x10] sm:$0xff] %v1519
        %1528 = vst [vmem:[%s469 + $0x18] sm:$0xff] %v1520
        %1529 = vst [vmem:[%s469 + $0x20] sm:$0xf] %v1502
        %s1530 = smul.u32 9, %s14
        %p1531 = scmp.lt.s32.totalorder %s1530, 53
        %s1532 = scalar_select %p1531, %s1530, 53
        %s1533 = smul.addr %s1532, 4
        %s1534 = scalar_lea.vmem %s3, %s1533
        // Predicated region
        $region59: #{_lambda_.33} parent=53 // pred_check
          %p1535 = pneg %p100
        $region60: #{_lambda_.33} parent=53 // pred_check_branch
          %1537 = sbr.rel (%p1535) target = $region62
        $region61: #{_lambda_.33} parent=53 // pred_region
          %s1538 = smul.u32 9, %s14
        $region62: #{_lambda_.33} parent=53 // pred_fallthru
          _
      $region54: #{_lambda_.33} parent=5 // pred_fallthru
        _
      %p1539 = scmp.le.s32.totalorder 2, %s9
      // Predicated region
      $region63: #{_lambda_.33} parent=5 // pred_check
        %p1540 = pneg %p1539
      $region64: #{_lambda_.33} parent=5 // pred_check_branch
        %1542 = sbr.rel (%p1540) target = $region66
      $region65: #{_lambda_.33} parent=5 // pred_region
        %s1543 = ssub.s32 %s9, 2
        // Predicated region
        $region67: #{_lambda_.33} parent=65 // pred_check
          %p1544 = pneg %p106
        $region68: #{_lambda_.33} parent=65 // pred_check_branch
          %1546 = sbr.rel (%p1544) target = $region70
        $region69: #{_lambda_.33} parent=65 // pred_region
          %s1547 = smul.u32 9, %s15
          %p1548 = scmp.lt.s32.totalorder %s1547, 53
          %s1549 = scalar_select %p1548, %s1547, 53
          %s1550 = smul.addr %s1549, 4
          %s1551 = scalar_lea.vmem %s3, %s1550
        $region70: #{_lambda_.33} parent=65 // pred_fallthru
          _
      $region66: #{_lambda_.33} parent=5 // pred_fallthru
        _
    $region6: #{_lambda_.33} parent=1 // loop_footer
      %s13 = sadd.s32 1, %s9
    $region7: #{_lambda_.33} parent=1 // loop_footer_branch
      %8 = sbr.rel target = $region3
    $region8: #{_lambda_.33} parent=1 // loop_exit
      _

// kernel: _lambda_.34
$region0: #{_lambda_.34}
  #allocation0 [shape = 'u32[]', space=smem, size = 0x4, offset = 0x4, fixed_abs, tag = 'smem constant byte address 0x4 - core index']
  #allocation1 [shape = 'u32[72,128]{1,0:T(1,128)}', space=vmem, size = 0x9000, scoped, tag = 'internal scratch']
  %s0 = inlined_call_operand.vmem [shape: bf16[4,324], index: 0, kind: input, shape index: {}]
  %s1 = inlined_call_operand.vmem [shape: bf16[324,6912], index: 1, kind: input, shape index: {}]
  %s2 = inlined_call_operand.vmem [shape: f32[4,1], index: 2, kind: input, shape index: {}]
  %s3 = inlined_call_operand.vmem [shape: f32[4,6912], index: 3, kind: output, shape index: {}]
  %s4 = sld [smem:[#allocation0]]
  $region71: #{_lambda_.34} parent=0
    _
  %s6 = ssub.s32 1, %s4
  %s7 = scalar_select 0, %s6, %s4
  $region1: #{_lambda_.34} parent=0
    #allocation2 [shape = 'u8[1511424]{0}', space=vmem, size = 0x171000, scoped, tag = 'input window, operand 1']
    loop: start=0, step=1, limit=8
    $region2: #{_lambda_.34} parent=1 // loop_pre_header
      _
    $region3: #{_lambda_.34} parent=1 // loop_header
      %s9 = sphi 0, %s13
      %p10 = scmp.ge.s32.totalorder %s9, 8
      %s17 = sphi 0, %s17
      %s19 = sphi 0, %s17
      %s20 = sphi 0, %s19
      %s34 = sphi 0, %s20
      %s40 = sphi 0, %s42
      %s43 = sphi 0, %s40
      %s44 = sphi 0, %s43
      %s60 = sphi 0, %s44
      %s64 = sphi 0, %s64
      %s66 = sphi 0, %s64
      %s67 = sphi 0, %s66
      %s81 = sphi 0, %s67
      %s87 = sphi 0, %s89
      %s90 = sphi 0, %s87
      %s91 = sphi 0, %s90
      %s107 = sphi 0, %s91
    $region4: #{_lambda_.34} parent=1 // loop_header_branch
      %12 = sbr.rel (%p10) target = $region8
    $region5: #{_lambda_.34} parent=1 // loop_body
      %s14 = ssub.s32 %s9, 1
      %s15 = ssub.s32 %s9, 2
      %s16 = sadd.s32 %s9, 1
      %s18 = sadd.s32 %s17, 1
      %p21 = scmp.eq.s32.totalorder %s9, 5
      %p22 = scmp.ne.s32.totalorder %s17, %s19
      %p23 = scmp.eq.s32.totalorder %s9, 0
      %p24 = por %p22, %p23
      %p25 = scmp.ne.s32.totalorder %s17, %s19
      %p26 = scmp.eq.s32.totalorder %s14, 5
      %p27 = por %p25, %p26
      %p28 = scmp.ne.s32.totalorder %s19, %s20
      %p29 = scmp.eq.s32.totalorder %s14, 0
      %p30 = por %p28, %p29
      %p31 = scmp.ne.s32.totalorder %s19, %s20
      %p32 = scmp.eq.s32.totalorder %s15, 5
      %p33 = por %p31, %p32
      %p35 = scmp.ne.s32.totalorder %s20, %s34
      %p36 = scmp.eq.s32.totalorder %s15, 0
      %p37 = por %p35, %p36
      %s38 = ssub.s32 %s9, %s16
      %p39 = scmp.eq.s32.totalorder %s38, 0
      %s41 = sadd.s32 %s40, 1
      %s42 = scalar_select %p39, %s40, %s41
      %p45 = pneg %p39
      %p46 = scmp.eq.s32.totalorder %s9, 5
      %p47 = por %p45, %p46
      %p48 = scmp.ne.s32.totalorder %s40, %s43
      %p49 = scmp.eq.s32.totalorder %s9, 0
      %p50 = por %p48, %p49
      %p51 = scmp.ne.s32.totalorder %s40, %s43
      %p52 = scmp.eq.s32.totalorder %s14, 5
      %p53 = por %p51, %p52
      %p54 = scmp.ne.s32.totalorder %s43, %s44
      %p55 = scmp.eq.s32.totalorder %s14, 0
      %p56 = por %p54, %p55
      %p57 = scmp.ne.s32.totalorder %s43, %s44
      %p58 = scmp.eq.s32.totalorder %s15, 5
      %p59 = por %p57, %p58
      %p61 = scmp.ne.s32.totalorder %s44, %s60
      %p62 = scmp.eq.s32.totalorder %s15, 0
      %p63 = por %p61, %p62
      %s65 = sadd.s32 %s64, 1
      %p68 = scmp.eq.s32.totalorder %s9, 5
      %p69 = scmp.ne.s32.totalorder %s64, %s66
      %p70 = scmp.eq.s32.totalorder %s9, 0
      %p71 = por %p69, %p70
      %p72 = scmp.ne.s32.totalorder %s64, %s66
      %p73 = scmp.eq.s32.totalorder %s14, 5
      %p74 = por %p72, %p73
      %p75 = scmp.ne.s32.totalorder %s66, %s67
      %p76 = scmp.eq.s32.totalorder %s14, 0
      %p77 = por %p75, %p76
      %p78 = scmp.ne.s32.totalorder %s66, %s67
      %p79 = scmp.eq.s32.totalorder %s15, 5
      %p80 = por %p78, %p79
      %p82 = scmp.ne.s32.totalorder %s67, %s81
      %p83 = scmp.eq.s32.totalorder %s15, 0
      %p84 = por %p82, %p83
      %s85 = ssub.s32 %s9, %s16
      %p86 = scmp.eq.s32.totalorder %s85, 0
      %s88 = sadd.s32 %s87, 1
      %s89 = scalar_select %p86, %s87, %s88
      %p92 = pneg %p86
      %p93 = scmp.eq.s32.totalorder %s9, 5
      %p94 = por %p92, %p93
      %p95 = scmp.ne.s32.totalorder %s87, %s90
      %p96 = scmp.eq.s32.totalorder %s9, 0
      %p97 = por %p95, %p96
      %p98 = scmp.ne.s32.totalorder %s87, %s90
      %p99 = scmp.eq.s32.totalorder %s14, 5
      %p100 = por %p98, %p99
      %p101 = scmp.ne.s32.totalorder %s90, %s91
      %p102 = scmp.eq.s32.totalorder %s14, 0
      %p103 = por %p101, %p102
      %p104 = scmp.ne.s32.totalorder %s90, %s91
      %p105 = scmp.eq.s32.totalorder %s15, 5
      %p106 = por %p104, %p105
      %p108 = scmp.ne.s32.totalorder %s91, %s107
      %p109 = scmp.eq.s32.totalorder %s15, 0
      %p110 = por %p108, %p109
      %p111 = scmp.le.s32.totalorder 1, %s9
      %p112 = scmp.lt.s32.totalorder %s9, 7
      %p113 = pnand %p111, %p112
      %p114 = pneg %p113
      // Predicated region
      $region9: #{_lambda_.34} parent=5 // pred_check
        _
      $region10: #{_lambda_.34} parent=5 // pred_check_branch
        %116 = sbr.rel (%p113) target = $region12
      $region11: #{_lambda_.34} parent=5 // pred_region
        %s117 = ssub.s32 %s9, 1
        // Predicated region
        $region13: #{_lambda_.34} parent=11 // pred_check
          %p118 = pneg %p30
        $region14: #{_lambda_.34} parent=11 // pred_check_branch
          %120 = sbr.rel (%p118) target = $region16
        $region15: #{_lambda_.34} parent=11 // pred_region
          _
        $region16: #{_lambda_.34} parent=11 // pred_fallthru
          _
        // Predicated region
        $region17: #{_lambda_.34} parent=11 // pred_check
          %p121 = pneg %p77
        $region18: #{_lambda_.34} parent=11 // pred_check_branch
          %123 = sbr.rel (%p121) target = $region20
        $region19: #{_lambda_.34} parent=11 // pred_region
          _
        $region20: #{_lambda_.34} parent=11 // pred_fallthru
          _
      $region12: #{_lambda_.34} parent=5 // pred_fallthru
        _
      %p124 = scmp.lt.s32.totalorder %s9, 6
      // Predicated region
      $region21: #{_lambda_.34} parent=5 // pred_check
        %p125 = pneg %p124
      $region22: #{_lambda_.34} parent=5 // pred_check_branch
        %127 = sbr.rel (%p125) target = $region24
      $region23: #{_lambda_.34} parent=5 // pred_region
        // Predicated region
        $region25: #{_lambda_.34} parent=23 // pred_check
          %p128 = pneg %p50
        $region26: #{_lambda_.34} parent=23 // pred_check_branch
          %130 = sbr.rel (%p128) target = $region28
        $region27: #{_lambda_.34} parent=23 // pred_region
          %s131 = sand.u32 %s40, 1
          %s132 = sand.u32 %s40, 1
          %s133 = smul.addr %s132, 1476
          %s134 = scalar_lea.vmem [#allocation2], %s133
          %s135 = smul.u32 9, %s9
          %s136 = smul.addr %s135, 4
          %s137 = scalar_lea.vmem %s1, %s136
          // Predicated region
          $region29: #{_lambda_.34} parent=27 // pred_check
            _
          $region30: #{_lambda_.34} parent=27 // pred_check_branch
            %139 = sbr.rel (0) target = $region32
          $region31: #{_lambda_.34} parent=27 // pred_region
            // Predicated region
            $region33: #{_lambda_.34} parent=31 // pred_check
              _
            $region34: #{_lambda_.34} parent=31 // pred_check_branch
              %141 = sbr.rel (0) target = $region36
            $region35: #{_lambda_.34} parent=31 // pred_region
              %s142 = scalar_lea.vmem %s137, 32
              %s143 = scalar_lea.vmem %s134, 32 [#allocation2]
              loop: start=0, step=1, limit=1
              $region37: #{_lambda_.34} parent=35 // loop_pre_header
                _
              $region38: #{_lambda_.34} parent=35 // loop_header
                %s145 = sphi 0, %s149
                %p146 = scmp.ge.s32.totalorder %s145, 1
                %s150 = sphi %s137, %s137
                %s151 = sphi %s134, %s134
              $region39: #{_lambda_.34} parent=35 // loop_header_branch
                %148 = sbr.rel (%p146) target = $region43
              $region40: #{_lambda_.34} parent=35 // loop_body
                %v152 = vld [vmem:[%s150] sm:$0xff]
                %153 = vst [vmem:[%s151] sm:$0xff] %v152
                %v154 = vld [vmem:[%s150 + $0x8] sm:$0xff]
                %155 = vst [vmem:[%s151 + $0x8] sm:$0xff] %v154
                %v156 = vld [vmem:[%s150 + $0x10] sm:$0xff]
                %157 = vst [vmem:[%s151 + $0x10] sm:$0xff] %v156
                %v158 = vld [vmem:[%s150 + $0x18] sm:$0xff]
                %159 = vst [vmem:[%s151 + $0x18] sm:$0xff] %v158
                %v160 = vld [vmem:[%s150 + $0xd8] sm:$0xff]
                %161 = vst [vmem:[%s151 + $0x24] sm:$0xff] %v160
                %v162 = vld [vmem:[%s150 + $0xe0] sm:$0xff]
                %163 = vst [vmem:[%s151 + $0x2c] sm:$0xff] %v162
                %v164 = vld [vmem:[%s150 + $0xe8] sm:$0xff]
                %165 = vst [vmem:[%s151 + $0x34] sm:$0xff] %v164
                %v166 = vld [vmem:[%s150 + $0xf0] sm:$0xff]
                %167 = vst [vmem:[%s151 + $0x3c] sm:$0xff] %v166
                %v168 = vld [vmem:[%s150 + $0x1b0] sm:$0xff]
                %169 = vst [vmem:[%s151 + $0x48] sm:$0xff] %v168
                %v170 = vld [vmem:[%s150 + $0x1b8] sm:$0xff]
                %171 = vst [vmem:[%s151 + $0x50] sm:$0xff] %v170
                %v172 = vld [vmem:[%s150 + $0x1c0] sm:$0xff]
                %173 = vst [vmem:[%s151 + $0x58] sm:$0xff] %v172
                %v174 = vld [vmem:[%s150 + $0x1c8] sm:$0xff]
                %175 = vst [vmem:[%s151 + $0x60] sm:$0xff] %v174
                %v176 = vld [vmem:[%s150 + $0x288] sm:$0xff]
                %177 = vst [vmem:[%s151 + $0x6c] sm:$0xff] %v176
                %v178 = vld [vmem:[%s150 + $0x290] sm:$0xff]
                %179 = vst [vmem:[%s151 + $0x74] sm:$0xff] %v178
                %v180 = vld [vmem:[%s150 + $0x298] sm:$0xff]
                %181 = vst [vmem:[%s151 + $0x7c] sm:$0xff] %v180
                %v182 = vld [vmem:[%s150 + $0x2a0] sm:$0xff]
                %183 = vst [vmem:[%s151 + $0x84] sm:$0xff] %v182
                %v184 = vld [vmem:[%s150 + $0x360] sm:$0xff]
                %185 = vst [vmem:[%s151 + $0x90] sm:$0xff] %v184
                %v186 = vld [vmem:[%s150 + $0x368] sm:$0xff]
                %187 = vst [vmem:[%s151 + $0x98] sm:$0xff] %v186
                %v188 = vld [vmem:[%s150 + $0x370] sm:$0xff]
                %189 = vst [vmem:[%s151 + $0xa0] sm:$0xff] %v188
                %v190 = vld [vmem:[%s150 + $0x378] sm:$0xff]
                %191 = vst [vmem:[%s151 + $0xa8] sm:$0xff] %v190
                %v192 = vld [vmem:[%s150 + $0x438] sm:$0xff]
                %193 = vst [vmem:[%s151 + $0xb4] sm:$0xff] %v192
                %v194 = vld [vmem:[%s150 + $0x440] sm:$0xff]
                %195 = vst [vmem:[%s151 + $0xbc] sm:$0xff] %v194
                %v196 = vld [vmem:[%s150 + $0x448] sm:$0xff]
                %197 = vst [vmem:[%s151 + $0xc4] sm:$0xff] %v196
                %v198 = vld [vmem:[%s150 + $0x450] sm:$0xff]
                %199 = vst [vmem:[%s151 + $0xcc] sm:$0xff] %v198
                %v200 = vld [vmem:[%s150 + $0x510] sm:$0xff]
                %201 = vst [vmem:[%s151 + $0xd8] sm:$0xff] %v200
                %v202 = vld [vmem:[%s150 + $0x518] sm:$0xff]
                %203 = vst [vmem:[%s151 + $0xe0] sm:$0xff] %v202
                %v204 = vld [vmem:[%s150 + $0x520] sm:$0xff]
                %205 = vst [vmem:[%s151 + $0xe8] sm:$0xff] %v204
                %v206 = vld [vmem:[%s150 + $0x528] sm:$0xff]
                %207 = vst [vmem:[%s151 + $0xf0] sm:$0xff] %v206
                %v208 = vld [vmem:[%s150 + $0x5e8] sm:$0xff]
                %209 = vst [vmem:[%s151 + $0xfc] sm:$0xff] %v208
                %v210 = vld [vmem:[%s150 + $0x5f0] sm:$0xff]
                %211 = vst [vmem:[%s151 + $0x104] sm:$0xff] %v210
                %v212 = vld [vmem:[%s150 + $0x5f8] sm:$0xff]
                %213 = vst [vmem:[%s151 + $0x10c] sm:$0xff] %v212
                %v214 = vld [vmem:[%s150 + $0x600] sm:$0xff]
                %215 = vst [vmem:[%s151 + $0x114] sm:$0xff] %v214
                %v216 = vld [vmem:[%s150 + $0x6c0] sm:$0xff]
                %217 = vst [vmem:[%s151 + $0x120] sm:$0xff] %v216
                %v218 = vld [vmem:[%s150 + $0x6c8] sm:$0xff]
                %219 = vst [vmem:[%s151 + $0x128] sm:$0xff] %v218
                %v220 = vld [vmem:[%s150 + $0x6d0] sm:$0xff]
                %221 = vst [vmem:[%s151 + $0x130] sm:$0xff] %v220
                %v222 = vld [vmem:[%s150 + $0x6d8] sm:$0xff]
                %223 = vst [vmem:[%s151 + $0x138] sm:$0xff] %v222
                %v224 = vld [vmem:[%s150 + $0x798] sm:$0xff]
                %225 = vst [vmem:[%s151 + $0x144] sm:$0xff] %v224
                %v226 = vld [vmem:[%s150 + $0x7a0] sm:$0xff]
                %227 = vst [vmem:[%s151 + $0x14c] sm:$0xff] %v226
                %v228 = vld [vmem:[%s150 + $0x7a8] sm:$0xff]
                %229 = vst [vmem:[%s151 + $0x154] sm:$0xff] %v228
                %v230 = vld [vmem:[%s150 + $0x7b0] sm:$0xff]
                %231 = vst [vmem:[%s151 + $0x15c] sm:$0xff] %v230
                %v232 = vld [vmem:[%s150 + $0x870] sm:$0xff]
                %233 = vst [vmem:[%s151 + $0x168] sm:$0xff] %v232
                %v234 = vld [vmem:[%s150 + $0x878] sm:$0xff]
                %235 = vst [vmem:[%s151 + $0x170] sm:$0xff] %v234
                %v236 = vld [vmem:[%s150 + $0x880] sm:$0xff]
                %237 = vst [vmem:[%s151 + $0x178] sm:$0xff] %v236
                %v238 = vld [vmem:[%s150 + $0x888] sm:$0xff]
                %239 = vst [vmem:[%s151 + $0x180] sm:$0xff] %v238
                %v240 = vld [vmem:[%s150 + $0x948] sm:$0xff]
                %241 = vst [vmem:[%s151 + $0x18c] sm:$0xff] %v240
                %v242 = vld [vmem:[%s150 + $0x950] sm:$0xff]
                %243 = vst [vmem:[%s151 + $0x194] sm:$0xff] %v242
                %v244 = vld [vmem:[%s150 + $0x958] sm:$0xff]
                %245 = vst [vmem:[%s151 + $0x19c] sm:$0xff] %v244
                %v246 = vld [vmem:[%s150 + $0x960] sm:$0xff]
                %247 = vst [vmem:[%s151 + $0x1a4] sm:$0xff] %v246
                %v248 = vld [vmem:[%s150 + $0xa20] sm:$0xff]
                %249 = vst [vmem:[%s151 + $0x1b0] sm:$0xff] %v248
                %v250 = vld [vmem:[%s150 + $0xa28] sm:$0xff]
                %251 = vst [vmem:[%s151 + $0x1b8] sm:$0xff] %v250
                %v252 = vld [vmem:[%s150 + $0xa30] sm:$0xff]
                %253 = vst [vmem:[%s151 + $0x1c0] sm:$0xff] %v252
                %v254 = vld [vmem:[%s150 + $0xa38] sm:$0xff]
                %255 = vst [vmem:[%s151 + $0x1c8] sm:$0xff] %v254
                %v256 = vld [vmem:[%s150 + $0xaf8] sm:$0xff]
                %257 = vst [vmem:[%s151 + $0x1d4] sm:$0xff] %v256
                %v258 = vld [vmem:[%s150 + $0xb00] sm:$0xff]
                %259 = vst [vmem:[%s151 + $0x1dc] sm:$0xff] %v258
                %v260 = vld [vmem:[%s150 + $0xb08] sm:$0xff]
                %261 = vst [vmem:[%s151 + $0x1e4] sm:$0xff] %v260
                %v262 = vld [vmem:[%s150 + $0xb10] sm:$0xff]
                %263 = vst [vmem:[%s151 + $0x1ec] sm:$0xff] %v262
                %v264 = vld [vmem:[%s150 + $0xbd0] sm:$0xff]
                %265 = vst [vmem:[%s151 + $0x1f8] sm:$0xff] %v264
                %v266 = vld [vmem:[%s150 + $0xbd8] sm:$0xff]
                %267 = vst [vmem:[%s151 + $0x200] sm:$0xff] %v266
                %v268 = vld [vmem:[%s150 + $0xbe0] sm:$0xff]
                %269 = vst [vmem:[%s151 + $0x208] sm:$0xff] %v268
                %v270 = vld [vmem:[%s150 + $0xbe8] sm:$0xff]
                %271 = vst [vmem:[%s151 + $0x210] sm:$0xff] %v270
                %v272 = vld [vmem:[%s150 + $0xca8] sm:$0xff]
                %273 = vst [vmem:[%s151 + $0x21c] sm:$0xff] %v272
                %v274 = vld [vmem:[%s150 + $0xcb0] sm:$0xff]
                %275 = vst [vmem:[%s151 + $0x224] sm:$0xff] %v274
                %v276 = vld [vmem:[%s150 + $0xcb8] sm:$0xff]
                %277 = vst [vmem:[%s151 + $0x22c] sm:$0xff] %v276
                %v278 = vld [vmem:[%s150 + $0xcc0] sm:$0xff]
                %279 = vst [vmem:[%s151 + $0x234] sm:$0xff] %v278
                %v280 = vld [vmem:[%s150 + $0xd80] sm:$0xff]
                %281 = vst [vmem:[%s151 + $0x240] sm:$0xff] %v280
                %v282 = vld [vmem:[%s150 + $0xd88] sm:$0xff]
                %283 = vst [vmem:[%s151 + $0x248] sm:$0xff] %v282
                %v284 = vld [vmem:[%s150 + $0xd90] sm:$0xff]
                %285 = vst [vmem:[%s151 + $0x250] sm:$0xff] %v284
                %v286 = vld [vmem:[%s150 + $0xd98] sm:$0xff]
                %287 = vst [vmem:[%s151 + $0x258] sm:$0xff] %v286
                %v288 = vld [vmem:[%s150 + $0xe58] sm:$0xff]
                %289 = vst [vmem:[%s151 + $0x264] sm:$0xff] %v288
                %v290 = vld [vmem:[%s150 + $0xe60] sm:$0xff]
                %291 = vst [vmem:[%s151 + $0x26c] sm:$0xff] %v290
                %v292 = vld [vmem:[%s150 + $0xe68] sm:$0xff]
                %293 = vst [vmem:[%s151 + $0x274] sm:$0xff] %v292
                %v294 = vld [vmem:[%s150 + $0xe70] sm:$0xff]
                %295 = vst [vmem:[%s151 + $0x27c] sm:$0xff] %v294
                %v296 = vld [vmem:[%s150 + $0xf30] sm:$0xff]
                %297 = vst [vmem:[%s151 + $0x288] sm:$0xff] %v296
                %v298 = vld [vmem:[%s150 + $0xf38] sm:$0xff]
                %299 = vst [vmem:[%s151 + $0x290] sm:$0xff] %v298
                %v300 = vld [vmem:[%s150 + $0xf40] sm:$0xff]
                %301 = vst [vmem:[%s151 + $0x298] sm:$0xff] %v300
                %v302 = vld [vmem:[%s150 + $0xf48] sm:$0xff]
                %303 = vst [vmem:[%s151 + $0x2a0] sm:$0xff] %v302
                %v304 = vld [vmem:[%s150 + $0x1008] sm:$0xff]
                %305 = vst [vmem:[%s151 + $0x2ac] sm:$0xff] %v304
                %v306 = vld [vmem:[%s150 + $0x1010] sm:$0xff]
                %307 = vst [vmem:[%s151 + $0x2b4] sm:$0xff] %v306
                %v308 = vld [vmem:[%s150 + $0x1018] sm:$0xff]
                %309 = vst [vmem:[%s151 + $0x2bc] sm:$0xff] %v308
                %v310 = vld [vmem:[%s150 + $0x1020] sm:$0xff]
                %311 = vst [vmem:[%s151 + $0x2c4] sm:$0xff] %v310
                %v312 = vld [vmem:[%s150 + $0x10e0] sm:$0xff]
                %313 = vst [vmem:[%s151 + $0x2d0] sm:$0xff] %v312
                %v314 = vld [vmem:[%s150 + $0x10e8] sm:$0xff]
                %315 = vst [vmem:[%s151 + $0x2d8] sm:$0xff] %v314
                %v316 = vld [vmem:[%s150 + $0x10f0] sm:$0xff]
                %317 = vst [vmem:[%s151 + $0x2e0] sm:$0xff] %v316
                %v318 = vld [vmem:[%s150 + $0x10f8] sm:$0xff]
                %319 = vst [vmem:[%s151 + $0x2e8] sm:$0xff] %v318
                %v320 = vld [vmem:[%s150 + $0x11b8] sm:$0xff]
                %321 = vst [vmem:[%s151 + $0x2f4] sm:$0xff] %v320
                %v322 = vld [vmem:[%s150 + $0x11c0] sm:$0xff]
                %323 = vst [vmem:[%s151 + $0x2fc] sm:$0xff] %v322
                %v324 = vld [vmem:[%s150 + $0x11c8] sm:$0xff]
                %325 = vst [vmem:[%s151 + $0x304] sm:$0xff] %v324
                %v326 = vld [vmem:[%s150 + $0x11d0] sm:$0xff]
                %327 = vst [vmem:[%s151 + $0x30c] sm:$0xff] %v326
                %v328 = vld [vmem:[%s150 + $0x1290] sm:$0xff]
                %329 = vst [vmem:[%s151 + $0x318] sm:$0xff] %v328
                %v330 = vld [vmem:[%s150 + $0x1298] sm:$0xff]
                %331 = vst [vmem:[%s151 + $0x320] sm:$0xff] %v330
                %v332 = vld [vmem:[%s150 + $0x12a0] sm:$0xff]
                %333 = vst [vmem:[%s151 + $0x328] sm:$0xff] %v332
                %v334 = vld [vmem:[%s150 + $0x12a8] sm:$0xff]
                %335 = vst [vmem:[%s151 + $0x330] sm:$0xff] %v334
                %v336 = vld [vmem:[%s150 + $0x1368] sm:$0xff]
                %337 = vst [vmem:[%s151 + $0x33c] sm:$0xff] %v336
                %v338 = vld [vmem:[%s150 + $0x1370] sm:$0xff]
                %339 = vst [vmem:[%s151 + $0x344] sm:$0xff] %v338
                %v340 = vld [vmem:[%s150 + $0x1378] sm:$0xff]
                %341 = vst [vmem:[%s151 + $0x34c] sm:$0xff] %v340
                %v342 = vld [vmem:[%s150 + $0x1380] sm:$0xff]
                %343 = vst [vmem:[%s151 + $0x354] sm:$0xff] %v342
                %v344 = vld [vmem:[%s150 + $0x1440] sm:$0xff]
                %345 = vst [vmem:[%s151 + $0x360] sm:$0xff] %v344
                %v346 = vld [vmem:[%s150 + $0x1448] sm:$0xff]
                %347 = vst [vmem:[%s151 + $0x368] sm:$0xff] %v346
                %v348 = vld [vmem:[%s150 + $0x1450] sm:$0xff]
                %349 = vst [vmem:[%s151 + $0x370] sm:$0xff] %v348
                %v350 = vld [vmem:[%s150 + $0x1458] sm:$0xff]
                %351 = vst [vmem:[%s151 + $0x378] sm:$0xff] %v350
                %v352 = vld [vmem:[%s150 + $0x1518] sm:$0xff]
                %353 = vst [vmem:[%s151 + $0x384] sm:$0xff] %v352
                %v354 = vld [vmem:[%s150 + $0x1520] sm:$0xff]
                %355 = vst [vmem:[%s151 + $0x38c] sm:$0xff] %v354
                %v356 = vld [vmem:[%s150 + $0x1528] sm:$0xff]
                %357 = vst [vmem:[%s151 + $0x394] sm:$0xff] %v356
                %v358 = vld [vmem:[%s150 + $0x1530] sm:$0xff]
                %359 = vst [vmem:[%s151 + $0x39c] sm:$0xff] %v358
                %v360 = vld [vmem:[%s150 + $0x15f0] sm:$0xff]
                %361 = vst [vmem:[%s151 + $0x3a8] sm:$0xff] %v360
                %v362 = vld [vmem:[%s150 + $0x15f8] sm:$0xff]
                %363 = vst [vmem:[%s151 + $0x3b0] sm:$0xff] %v362
                %v364 = vld [vmem:[%s150 + $0x1600] sm:$0xff]
                %365 = vst [vmem:[%s151 + $0x3b8] sm:$0xff] %v364
                %v366 = vld [vmem:[%s150 + $0x1608] sm:$0xff]
                %367 = vst [vmem:[%s151 + $0x3c0] sm:$0xff] %v366
                %v368 = vld [vmem:[%s150 + $0x16c8] sm:$0xff]
                %369 = vst [vmem:[%s151 + $0x3cc] sm:$0xff] %v368
                %v370 = vld [vmem:[%s150 + $0x16d0] sm:$0xff]
                %371 = vst [vmem:[%s151 + $0x3d4] sm:$0xff] %v370
                %v372 = vld [vmem:[%s150 + $0x16d8] sm:$0xff]
                %373 = vst [vmem:[%s151 + $0x3dc] sm:$0xff] %v372
                %v374 = vld [vmem:[%s150 + $0x16e0] sm:$0xff]
                %375 = vst [vmem:[%s151 + $0x3e4] sm:$0xff] %v374
                %v376 = vld [vmem:[%s150 + $0x17a0] sm:$0xff]
                %377 = vst [vmem:[%s151 + $0x3f0] sm:$0xff] %v376
                %v378 = vld [vmem:[%s150 + $0x17a8] sm:$0xff]
                %379 = vst [vmem:[%s151 + $0x3f8] sm:$0xff] %v378
                %v380 = vld [vmem:[%s150 + $0x17b0] sm:$0xff]
                %381 = vst [vmem:[%s151 + $0x400] sm:$0xff] %v380
                %v382 = vld [vmem:[%s150 + $0x17b8] sm:$0xff]
                %383 = vst [vmem:[%s151 + $0x408] sm:$0xff] %v382
                %v384 = vld [vmem:[%s150 + $0x1878] sm:$0xff]
                %385 = vst [vmem:[%s151 + $0x414] sm:$0xff] %v384
                %v386 = vld [vmem:[%s150 + $0x1880] sm:$0xff]
                %387 = vst [vmem:[%s151 + $0x41c] sm:$0xff] %v386
                %v388 = vld [vmem:[%s150 + $0x1888] sm:$0xff]
                %389 = vst [vmem:[%s151 + $0x424] sm:$0xff] %v388
                %v390 = vld [vmem:[%s150 + $0x1890] sm:$0xff]
                %391 = vst [vmem:[%s151 + $0x42c] sm:$0xff] %v390
                %v392 = vld [vmem:[%s150 + $0x1950] sm:$0xff]
                %393 = vst [vmem:[%s151 + $0x438] sm:$0xff] %v392
                %v394 = vld [vmem:[%s150 + $0x1958] sm:$0xff]
                %395 = vst [vmem:[%s151 + $0x440] sm:$0xff] %v394
                %v396 = vld [vmem:[%s150 + $0x1960] sm:$0xff]
                %397 = vst [vmem:[%s151 + $0x448] sm:$0xff] %v396
                %v398 = vld [vmem:[%s150 + $0x1968] sm:$0xff]
                %399 = vst [vmem:[%s151 + $0x450] sm:$0xff] %v398
                %v400 = vld [vmem:[%s150 + $0x1a28] sm:$0xff]
                %401 = vst [vmem:[%s151 + $0x45c] sm:$0xff] %v400
                %v402 = vld [vmem:[%s150 + $0x1a30] sm:$0xff]
                %403 = vst [vmem:[%s151 + $0x464] sm:$0xff] %v402
                %v404 = vld [vmem:[%s150 + $0x1a38] sm:$0xff]
                %405 = vst [vmem:[%s151 + $0x46c] sm:$0xff] %v404
                %v406 = vld [vmem:[%s150 + $0x1a40] sm:$0xff]
                %407 = vst [vmem:[%s151 + $0x474] sm:$0xff] %v406
                %v408 = vld [vmem:[%s150 + $0x1b00] sm:$0xff]
                %409 = vst [vmem:[%s151 + $0x480] sm:$0xff] %v408
                %v410 = vld [vmem:[%s150 + $0x1b08] sm:$0xff]
                %411 = vst [vmem:[%s151 + $0x488] sm:$0xff] %v410
                %v412 = vld [vmem:[%s150 + $0x1b10] sm:$0xff]
                %413 = vst [vmem:[%s151 + $0x490] sm:$0xff] %v412
                %v414 = vld [vmem:[%s150 + $0x1b18] sm:$0xff]
                %415 = vst [vmem:[%s151 + $0x498] sm:$0xff] %v414
                %v416 = vld [vmem:[%s150 + $0x1bd8] sm:$0xff]
                %417 = vst [vmem:[%s151 + $0x4a4] sm:$0xff] %v416
                %v418 = vld [vmem:[%s150 + $0x1be0] sm:$0xff]
                %419 = vst [vmem:[%s151 + $0x4ac] sm:$0xff] %v418
                %v420 = vld [vmem:[%s150 + $0x1be8] sm:$0xff]
                %421 = vst [vmem:[%s151 + $0x4b4] sm:$0xff] %v420
                %v422 = vld [vmem:[%s150 + $0x1bf0] sm:$0xff]
                %423 = vst [vmem:[%s151 + $0x4bc] sm:$0xff] %v422
                %v424 = vld [vmem:[%s150 + $0x1cb0] sm:$0xff]
                %425 = vst [vmem:[%s151 + $0x4c8] sm:$0xff] %v424
                %v426 = vld [vmem:[%s150 + $0x1cb8] sm:$0xff]
                %427 = vst [vmem:[%s151 + $0x4d0] sm:$0xff] %v426
                %v428 = vld [vmem:[%s150 + $0x1cc0] sm:$0xff]
                %429 = vst [vmem:[%s151 + $0x4d8] sm:$0xff] %v428
                %v430 = vld [vmem:[%s150 + $0x1cc8] sm:$0xff]
                %431 = vst [vmem:[%s151 + $0x4e0] sm:$0xff] %v430
                %v432 = vld [vmem:[%s150 + $0x1d88] sm:$0xff]
                %433 = vst [vmem:[%s151 + $0x4ec] sm:$0xff] %v432
                %v434 = vld [vmem:[%s150 + $0x1d90] sm:$0xff]
                %435 = vst [vmem:[%s151 + $0x4f4] sm:$0xff] %v434
                %v436 = vld [vmem:[%s150 + $0x1d98] sm:$0xff]
                %437 = vst [vmem:[%s151 + $0x4fc] sm:$0xff] %v436
                %v438 = vld [vmem:[%s150 + $0x1da0] sm:$0xff]
                %439 = vst [vmem:[%s151 + $0x504] sm:$0xff] %v438
                %v440 = vld [vmem:[%s150 + $0x1e60] sm:$0xff]
                %441 = vst [vmem:[%s151 + $0x510] sm:$0xff] %v440
                %v442 = vld [vmem:[%s150 + $0x1e68] sm:$0xff]
                %443 = vst [vmem:[%s151 + $0x518] sm:$0xff] %v442
                %v444 = vld [vmem:[%s150 + $0x1e70] sm:$0xff]
                %445 = vst [vmem:[%s151 + $0x520] sm:$0xff] %v444
                %v446 = vld [vmem:[%s150 + $0x1e78] sm:$0xff]
                %447 = vst [vmem:[%s151 + $0x528] sm:$0xff] %v446
                %v448 = vld [vmem:[%s150 + $0x1f38] sm:$0xff]
                %449 = vst [vmem:[%s151 + $0x534] sm:$0xff] %v448
                %v450 = vld [vmem:[%s150 + $0x1f40] sm:$0xff]
                %451 = vst [vmem:[%s151 + $0x53c] sm:$0xff] %v450
                %v452 = vld [vmem:[%s150 + $0x1f48] sm:$0xff]
                %453 = vst [vmem:[%s151 + $0x544] sm:$0xff] %v452
                %v454 = vld [vmem:[%s150 + $0x1f50] sm:$0xff]
                %455 = vst [vmem:[%s151 + $0x54c] sm:$0xff] %v454
                %v456 = vld [vmem:[%s150 + $0x2010] sm:$0xff]
                %457 = vst [vmem:[%s151 + $0x558] sm:$0xff] %v456
                %v458 = vld [vmem:[%s150 + $0x2018] sm:$0xff]
                %459 = vst [vmem:[%s151 + $0x560] sm:$0xff] %v458
                %v460 = vld [vmem:[%s150 + $0x2020] sm:$0xff]
                %461 = vst [vmem:[%s151 + $0x568] sm:$0xff] %v460
                %v462 = vld [vmem:[%s150 + $0x2028] sm:$0xff]
                %463 = vst [vmem:[%s151 + $0x570] sm:$0xff] %v462
                %v464 = vld [vmem:[%s150 + $0x20e8] sm:$0xff]
                %465 = vst [vmem:[%s151 + $0x57c] sm:$0xff] %v464
                %v466 = vld [vmem:[%s150 + $0x20f0] sm:$0xff]
                %467 = vst [vmem:[%s151 + $0x584] sm:$0xff] %v466
                %v468 = vld [vmem:[%s150 + $0x20f8] sm:$0xff]
                %469 = vst [vmem:[%s151 + $0x58c] sm:$0xff] %v468
                %v470 = vld [vmem:[%s150 + $0x2100] sm:$0xff]
                %471 = vst [vmem:[%s151 + $0x594] sm:$0xff] %v470
                %v472 = vld [vmem:[%s150 + $0x21c0] sm:$0xff]
                %473 = vst [vmem:[%s151 + $0x5a0] sm:$0xff] %v472
                %v474 = vld [vmem:[%s150 + $0x21c8] sm:$0xff]
                %475 = vst [vmem:[%s151 + $0x5a8] sm:$0xff] %v474
                %v476 = vld [vmem:[%s150 + $0x21d0] sm:$0xff]
                %477 = vst [vmem:[%s151 + $0x5b0] sm:$0xff] %v476
                %v478 = vld [vmem:[%s150 + $0x21d8] sm:$0xff]
                %479 = vst [vmem:[%s151 + $0x5b8] sm:$0xff] %v478
              $region41: #{_lambda_.34} parent=35 // loop_footer
                %s149 = sadd.s32 1, %s145
              $region42: #{_lambda_.34} parent=35 // loop_footer_branch
                %144 = sbr.rel target = $region38
              $region43: #{_lambda_.34} parent=35 // loop_exit
                _
              %s481 = ssub.s32 16, 1
              loop: start=0, step=1, limit=1
              $region44: #{_lambda_.34} parent=35 // loop_pre_header
                _
              $region45: #{_lambda_.34} parent=35 // loop_header
                %s483 = sphi 0, %s487
                %p484 = scmp.ge.s32.totalorder %s483, 1
                %s488 = sphi %s142, %s142
                %s489 = sphi %s143, %s143
              $region46: #{_lambda_.34} parent=35 // loop_header_branch
                %486 = sbr.rel (%p484) target = $region50
              $region47: #{_lambda_.34} parent=35 // loop_body
                %v490 = vld [vmem:[%s488] sm:%s481]
                %491 = vst [vmem:[%s489] sm:%s481] %v490
                %v492 = vld [vmem:[%s488 + $0xd8] sm:%s481]
                %493 = vst [vmem:[%s489 + $0x24] sm:%s481] %v492
                %v494 = vld [vmem:[%s488 + $0x1b0] sm:%s481]
                %495 = vst [vmem:[%s489 + $0x48] sm:%s481] %v494
                %v496 = vld [vmem:[%s488 + $0x288] sm:%s481]
                %497 = vst [vmem:[%s489 + $0x6c] sm:%s481] %v496
                %v498 = vld [vmem:[%s488 + $0x360] sm:%s481]
                %499 = vst [vmem:[%s489 + $0x90] sm:%s481] %v498
                %v500 = vld [vmem:[%s488 + $0x438] sm:%s481]
                %501 = vst [vmem:[%s489 + $0xb4] sm:%s481] %v500
                %v502 = vld [vmem:[%s488 + $0x510] sm:%s481]
                %503 = vst [vmem:[%s489 + $0xd8] sm:%s481] %v502
                %v504 = vld [vmem:[%s488 + $0x5e8] sm:%s481]
                %505 = vst [vmem:[%s489 + $0xfc] sm:%s481] %v504
                %v506 = vld [vmem:[%s488 + $0x6c0] sm:%s481]
                %507 = vst [vmem:[%s489 + $0x120] sm:%s481] %v506
                %v508 = vld [vmem:[%s488 + $0x798] sm:%s481]
                %509 = vst [vmem:[%s489 + $0x144] sm:%s481] %v508
                %v510 = vld [vmem:[%s488 + $0x870] sm:%s481]
                %511 = vst [vmem:[%s489 + $0x168] sm:%s481] %v510
                %v512 = vld [vmem:[%s488 + $0x948] sm:%s481]
                %513 = vst [vmem:[%s489 + $0x18c] sm:%s481] %v512
                %v514 = vld [vmem:[%s488 + $0xa20] sm:%s481]
                %515 = vst [vmem:[%s489 + $0x1b0] sm:%s481] %v514
                %v516 = vld [vmem:[%s488 + $0xaf8] sm:%s481]
                %517 = vst [vmem:[%s489 + $0x1d4] sm:%s481] %v516
                %v518 = vld [vmem:[%s488 + $0xbd0] sm:%s481]
                %519 = vst [vmem:[%s489 + $0x1f8] sm:%s481] %v518
                %v520 = vld [vmem:[%s488 + $0xca8] sm:%s481]
                %521 = vst [vmem:[%s489 + $0x21c] sm:%s481] %v520
                %v522 = vld [vmem:[%s488 + $0xd80] sm:%s481]
                %523 = vst [vmem:[%s489 + $0x240] sm:%s481] %v522
                %v524 = vld [vmem:[%s488 + $0xe58] sm:%s481]
                %525 = vst [vmem:[%s489 + $0x264] sm:%s481] %v524
                %v526 = vld [vmem:[%s488 + $0xf30] sm:%s481]
                %527 = vst [vmem:[%s489 + $0x288] sm:%s481] %v526
                %v528 = vld [vmem:[%s488 + $0x1008] sm:%s481]
                %529 = vst [vmem:[%s489 + $0x2ac] sm:%s481] %v528
                %v530 = vld [vmem:[%s488 + $0x10e0] sm:%s481]
                %531 = vst [vmem:[%s489 + $0x2d0] sm:%s481] %v530
                %v532 = vld [vmem:[%s488 + $0x11b8] sm:%s481]
                %533 = vst [vmem:[%s489 + $0x2f4] sm:%s481] %v532
                %v534 = vld [vmem:[%s488 + $0x1290] sm:%s481]
                %535 = vst [vmem:[%s489 + $0x318] sm:%s481] %v534
                %v536 = vld [vmem:[%s488 + $0x1368] sm:%s481]
                %537 = vst [vmem:[%s489 + $0x33c] sm:%s481] %v536
                %v538 = vld [vmem:[%s488 + $0x1440] sm:%s481]
                %539 = vst [vmem:[%s489 + $0x360] sm:%s481] %v538
                %v540 = vld [vmem:[%s488 + $0x1518] sm:%s481]
                %541 = vst [vmem:[%s489 + $0x384] sm:%s481] %v540
                %v542 = vld [vmem:[%s488 + $0x15f0] sm:%s481]
                %543 = vst [vmem:[%s489 + $0x3a8] sm:%s481] %v542
                %v544 = vld [vmem:[%s488 + $0x16c8] sm:%s481]
                %545 = vst [vmem:[%s489 + $0x3cc] sm:%s481] %v544
                %v546 = vld [vmem:[%s488 + $0x17a0] sm:%s481]
                %547 = vst [vmem:[%s489 + $0x3f0] sm:%s481] %v546
                %v548 = vld [vmem:[%s488 + $0x1878] sm:%s481]
                %549 = vst [vmem:[%s489 + $0x414] sm:%s481] %v548
                %v550 = vld [vmem:[%s488 + $0x1950] sm:%s481]
                %551 = vst [vmem:[%s489 + $0x438] sm:%s481] %v550
                %v552 = vld [vmem:[%s488 + $0x1a28] sm:%s481]
                %553 = vst [vmem:[%s489 + $0x45c] sm:%s481] %v552
                %v554 = vld [vmem:[%s488 + $0x1b00] sm:%s481]
                %555 = vst [vmem:[%s489 + $0x480] sm:%s481] %v554
                %v556 = vld [vmem:[%s488 + $0x1bd8] sm:%s481]
                %557 = vst [vmem:[%s489 + $0x4a4] sm:%s481] %v556
                %v558 = vld [vmem:[%s488 + $0x1cb0] sm:%s481]
                %559 = vst [vmem:[%s489 + $0x4c8] sm:%s481] %v558
                %v560 = vld [vmem:[%s488 + $0x1d88] sm:%s481]
                %561 = vst [vmem:[%s489 + $0x4ec] sm:%s481] %v560
                %v562 = vld [vmem:[%s488 + $0x1e60] sm:%s481]
                %563 = vst [vmem:[%s489 + $0x510] sm:%s481] %v562
                %v564 = vld [vmem:[%s488 + $0x1f38] sm:%s481]
                %565 = vst [vmem:[%s489 + $0x534] sm:%s481] %v564
                %v566 = vld [vmem:[%s488 + $0x2010] sm:%s481]
                %567 = vst [vmem:[%s489 + $0x558] sm:%s481] %v566
                %v568 = vld [vmem:[%s488 + $0x20e8] sm:%s481]
                %569 = vst [vmem:[%s489 + $0x57c] sm:%s481] %v568
                %v570 = vld [vmem:[%s488 + $0x21c0] sm:%s481]
                %571 = vst [vmem:[%s489 + $0x5a0] sm:%s481] %v570
              $region48: #{_lambda_.34} parent=35 // loop_footer
                %s487 = sadd.s32 1, %s483
              $region49: #{_lambda_.34} parent=35 // loop_footer_branch
                %482 = sbr.rel target = $region45
              $region50: #{_lambda_.34} parent=35 // loop_exit
                _
            $region36: #{_lambda_.34} parent=31 // pred_fallthru
              _
          $region32: #{_lambda_.34} parent=27 // pred_fallthru
            _
          %572 = vnop
        $region28: #{_lambda_.34} parent=23 // pred_fallthru
          _
      $region24: #{_lambda_.34} parent=5 // pred_fallthru
        _
      %p573 = scmp.le.s32.totalorder 1, %s9
      %p574 = scmp.lt.s32.totalorder %s9, 7
      %p575 = pnand %p573, %p574
      %p576 = pneg %p575
      // Predicated region
      $region51: #{_lambda_.34} parent=5 // pred_check
        _
      $region52: #{_lambda_.34} parent=5 // pred_check_branch
        %578 = sbr.rel (%p575) target = $region54
      $region53: #{_lambda_.34} parent=5 // pred_region
        %s579 = ssub.s32 %s9, 1
        %s580 = sand.u32 %s43, 1
        %s581 = sand.u32 %s43, 1
        %s582 = smul.addr %s581, 1476
        %s583 = scalar_lea.vmem [#allocation2], %s582
        // Predicated region
        $region55: #{_lambda_.34} parent=53 // pred_check
          %p584 = pneg %p56
        $region56: #{_lambda_.34} parent=53 // pred_check_branch
          %586 = sbr.rel (%p584) target = $region58
        $region57: #{_lambda_.34} parent=53 // pred_region
          _
        $region58: #{_lambda_.34} parent=53 // pred_fallthru
          _
        %p587 = pneg %p30
        %p588 = pneg %p27
        %s589 = sand.u32 %s43, 1
        %s590 = sand.u32 %s43, 1
        %s591 = smul.addr %s590, 1476
        %s592 = scalar_lea.vmem [#allocation2], %s591
        %p593 = pneg %p56
        %p594 = pneg %p53
        %p595 = pneg %p77
        %p596 = pneg %p74
        %p597 = pneg %p103
        %p598 = pneg %p100
        %s599 = smul.u32 9, %s14
        %p600 = scmp.lt.s32.totalorder %s599, 53
        %s601 = scalar_select %p600, %s599, 53
        %s602 = smul.addr %s601, 4
        %s603 = scalar_lea.vmem %s3, %s602
        %s604 = smul.u32 9, %s14
        %s605 = smul.u32 9, %s14
        %p606 = scmp.lt.s32.totalorder %s605, 53
        %s607 = scalar_select %p606, %s605, 53
        %s608 = smul.addr %s607, 4
        %s609 = scalar_lea.vmem %s3, %s608
        %s610 = smul.u32 9, %s14
        %v612 = vld [vmem:[%s0] sm:$0x3f]
        %v613 = vld [vmem:[%s583] sm:$0xff]
        %v614 = vld [vmem:[%s583 + $0x8] sm:$0xff]
        %v615 = vld [vmem:[%s583 + $0x10] sm:$0xff]
        %v616 = vld [vmem:[%s583 + $0x18] sm:$0xff]
        %v617 = vld [vmem:[%s583 + $0x20] sm:$0xf]
        %v618 = vld [vmem:[%s583 + $0x24] sm:$0xff]
        %v619 = vld [vmem:[%s583 + $0x2c] sm:$0xff]
        %v620 = vld [vmem:[%s583 + $0x34] sm:$0xff]
        %v621 = vld [vmem:[%s583 + $0x3c] sm:$0xff]
        %v622 = vld [vmem:[%s583 + $0x44] sm:$0xf]
        %v623 = vld [vmem:[%s583 + $0x48] sm:$0xff]
        %v624 = vld [vmem:[%s583 + $0x50] sm:$0xff]
        %v625 = vld [vmem:[%s583 + $0x58] sm:$0xff]
        %v626 = vld [vmem:[%s583 + $0x60] sm:$0xff]
        %v627 = vld [vmem:[%s583 + $0x68] sm:$0xf]
        %v628 = vld [vmem:[%s583 + $0x6c] sm:$0xff]
        %v629 = vld [vmem:[%s583 + $0x74] sm:$0xff]
        %v630 = vld [vmem:[%s583 + $0x7c] sm:$0xff]
        %v631 = vld [vmem:[%s583 + $0x84] sm:$0xff]
        %v632 = vld [vmem:[%s583 + $0x8c] sm:$0xf]
        %v633 = vld [vmem:[%s583 + $0x90] sm:$0xff]
        %v634 = vld [vmem:[%s583 + $0x98] sm:$0xff]
        %v635 = vld [vmem:[%s583 + $0xa0] sm:$0xff]
        %v636 = vld [vmem:[%s583 + $0xa8] sm:$0xff]
        %v637 = vld [vmem:[%s583 + $0xb0] sm:$0xf]
        %v638 = vld [vmem:[%s583 + $0xb4] sm:$0xff]
        %v639 = vld [vmem:[%s583 + $0xbc] sm:$0xff]
        %v640 = vld [vmem:[%s583 + $0xc4] sm:$0xff]
        %v641 = vld [vmem:[%s583 + $0xcc] sm:$0xff]
        %v642 = vld [vmem:[%s583 + $0xd4] sm:$0xf]
        %v643 = vld [vmem:[%s583 + $0xd8] sm:$0xff]
        %v644 = vld [vmem:[%s583 + $0xe0] sm:$0xff]
        %v645 = vld [vmem:[%s583 + $0xe8] sm:$0xff]
        %v646 = vld [vmem:[%s583 + $0xf0] sm:$0xff]
        %v647 = vld [vmem:[%s583 + $0xf8] sm:$0xf]
        %v648 = vld [vmem:[%s583 + $0xfc] sm:$0xff]
        %v649 = vld [vmem:[%s583 + $0x104] sm:$0xff]
        %v650 = vld [vmem:[%s583 + $0x10c] sm:$0xff]
        %v651 = vld [vmem:[%s583 + $0x114] sm:$0xff]
        %v652 = vld [vmem:[%s583 + $0x11c] sm:$0xf]
        %v653 = vld [vmem:[%s583 + $0x120] sm:$0xff]
        %v654 = vld [vmem:[%s583 + $0x128] sm:$0xff]
        %v655 = vld [vmem:[%s583 + $0x130] sm:$0xff]
        %v656 = vld [vmem:[%s583 + $0x138] sm:$0xff]
        %v657 = vld [vmem:[%s583 + $0x140] sm:$0xf]
        %v658 = vld [vmem:[%s583 + $0x144] sm:$0xff]
        %v659 = vld [vmem:[%s583 + $0x14c] sm:$0xff]
        %v660 = vld [vmem:[%s583 + $0x154] sm:$0xff]
        %v661 = vld [vmem:[%s583 + $0x15c] sm:$0xff]
        %v662 = vld [vmem:[%s583 + $0x164] sm:$0xf]
        %v663 = vld [vmem:[%s583 + $0x168] sm:$0xff]
        %v664 = vld [vmem:[%s583 + $0x170] sm:$0xff]
        %v665 = vld [vmem:[%s583 + $0x178] sm:$0xff]
        %v666 = vld [vmem:[%s583 + $0x180] sm:$0xff]
        %v667 = vld [vmem:[%s583 + $0x188] sm:$0xf]
        %v668 = vld [vmem:[%s583 + $0x18c] sm:$0xff]
        %v669 = vld [vmem:[%s583 + $0x194] sm:$0xff]
        %v670 = vld [vmem:[%s583 + $0x19c] sm:$0xff]
        %v671 = vld [vmem:[%s583 + $0x1a4] sm:$0xff]
        %v672 = vld [vmem:[%s583 + $0x1ac] sm:$0xf]
        %v673 = vld [vmem:[%s583 + $0x1b0] sm:$0xff]
        %v674 = vld [vmem:[%s583 + $0x1b8] sm:$0xff]
        %v675 = vld [vmem:[%s583 + $0x1c0] sm:$0xff]
        %v676 = vld [vmem:[%s583 + $0x1c8] sm:$0xff]
        %v677 = vld [vmem:[%s583 + $0x1d0] sm:$0xf]
        %v678 = vld [vmem:[%s583 + $0x1d4] sm:$0xff]
        %v679 = vld [vmem:[%s583 + $0x1dc] sm:$0xff]
        %v680 = vld [vmem:[%s583 + $0x1e4] sm:$0xff]
        %v681 = vld [vmem:[%s583 + $0x1ec] sm:$0xff]
        %v682 = vld [vmem:[%s583 + $0x1f4] sm:$0xf]
        %v683 = vld [vmem:[%s583 + $0x1f8] sm:$0xff]
        %v684 = vld [vmem:[%s583 + $0x200] sm:$0xff]
        %v685 = vld [vmem:[%s583 + $0x208] sm:$0xff]
        %v686 = vld [vmem:[%s583 + $0x210] sm:$0xff]
        %v687 = vld [vmem:[%s583 + $0x218] sm:$0xf]
        %v688 = vld [vmem:[%s583 + $0x21c] sm:$0xff]
        %v689 = vld [vmem:[%s583 + $0x224] sm:$0xff]
        %v690 = vld [vmem:[%s583 + $0x22c] sm:$0xff]
        %v691 = vld [vmem:[%s583 + $0x234] sm:$0xff]
        %v692 = vld [vmem:[%s583 + $0x23c] sm:$0xf]
        %v693 = vld [vmem:[%s583 + $0x240] sm:$0xff]
        %v694 = vld [vmem:[%s583 + $0x248] sm:$0xff]
        %v695 = vld [vmem:[%s583 + $0x250] sm:$0xff]
        %v696 = vld [vmem:[%s583 + $0x258] sm:$0xff]
        %v697 = vld [vmem:[%s583 + $0x260] sm:$0xf]
        %v698 = vld [vmem:[%s583 + $0x264] sm:$0xff]
        %v699 = vld [vmem:[%s583 + $0x26c] sm:$0xff]
        %v700 = vld [vmem:[%s583 + $0x274] sm:$0xff]
        %v701 = vld [vmem:[%s583 + $0x27c] sm:$0xff]
        %v702 = vld [vmem:[%s583 + $0x284] sm:$0xf]
        %v703 = vld [vmem:[%s583 + $0x288] sm:$0xff]
        %v704 = vld [vmem:[%s583 + $0x290] sm:$0xff]
        %v705 = vld [vmem:[%s583 + $0x298] sm:$0xff]
        %v706 = vld [vmem:[%s583 + $0x2a0] sm:$0xff]
        %v707 = vld [vmem:[%s583 + $0x2a8] sm:$0xf]
        %v708 = vld [vmem:[%s583 + $0x2ac] sm:$0xff]
        %v709 = vld [vmem:[%s583 + $0x2b4] sm:$0xff]
        %v710 = vld [vmem:[%s583 + $0x2bc] sm:$0xff]
        %v711 = vld [vmem:[%s583 + $0x2c4] sm:$0xff]
        %v712 = vld [vmem:[%s583 + $0x2cc] sm:$0xf]
        %v713 = vld [vmem:[%s583 + $0x2d0] sm:$0xff]
        %v714 = vld [vmem:[%s583 + $0x2d8] sm:$0xff]
        %v715 = vld [vmem:[%s583 + $0x2e0] sm:$0xff]
        %v716 = vld [vmem:[%s583 + $0x2e8] sm:$0xff]
        %v717 = vld [vmem:[%s583 + $0x2f0] sm:$0xf]
        %v718 = vld [vmem:[%s583 + $0x2f4] sm:$0xff]
        %v719 = vld [vmem:[%s583 + $0x2fc] sm:$0xff]
        %v720 = vld [vmem:[%s583 + $0x304] sm:$0xff]
        %v721 = vld [vmem:[%s583 + $0x30c] sm:$0xff]
        %v722 = vld [vmem:[%s583 + $0x314] sm:$0xf]
        %v723 = vld [vmem:[%s583 + $0x318] sm:$0xff]
        %v724 = vld [vmem:[%s583 + $0x320] sm:$0xff]
        %v725 = vld [vmem:[%s583 + $0x328] sm:$0xff]
        %v726 = vld [vmem:[%s583 + $0x330] sm:$0xff]
        %v727 = vld [vmem:[%s583 + $0x338] sm:$0xf]
        %v728 = vld [vmem:[%s583 + $0x33c] sm:$0xff]
        %v729 = vld [vmem:[%s583 + $0x344] sm:$0xff]
        %v730 = vld [vmem:[%s583 + $0x34c] sm:$0xff]
        %v731 = vld [vmem:[%s583 + $0x354] sm:$0xff]
        %v732 = vld [vmem:[%s583 + $0x35c] sm:$0xf]
        %v733 = vld [vmem:[%s583 + $0x360] sm:$0xff]
        %v734 = vld [vmem:[%s583 + $0x368] sm:$0xff]
        %v735 = vld [vmem:[%s583 + $0x370] sm:$0xff]
        %v736 = vld [vmem:[%s583 + $0x378] sm:$0xff]
        %v737 = vld [vmem:[%s583 + $0x380] sm:$0xf]
        %v738 = vld [vmem:[%s583 + $0x384] sm:$0xff]
        %v739 = vld [vmem:[%s583 + $0x38c] sm:$0xff]
        %v740 = vld [vmem:[%s583 + $0x394] sm:$0xff]
        %v741 = vld [vmem:[%s583 + $0x39c] sm:$0xff]
        %v742 = vld [vmem:[%s583 + $0x3a4] sm:$0xf]
        %v743 = vld [vmem:[%s583 + $0x3a8] sm:$0xff]
        %v744 = vld [vmem:[%s583 + $0x3b0] sm:$0xff]
        %v745 = vld [vmem:[%s583 + $0x3b8] sm:$0xff]
        %v746 = vld [vmem:[%s583 + $0x3c0] sm:$0xff]
        %v747 = vld [vmem:[%s583 + $0x3c8] sm:$0xf]
        %v748 = vld [vmem:[%s583 + $0x3cc] sm:$0xff]
        %v749 = vld [vmem:[%s583 + $0x3d4] sm:$0xff]
        %v750 = vld [vmem:[%s583 + $0x3dc] sm:$0xff]
        %v751 = vld [vmem:[%s583 + $0x3e4] sm:$0xff]
        %v752 = vld [vmem:[%s583 + $0x3ec] sm:$0xf]
        %v753 = vld [vmem:[%s583 + $0x3f0] sm:$0xff]
        %v754 = vld [vmem:[%s583 + $0x3f8] sm:$0xff]
        %v755 = vld [vmem:[%s583 + $0x400] sm:$0xff]
        %v756 = vld [vmem:[%s583 + $0x408] sm:$0xff]
        %v757 = vld [vmem:[%s583 + $0x410] sm:$0xf]
        %v758 = vld [vmem:[%s583 + $0x414] sm:$0xff]
        %v759 = vld [vmem:[%s583 + $0x41c] sm:$0xff]
        %v760 = vld [vmem:[%s583 + $0x424] sm:$0xff]
        %v761 = vld [vmem:[%s583 + $0x42c] sm:$0xff]
        %v762 = vld [vmem:[%s583 + $0x434] sm:$0xf]
        %v763 = vld [vmem:[%s583 + $0x438] sm:$0xff]
        %v764 = vld [vmem:[%s583 + $0x440] sm:$0xff]
        %v765 = vld [vmem:[%s583 + $0x448] sm:$0xff]
        %v766 = vld [vmem:[%s583 + $0x450] sm:$0xff]
        %v767 = vld [vmem:[%s583 + $0x458] sm:$0xf]
        %v768 = vld [vmem:[%s583 + $0x45c] sm:$0xff]
        %v769 = vld [vmem:[%s583 + $0x464] sm:$0xff]
        %v770 = vld [vmem:[%s583 + $0x46c] sm:$0xff]
        %v771 = vld [vmem:[%s583 + $0x474] sm:$0xff]
        %v772 = vld [vmem:[%s583 + $0x47c] sm:$0xf]
        %v773 = vld [vmem:[%s583 + $0x480] sm:$0xff]
        %v774 = vld [vmem:[%s583 + $0x488] sm:$0xff]
        %v775 = vld [vmem:[%s583 + $0x490] sm:$0xff]
        %v776 = vld [vmem:[%s583 + $0x498] sm:$0xff]
        %v777 = vld [vmem:[%s583 + $0x4a0] sm:$0xf]
        %v778 = vld [vmem:[%s583 + $0x4a4] sm:$0xff]
        %v779 = vld [vmem:[%s583 + $0x4ac] sm:$0xff]
        %v780 = vld [vmem:[%s583 + $0x4b4] sm:$0xff]
        %v781 = vld [vmem:[%s583 + $0x4bc] sm:$0xff]
        %v782 = vld [vmem:[%s583 + $0x4c4] sm:$0xf]
        %v783 = vld [vmem:[%s583 + $0x4c8] sm:$0xff]
        %v784 = vld [vmem:[%s583 + $0x4d0] sm:$0xff]
        %v785 = vld [vmem:[%s583 + $0x4d8] sm:$0xff]
        %v786 = vld [vmem:[%s583 + $0x4e0] sm:$0xff]
        %v787 = vld [vmem:[%s583 + $0x4e8] sm:$0xf]
        %v788 = vld [vmem:[%s583 + $0x4ec] sm:$0xff]
        %v789 = vld [vmem:[%s583 + $0x4f4] sm:$0xff]
        %v790 = vld [vmem:[%s583 + $0x4fc] sm:$0xff]
        %v791 = vld [vmem:[%s583 + $0x504] sm:$0xff]
        %v792 = vld [vmem:[%s583 + $0x50c] sm:$0xf]
        %v793 = vld [vmem:[%s583 + $0x510] sm:$0xff]
        %v794 = vld [vmem:[%s583 + $0x518] sm:$0xff]
        %v795 = vld [vmem:[%s583 + $0x520] sm:$0xff]
        %v796 = vld [vmem:[%s583 + $0x528] sm:$0xff]
        %v797 = vld [vmem:[%s583 + $0x530] sm:$0xf]
        %v798 = vld [vmem:[%s583 + $0x534] sm:$0xff]
        %v799 = vld [vmem:[%s583 + $0x53c] sm:$0xff]
        %v800 = vld [vmem:[%s583 + $0x544] sm:$0xff]
        %v801 = vld [vmem:[%s583 + $0x54c] sm:$0xff]
        %v802 = vld [vmem:[%s583 + $0x554] sm:$0xf]
        %v803 = vld [vmem:[%s583 + $0x558] sm:$0xff]
        %v804 = vld [vmem:[%s583 + $0x560] sm:$0xff]
        %v805 = vld [vmem:[%s583 + $0x568] sm:$0xff]
        %v806 = vld [vmem:[%s583 + $0x570] sm:$0xff]
        %v807 = vld [vmem:[%s583 + $0x578] sm:$0xf]
        %v808 = vld [vmem:[%s583 + $0x57c] sm:$0xff]
        %v809 = vld [vmem:[%s583 + $0x584] sm:$0xff]
        %v810 = vld [vmem:[%s583 + $0x58c] sm:$0xff]
        %v811 = vld [vmem:[%s583 + $0x594] sm:$0xff]
        %v812 = vld [vmem:[%s583 + $0x59c] sm:$0xf]
        %v813 = vld [vmem:[%s583 + $0x5a0] sm:$0x33]
        %v814 = vld [vmem:[%s583 + $0x5a8] sm:$0x33]
        %v815 = vld [vmem:[%s583 + $0x5b0] sm:$0x33]
        %v816 = vld [vmem:[%s583 + $0x5b8] sm:$0x33]
        %v817 = vld [vmem:[%s583 + $0x5c0] sm:$0x3]
        %v818 = vld [vmem:[%s2] sm:$0xf]
        %820 = vset.pattern.permute.xlu0 0
        %821 = vperm.xlu0 %820, %v818
        %v822 = vpop.permute.xlu0 %821
        %825 = vst [vmem:[#allocation1] ss:$4 sm:$0xff] %v612
        %v826 = vld.sshfl [vmem:[#allocation1] sm:$0xff pattern:$0x73625140]
        %v827 = vld.sshfl [vmem:[#allocation1 + $0x8] sm:$0xff pattern:$0x73625140]
        %v828 = vld.sshfl [vmem:[#allocation1 + $0x10] sm:$0xff pattern:$0x73625140]
        %v1036 = vunpack.c.l.b16 %v613
        %v1037 = vunpack.c.h.b16 %v613
        %v1038 = vunpack.c.l.b16 %v614
        %v1039 = vunpack.c.h.b16 %v614
        %v1040 = vunpack.c.l.b16 %v615
        %v1041 = vunpack.c.h.b16 %v615
        %v1042 = vunpack.c.l.b16 %v616
        %v1043 = vunpack.c.h.b16 %v616
        %v1044 = vunpack.c.l.b16 %v617
        %v1045 = vunpack.c.l.b16 %v618
        %v1046 = vunpack.c.h.b16 %v618
        %v1047 = vunpack.c.l.b16 %v619
        %v1048 = vunpack.c.h.b16 %v619
        %v1049 = vunpack.c.l.b16 %v620
        %v1050 = vunpack.c.h.b16 %v620
        %v1051 = vunpack.c.l.b16 %v621
        %v1052 = vunpack.c.h.b16 %v621
        %v1053 = vunpack.c.l.b16 %v622
        %v1054 = vunpack.c.l.b16 %v623
        %v1055 = vunpack.c.h.b16 %v623
        %v1056 = vunpack.c.l.b16 %v624
        %v1057 = vunpack.c.h.b16 %v624
        %v1058 = vunpack.c.l.b16 %v625
        %v1059 = vunpack.c.h.b16 %v625
        %v1060 = vunpack.c.l.b16 %v626
        %v1061 = vunpack.c.h.b16 %v626
        %v1062 = vunpack.c.l.b16 %v627
        %v1063 = vunpack.c.l.b16 %v628
        %v1064 = vunpack.c.h.b16 %v628
        %v1065 = vunpack.c.l.b16 %v629
        %v1066 = vunpack.c.h.b16 %v629
        %v1067 = vunpack.c.l.b16 %v630
        %v1068 = vunpack.c.h.b16 %v630
        %v1069 = vunpack.c.l.b16 %v631
        %v1070 = vunpack.c.h.b16 %v631
        %v1071 = vunpack.c.l.b16 %v632
        %v1072 = vunpack.c.l.b16 %v633
        %v1073 = vunpack.c.h.b16 %v633
        %v1074 = vunpack.c.l.b16 %v634
        %v1075 = vunpack.c.h.b16 %v634
        %v1076 = vunpack.c.l.b16 %v635
        %v1077 = vunpack.c.h.b16 %v635
        %v1078 = vunpack.c.l.b16 %v636
        %v1079 = vunpack.c.h.b16 %v636
        %v1080 = vunpack.c.l.b16 %v637
        %v1081 = vunpack.c.l.b16 %v638
        %v1082 = vunpack.c.h.b16 %v638
        %v1083 = vunpack.c.l.b16 %v639
        %v1084 = vunpack.c.h.b16 %v639
        %v1085 = vunpack.c.l.b16 %v640
        %v1086 = vunpack.c.h.b16 %v640
        %v1087 = vunpack.c.l.b16 %v641
        %v1088 = vunpack.c.h.b16 %v641
        %v1089 = vunpack.c.l.b16 %v642
        %v1090 = vunpack.c.l.b16 %v643
        %v1091 = vunpack.c.h.b16 %v643
        %v1092 = vunpack.c.l.b16 %v644
        %v1093 = vunpack.c.h.b16 %v644
        %v1094 = vunpack.c.l.b16 %v645
        %v1095 = vunpack.c.h.b16 %v645
        %v1096 = vunpack.c.l.b16 %v646
        %v1097 = vunpack.c.h.b16 %v646
        %v1098 = vunpack.c.l.b16 %v647
        %v1099 = vunpack.c.l.b16 %v648
        %v1100 = vunpack.c.h.b16 %v648
        %v1101 = vunpack.c.l.b16 %v649
        %v1102 = vunpack.c.h.b16 %v649
        %v1103 = vunpack.c.l.b16 %v650
        %v1104 = vunpack.c.h.b16 %v650
        %v1105 = vunpack.c.l.b16 %v651
        %v1106 = vunpack.c.h.b16 %v651
        %v1107 = vunpack.c.l.b16 %v652
        %v1108 = vunpack.c.l.b16 %v653
        %v1109 = vunpack.c.h.b16 %v653
        %v1110 = vunpack.c.l.b16 %v654
        %v1111 = vunpack.c.h.b16 %v654
        %v1112 = vunpack.c.l.b16 %v655
        %v1113 = vunpack.c.h.b16 %v655
        %v1114 = vunpack.c.l.b16 %v656
        %v1115 = vunpack.c.h.b16 %v656
        %v1116 = vunpack.c.l.b16 %v657
        %v1117 = vunpack.c.l.b16 %v658
        %v1118 = vunpack.c.h.b16 %v658
        %v1119 = vunpack.c.l.b16 %v659
        %v1120 = vunpack.c.h.b16 %v659
        %v1121 = vunpack.c.l.b16 %v660
        %v1122 = vunpack.c.h.b16 %v660
        %v1123 = vunpack.c.l.b16 %v661
        %v1124 = vunpack.c.h.b16 %v661
        %v1125 = vunpack.c.l.b16 %v662
        %v1126 = vunpack.c.l.b16 %v663
        %v1127 = vunpack.c.h.b16 %v663
        %v1128 = vunpack.c.l.b16 %v664
        %v1129 = vunpack.c.h.b16 %v664
        %v1130 = vunpack.c.l.b16 %v665
        %v1131 = vunpack.c.h.b16 %v665
        %v1132 = vunpack.c.l.b16 %v666
        %v1133 = vunpack.c.h.b16 %v666
        %v1134 = vunpack.c.l.b16 %v667
        %v1135 = vunpack.c.l.b16 %v668
        %v1136 = vunpack.c.h.b16 %v668
        %v1137 = vunpack.c.l.b16 %v669
        %v1138 = vunpack.c.h.b16 %v669
        %v1139 = vunpack.c.l.b16 %v670
        %v1140 = vunpack.c.h.b16 %v670
        %v1141 = vunpack.c.l.b16 %v671
        %v1142 = vunpack.c.h.b16 %v671
        %v1143 = vunpack.c.l.b16 %v672
        %v1144 = vunpack.c.l.b16 %v673
        %v1145 = vunpack.c.h.b16 %v673
        %v1146 = vunpack.c.l.b16 %v674
        %v1147 = vunpack.c.h.b16 %v674
        %v1148 = vunpack.c.l.b16 %v675
        %v1149 = vunpack.c.h.b16 %v675
        %v1150 = vunpack.c.l.b16 %v676
        %v1151 = vunpack.c.h.b16 %v676
        %v1152 = vunpack.c.l.b16 %v677
        %v1153 = vunpack.c.l.b16 %v678
        %v1154 = vunpack.c.h.b16 %v678
        %v1155 = vunpack.c.l.b16 %v679
        %v1156 = vunpack.c.h.b16 %v679
        %v1157 = vunpack.c.l.b16 %v680
        %v1158 = vunpack.c.h.b16 %v680
        %v1159 = vunpack.c.l.b16 %v681
        %v1160 = vunpack.c.h.b16 %v681
        %v1161 = vunpack.c.l.b16 %v682
        %v1162 = vunpack.c.l.b16 %v683
        %v1163 = vunpack.c.h.b16 %v683
        %v1164 = vunpack.c.l.b16 %v684
        %v1165 = vunpack.c.h.b16 %v684
        %v1166 = vunpack.c.l.b16 %v685
        %v1167 = vunpack.c.h.b16 %v685
        %v1168 = vunpack.c.l.b16 %v686
        %v1169 = vunpack.c.h.b16 %v686
        %v1170 = vunpack.c.l.b16 %v687
        %v1171 = vunpack.c.l.b16 %v688
        %v1172 = vunpack.c.h.b16 %v688
        %v1173 = vunpack.c.l.b16 %v689
        %v1174 = vunpack.c.h.b16 %v689
        %v1175 = vunpack.c.l.b16 %v690
        %v1176 = vunpack.c.h.b16 %v690
        %v1177 = vunpack.c.l.b16 %v691
        %v1178 = vunpack.c.h.b16 %v691
        %v1179 = vunpack.c.l.b16 %v692
        %v1180 = vunpack.c.l.b16 %v693
        %v1181 = vunpack.c.h.b16 %v693
        %v1182 = vunpack.c.l.b16 %v694
        %v1183 = vunpack.c.h.b16 %v694
        %v1184 = vunpack.c.l.b16 %v695
        %v1185 = vunpack.c.h.b16 %v695
        %v1186 = vunpack.c.l.b16 %v696
        %v1187 = vunpack.c.h.b16 %v696
        %v1188 = vunpack.c.l.b16 %v697
        %v1189 = vunpack.c.l.b16 %v698
        %v1190 = vunpack.c.h.b16 %v698
        %v1191 = vunpack.c.l.b16 %v699
        %v1192 = vunpack.c.h.b16 %v699
        %v1193 = vunpack.c.l.b16 %v700
        %v1194 = vunpack.c.h.b16 %v700
        %v1195 = vunpack.c.l.b16 %v701
        %v1196 = vunpack.c.h.b16 %v701
        %v1197 = vunpack.c.l.b16 %v702
        %v1198 = vunpack.c.l.b16 %v703
        %v1199 = vunpack.c.h.b16 %v703
        %v1200 = vunpack.c.l.b16 %v704
        %v1201 = vunpack.c.h.b16 %v704
        %v1202 = vunpack.c.l.b16 %v705
        %v1203 = vunpack.c.h.b16 %v705
        %v1204 = vunpack.c.l.b16 %v706
        %v1205 = vunpack.c.h.b16 %v706
        %v1206 = vunpack.c.l.b16 %v707
        %v1207 = vunpack.c.l.b16 %v708
        %v1208 = vunpack.c.h.b16 %v708
        %v1209 = vunpack.c.l.b16 %v709
        %v1210 = vunpack.c.h.b16 %v709
        %v1211 = vunpack.c.l.b16 %v710
        %v1212 = vunpack.c.h.b16 %v710
        %v1213 = vunpack.c.l.b16 %v711
        %v1214 = vunpack.c.h.b16 %v711
        %v1215 = vunpack.c.l.b16 %v712
        %v1216 = vunpack.c.l.b16 %v713
        %v1217 = vunpack.c.h.b16 %v713
        %v1218 = vunpack.c.l.b16 %v714
        %v1219 = vunpack.c.h.b16 %v714
        %v1220 = vunpack.c.l.b16 %v715
        %v1221 = vunpack.c.h.b16 %v715
        %v1222 = vunpack.c.l.b16 %v716
        %v1223 = vunpack.c.h.b16 %v716
        %v1224 = vunpack.c.l.b16 %v717
        %v1225 = vunpack.c.l.b16 %v718
        %v1226 = vunpack.c.h.b16 %v718
        %v1227 = vunpack.c.l.b16 %v719
        %v1228 = vunpack.c.h.b16 %v719
        %v1229 = vunpack.c.l.b16 %v720
        %v1230 = vunpack.c.h.b16 %v720
        %v1231 = vunpack.c.l.b16 %v721
        %v1232 = vunpack.c.h.b16 %v721
        %v1233 = vunpack.c.l.b16 %v722
        %v1234 = vunpack.c.l.b16 %v723
        %v1235 = vunpack.c.h.b16 %v723
        %v1236 = vunpack.c.l.b16 %v724
        %v1237 = vunpack.c.h.b16 %v724
        %v1238 = vunpack.c.l.b16 %v725
        %v1239 = vunpack.c.h.b16 %v725
        %v1240 = vunpack.c.l.b16 %v726
        %v1241 = vunpack.c.h.b16 %v726
        %v1242 = vunpack.c.l.b16 %v727
        %v1243 = vunpack.c.l.b16 %v728
        %v1244 = vunpack.c.h.b16 %v728
        %v1245 = vunpack.c.l.b16 %v729
        %v1246 = vunpack.c.h.b16 %v729
        %v1247 = vunpack.c.l.b16 %v730
        %v1248 = vunpack.c.h.b16 %v730
        %v1249 = vunpack.c.l.b16 %v731
        %v1250 = vunpack.c.h.b16 %v731
        %v1251 = vunpack.c.l.b16 %v732
        %v1252 = vunpack.c.l.b16 %v733
        %v1253 = vunpack.c.h.b16 %v733
        %v1254 = vunpack.c.l.b16 %v734
        %v1255 = vunpack.c.h.b16 %v734
        %v1256 = vunpack.c.l.b16 %v735
        %v1257 = vunpack.c.h.b16 %v735
        %v1258 = vunpack.c.l.b16 %v736
        %v1259 = vunpack.c.h.b16 %v736
        %v1260 = vunpack.c.l.b16 %v737
        %v1261 = vunpack.c.l.b16 %v738
        %v1262 = vunpack.c.h.b16 %v738
        %v1263 = vunpack.c.l.b16 %v739
        %v1264 = vunpack.c.h.b16 %v739
        %v1265 = vunpack.c.l.b16 %v740
        %v1266 = vunpack.c.h.b16 %v740
        %v1267 = vunpack.c.l.b16 %v741
        %v1268 = vunpack.c.h.b16 %v741
        %v1269 = vunpack.c.l.b16 %v742
        %v1270 = vunpack.c.l.b16 %v743
        %v1271 = vunpack.c.h.b16 %v743
        %v1272 = vunpack.c.l.b16 %v744
        %v1273 = vunpack.c.h.b16 %v744
        %v1274 = vunpack.c.l.b16 %v745
        %v1275 = vunpack.c.h.b16 %v745
        %v1276 = vunpack.c.l.b16 %v746
        %v1277 = vunpack.c.h.b16 %v746
        %v1278 = vunpack.c.l.b16 %v747
        %v1279 = vunpack.c.l.b16 %v748
        %v1280 = vunpack.c.h.b16 %v748
        %v1281 = vunpack.c.l.b16 %v749
        %v1282 = vunpack.c.h.b16 %v749
        %v1283 = vunpack.c.l.b16 %v750
        %v1284 = vunpack.c.h.b16 %v750
        %v1285 = vunpack.c.l.b16 %v751
        %v1286 = vunpack.c.h.b16 %v751
        %v1287 = vunpack.c.l.b16 %v752
        %v1288 = vunpack.c.l.b16 %v753
        %v1289 = vunpack.c.h.b16 %v753
        %v1290 = vunpack.c.l.b16 %v754
        %v1291 = vunpack.c.h.b16 %v754
        %v1292 = vunpack.c.l.b16 %v755
        %v1293 = vunpack.c.h.b16 %v755
        %v1294 = vunpack.c.l.b16 %v756
        %v1295 = vunpack.c.h.b16 %v756
        %v1296 = vunpack.c.l.b16 %v757
        %v1297 = vunpack.c.l.b16 %v758
        %v1298 = vunpack.c.h.b16 %v758
        %v1299 = vunpack.c.l.b16 %v759
        %v1300 = vunpack.c.h.b16 %v759
        %v1301 = vunpack.c.l.b16 %v760
        %v1302 = vunpack.c.h.b16 %v760
        %v1303 = vunpack.c.l.b16 %v761
        %v1304 = vunpack.c.h.b16 %v761
        %v1305 = vunpack.c.l.b16 %v762
        %v1306 = vunpack.c.l.b16 %v763
        %v1307 = vunpack.c.h.b16 %v763
        %v1308 = vunpack.c.l.b16 %v764
        %v1309 = vunpack.c.h.b16 %v764
        %v1310 = vunpack.c.l.b16 %v765
        %v1311 = vunpack.c.h.b16 %v765
        %v1312 = vunpack.c.l.b16 %v766
        %v1313 = vunpack.c.h.b16 %v766
        %v1314 = vunpack.c.l.b16 %v767
        %v1315 = vunpack.c.l.b16 %v768
        %v1316 = vunpack.c.h.b16 %v768
        %v1317 = vunpack.c.l.b16 %v769
        %v1318 = vunpack.c.h.b16 %v769
        %v1319 = vunpack.c.l.b16 %v770
        %v1320 = vunpack.c.h.b16 %v770
        %v1321 = vunpack.c.l.b16 %v771
        %v1322 = vunpack.c.h.b16 %v771
        %v1323 = vunpack.c.l.b16 %v772
        %v1324 = vunpack.c.l.b16 %v773
        %v1325 = vunpack.c.h.b16 %v773
        %v1326 = vunpack.c.l.b16 %v774
        %v1327 = vunpack.c.h.b16 %v774
        %v1328 = vunpack.c.l.b16 %v775
        %v1329 = vunpack.c.h.b16 %v775
        %v1330 = vunpack.c.l.b16 %v776
        %v1331 = vunpack.c.h.b16 %v776
        %v1332 = vunpack.c.l.b16 %v777
        %v1333 = vunpack.c.l.b16 %v778
        %v1334 = vunpack.c.h.b16 %v778
        %v1335 = vunpack.c.l.b16 %v779
        %v1336 = vunpack.c.h.b16 %v779
        %v1337 = vunpack.c.l.b16 %v780
        %v1338 = vunpack.c.h.b16 %v780
        %v1339 = vunpack.c.l.b16 %v781
        %v1340 = vunpack.c.h.b16 %v781
        %v1341 = vunpack.c.l.b16 %v782
        %v1342 = vunpack.c.l.b16 %v783
        %v1343 = vunpack.c.h.b16 %v783
        %v1344 = vunpack.c.l.b16 %v784
        %v1345 = vunpack.c.h.b16 %v784
        %v1346 = vunpack.c.l.b16 %v785
        %v1347 = vunpack.c.h.b16 %v785
        %v1348 = vunpack.c.l.b16 %v786
        %v1349 = vunpack.c.h.b16 %v786
        %v1350 = vunpack.c.l.b16 %v787
        %v1351 = vunpack.c.l.b16 %v788
        %v1352 = vunpack.c.h.b16 %v788
        %v1353 = vunpack.c.l.b16 %v789
        %v1354 = vunpack.c.h.b16 %v789
        %v1355 = vunpack.c.l.b16 %v790
        %v1356 = vunpack.c.h.b16 %v790
        %v1357 = vunpack.c.l.b16 %v791
        %v1358 = vunpack.c.h.b16 %v791
        %v1359 = vunpack.c.l.b16 %v792
        %v1360 = vunpack.c.l.b16 %v793
        %v1361 = vunpack.c.h.b16 %v793
        %v1362 = vunpack.c.l.b16 %v794
        %v1363 = vunpack.c.h.b16 %v794
        %v1364 = vunpack.c.l.b16 %v795
        %v1365 = vunpack.c.h.b16 %v795
        %v1366 = vunpack.c.l.b16 %v796
        %v1367 = vunpack.c.h.b16 %v796
        %v1368 = vunpack.c.l.b16 %v797
        %v1369 = vunpack.c.l.b16 %v798
        %v1370 = vunpack.c.h.b16 %v798
        %v1371 = vunpack.c.l.b16 %v799
        %v1372 = vunpack.c.h.b16 %v799
        %v1373 = vunpack.c.l.b16 %v800
        %v1374 = vunpack.c.h.b16 %v800
        %v1375 = vunpack.c.l.b16 %v801
        %v1376 = vunpack.c.h.b16 %v801
        %v1377 = vunpack.c.l.b16 %v802
        %v1378 = vunpack.c.l.b16 %v803
        %v1379 = vunpack.c.h.b16 %v803
        %v1380 = vunpack.c.l.b16 %v804
        %v1381 = vunpack.c.h.b16 %v804
        %v1382 = vunpack.c.l.b16 %v805
        %v1383 = vunpack.c.h.b16 %v805
        %v1384 = vunpack.c.l.b16 %v806
        %v1385 = vunpack.c.h.b16 %v806
        %v1386 = vunpack.c.l.b16 %v807
        %v1387 = vunpack.c.l.b16 %v808
        %v1388 = vunpack.c.h.b16 %v808
        %v1389 = vunpack.c.l.b16 %v809
        %v1390 = vunpack.c.h.b16 %v809
        %v1391 = vunpack.c.l.b16 %v810
        %v1392 = vunpack.c.h.b16 %v810
        %v1393 = vunpack.c.l.b16 %v811
        %v1394 = vunpack.c.h.b16 %v811
        %v1395 = vunpack.c.l.b16 %v812
        %v1396 = vunpack.c.l.b16 %v813
        %v1397 = vunpack.c.h.b16 %v813
        %v1398 = vunpack.c.l.b16 %v814
        %v1399 = vunpack.c.h.b16 %v814
        %v1400 = vunpack.c.l.b16 %v815
        %v1401 = vunpack.c.h.b16 %v815
        %v1402 = vunpack.c.l.b16 %v816
        %v1403 = vunpack.c.h.b16 %v816
        %v1404 = vunpack.c.l.b16 %v817
        %v1405 = vpack.c.b16 %v1045, %v1036
        %v1406 = vpack.c.b16 %v1046, %v1037
        %v1407 = vpack.c.b16 %v1047, %v1038
        %v1408 = vpack.c.b16 %v1048, %v1039
        %v1409 = vpack.c.b16 %v1049, %v1040
        %v1410 = vpack.c.b16 %v1050, %v1041
        %v1411 = vpack.c.b16 %v1051, %v1042
        %v1412 = vpack.c.b16 %v1052, %v1043
        %v1413 = vpack.c.b16 %v1053, %v1044
        %v1414 = vpack.c.b16 %v1063, %v1054
        %v1415 = vpack.c.b16 %v1064, %v1055
        %v1416 = vpack.c.b16 %v1065, %v1056
        %v1417 = vpack.c.b16 %v1066, %v1057
        %v1418 = vpack.c.b16 %v1067, %v1058
        %v1419 = vpack.c.b16 %v1068, %v1059
        %v1420 = vpack.c.b16 %v1069, %v1060
        %v1421 = vpack.c.b16 %v1070, %v1061
        %v1422 = vpack.c.b16 %v1071, %v1062
        %v1423 = vpack.c.b16 %v1081, %v1072
        %v1424 = vpack.c.b16 %v1082, %v1073
        %v1425 = vpack.c.b16 %v1083, %v1074
        %v1426 = vpack.c.b16 %v1084, %v1075
        %v1427 = vpack.c.b16 %v1085, %v1076
        %v1428 = vpack.c.b16 %v1086, %v1077
        %v1429 = vpack.c.b16 %v1087, %v1078
        %v1430 = vpack.c.b16 %v1088, %v1079
        %v1431 = vpack.c.b16 %v1089, %v1080
        %v1432 = vpack.c.b16 %v1099, %v1090
        %v1433 = vpack.c.b16 %v1100, %v1091
        %v1434 = vpack.c.b16 %v1101, %v1092
        %v1435 = vpack.c.b16 %v1102, %v1093
        %v1436 = vpack.c.b16 %v1103, %v1094
        %v1437 = vpack.c.b16 %v1104, %v1095
        %v1438 = vpack.c.b16 %v1105, %v1096
        %v1439 = vpack.c.b16 %v1106, %v1097
        %v1440 = vpack.c.b16 %v1107, %v1098
        %v1441 = vpack.c.b16 %v1117, %v1108
        %v1442 = vpack.c.b16 %v1118, %v1109
        %v1443 = vpack.c.b16 %v1119, %v1110
        %v1444 = vpack.c.b16 %v1120, %v1111
        %v1445 = vpack.c.b16 %v1121, %v1112
        %v1446 = vpack.c.b16 %v1122, %v1113
        %v1447 = vpack.c.b16 %v1123, %v1114
        %v1448 = vpack.c.b16 %v1124, %v1115
        %v1449 = vpack.c.b16 %v1125, %v1116
        %v1450 = vpack.c.b16 %v1135, %v1126
        %v1451 = vpack.c.b16 %v1136, %v1127
        %v1452 = vpack.c.b16 %v1137, %v1128
        %v1453 = vpack.c.b16 %v1138, %v1129
        %v1454 = vpack.c.b16 %v1139, %v1130
        %v1455 = vpack.c.b16 %v1140, %v1131
        %v1456 = vpack.c.b16 %v1141, %v1132
        %v1457 = vpack.c.b16 %v1142, %v1133
        %v1458 = vpack.c.b16 %v1143, %v1134
        %v1459 = vpack.c.b16 %v1153, %v1144
        %v1460 = vpack.c.b16 %v1154, %v1145
        %v1461 = vpack.c.b16 %v1155, %v1146
        %v1462 = vpack.c.b16 %v1156, %v1147
        %v1463 = vpack.c.b16 %v1157, %v1148
        %v1464 = vpack.c.b16 %v1158, %v1149
        %v1465 = vpack.c.b16 %v1159, %v1150
        %v1466 = vpack.c.b16 %v1160, %v1151
        %v1467 = vpack.c.b16 %v1161, %v1152
        %v1468 = vpack.c.b16 %v1171, %v1162
        %v1469 = vpack.c.b16 %v1172, %v1163
        %v1470 = vpack.c.b16 %v1173, %v1164
        %v1471 = vpack.c.b16 %v1174, %v1165
        %v1472 = vpack.c.b16 %v1175, %v1166
        %v1473 = vpack.c.b16 %v1176, %v1167
        %v1474 = vpack.c.b16 %v1177, %v1168
        %v1475 = vpack.c.b16 %v1178, %v1169
        %v1476 = vpack.c.b16 %v1179, %v1170
        %v1477 = vpack.c.b16 %v1189, %v1180
        %v1478 = vpack.c.b16 %v1190, %v1181
        %v1479 = vpack.c.b16 %v1191, %v1182
        %v1480 = vpack.c.b16 %v1192, %v1183
        %v1481 = vpack.c.b16 %v1193, %v1184
        %v1482 = vpack.c.b16 %v1194, %v1185
        %v1483 = vpack.c.b16 %v1195, %v1186
        %v1484 = vpack.c.b16 %v1196, %v1187
        %v1485 = vpack.c.b16 %v1197, %v1188
        %v1486 = vpack.c.b16 %v1207, %v1198
        %v1487 = vpack.c.b16 %v1208, %v1199
        %v1488 = vpack.c.b16 %v1209, %v1200
        %v1489 = vpack.c.b16 %v1210, %v1201
        %v1490 = vpack.c.b16 %v1211, %v1202
        %v1491 = vpack.c.b16 %v1212, %v1203
        %v1492 = vpack.c.b16 %v1213, %v1204
        %v1493 = vpack.c.b16 %v1214, %v1205
        %v1494 = vpack.c.b16 %v1215, %v1206
        %v1495 = vpack.c.b16 %v1225, %v1216
        %v1496 = vpack.c.b16 %v1226, %v1217
        %v1497 = vpack.c.b16 %v1227, %v1218
        %v1498 = vpack.c.b16 %v1228, %v1219
        %v1499 = vpack.c.b16 %v1229, %v1220
        %v1500 = vpack.c.b16 %v1230, %v1221
        %v1501 = vpack.c.b16 %v1231, %v1222
        %v1502 = vpack.c.b16 %v1232, %v1223
        %v1503 = vpack.c.b16 %v1233, %v1224
        %v1504 = vpack.c.b16 %v1243, %v1234
        %v1505 = vpack.c.b16 %v1244, %v1235
        %v1506 = vpack.c.b16 %v1245, %v1236
        %v1507 = vpack.c.b16 %v1246, %v1237
        %v1508 = vpack.c.b16 %v1247, %v1238
        %v1509 = vpack.c.b16 %v1248, %v1239
        %v1510 = vpack.c.b16 %v1249, %v1240
        %v1511 = vpack.c.b16 %v1250, %v1241
        %v1512 = vpack.c.b16 %v1251, %v1242
        %v1513 = vpack.c.b16 %v1261, %v1252
        %v1514 = vpack.c.b16 %v1262, %v1253
        %v1515 = vpack.c.b16 %v1263, %v1254
        %v1516 = vpack.c.b16 %v1264, %v1255
        %v1517 = vpack.c.b16 %v1265, %v1256
        %v1518 = vpack.c.b16 %v1266, %v1257
        %v1519 = vpack.c.b16 %v1267, %v1258
        %v1520 = vpack.c.b16 %v1268, %v1259
        %v1521 = vpack.c.b16 %v1269, %v1260
        %v1522 = vpack.c.b16 %v1279, %v1270
        %v1523 = vpack.c.b16 %v1280, %v1271
        %v1524 = vpack.c.b16 %v1281, %v1272
        %v1525 = vpack.c.b16 %v1282, %v1273
        %v1526 = vpack.c.b16 %v1283, %v1274
        %v1527 = vpack.c.b16 %v1284, %v1275
        %v1528 = vpack.c.b16 %v1285, %v1276
        %v1529 = vpack.c.b16 %v1286, %v1277
        %v1530 = vpack.c.b16 %v1287, %v1278
        %v1531 = vpack.c.b16 %v1297, %v1288
        %v1532 = vpack.c.b16 %v1298, %v1289
        %v1533 = vpack.c.b16 %v1299, %v1290
        %v1534 = vpack.c.b16 %v1300, %v1291
        %v1535 = vpack.c.b16 %v1301, %v1292
        %v1536 = vpack.c.b16 %v1302, %v1293
        %v1537 = vpack.c.b16 %v1303, %v1294
        %v1538 = vpack.c.b16 %v1304, %v1295
        %v1539 = vpack.c.b16 %v1305, %v1296
        %v1540 = vpack.c.b16 %v1315, %v1306
        %v1541 = vpack.c.b16 %v1316, %v1307
        %v1542 = vpack.c.b16 %v1317, %v1308
        %v1543 = vpack.c.b16 %v1318, %v1309
        %v1544 = vpack.c.b16 %v1319, %v1310
        %v1545 = vpack.c.b16 %v1320, %v1311
        %v1546 = vpack.c.b16 %v1321, %v1312
        %v1547 = vpack.c.b16 %v1322, %v1313
        %v1548 = vpack.c.b16 %v1323, %v1314
        %v1549 = vpack.c.b16 %v1333, %v1324
        %v1550 = vpack.c.b16 %v1334, %v1325
        %v1551 = vpack.c.b16 %v1335, %v1326
        %v1552 = vpack.c.b16 %v1336, %v1327
        %v1553 = vpack.c.b16 %v1337, %v1328
        %v1554 = vpack.c.b16 %v1338, %v1329
        %v1555 = vpack.c.b16 %v1339, %v1330
        %v1556 = vpack.c.b16 %v1340, %v1331
        %v1557 = vpack.c.b16 %v1341, %v1332
        %v1558 = vpack.c.b16 %v1351, %v1342
        %v1559 = vpack.c.b16 %v1352, %v1343
        %v1560 = vpack.c.b16 %v1353, %v1344
        %v1561 = vpack.c.b16 %v1354, %v1345
        %v1562 = vpack.c.b16 %v1355, %v1346
        %v1563 = vpack.c.b16 %v1356, %v1347
        %v1564 = vpack.c.b16 %v1357, %v1348
        %v1565 = vpack.c.b16 %v1358, %v1349
        %v1566 = vpack.c.b16 %v1359, %v1350
        %v1567 = vpack.c.b16 %v1369, %v1360
        %v1568 = vpack.c.b16 %v1370, %v1361
        %v1569 = vpack.c.b16 %v1371, %v1362
        %v1570 = vpack.c.b16 %v1372, %v1363
        %v1571 = vpack.c.b16 %v1373, %v1364
        %v1572 = vpack.c.b16 %v1374, %v1365
        %v1573 = vpack.c.b16 %v1375, %v1366
        %v1574 = vpack.c.b16 %v1376, %v1367
        %v1575 = vpack.c.b16 %v1377, %v1368
        %v1576 = vpack.c.b16 %v1387, %v1378
        %v1577 = vpack.c.b16 %v1388, %v1379
        %v1578 = vpack.c.b16 %v1389, %v1380
        %v1579 = vpack.c.b16 %v1390, %v1381
        %v1580 = vpack.c.b16 %v1391, %v1382
        %v1581 = vpack.c.b16 %v1392, %v1383
        %v1582 = vpack.c.b16 %v1393, %v1384
        %v1583 = vpack.c.b16 %v1394, %v1385
        %v1584 = vpack.c.b16 %v1395, %v1386
        %v1585 = vpack.c.b16 %v1396, %v1396
        %v1586 = vpack.c.b16 %v1397, %v1397
        %v1587 = vpack.c.b16 %v1398, %v1398
        %v1588 = vpack.c.b16 %v1399, %v1399
        %v1589 = vpack.c.b16 %v1400, %v1400
        %v1590 = vpack.c.b16 %v1401, %v1401
        %v1591 = vpack.c.b16 %v1402, %v1402
        %v1592 = vpack.c.b16 %v1403, %v1403
        %v1593 = vpack.c.b16 %v1404, %v1404
        %vm1774 = vcmask 556032
        %v1775 = vsel %vm1774, %v828, 0
        %vm1777 = vcmask 1041408
        %v1779 = vsel %vm1777, %v1585, 0
        %v1782 = vsel %vm1777, %v1586, 0
        %v1785 = vsel %vm1777, %v1587, 0
        %v1788 = vsel %vm1777, %v1588, 0
        %v1791 = vsel %vm1777, %v1589, 0
        %v1794 = vsel %vm1777, %v1590, 0
        %v1797 = vsel %vm1777, %v1591, 0
        %v1800 = vsel %vm1777, %v1592, 0
        %v1803 = vsel %vm1777, %v1593, 0
        %1805 = vmatpush.bf16.msra.mxu0 %v1468
        %1806 = vmatpush.bf16.msra.mxu0 %v1459
        %1807 = vmatpush.bf16.msra.mxu0 %v1450
        %1808 = vmatpush.bf16.msra.mxu0 %v1441
        %1809 = vmatpush.bf16.msra.mxu0 %v1432
        %1810 = vmatpush.bf16.msra.mxu0 %v1423
        %1811 = vmatpush.bf16.msra.mxu0 %v1414
        %1812 = vmatpush.bf16.msra.mxu0 %v1405
        %1813 = vmatmul.bf16.gmra.mxu0 %v826
        %v1814 = vpop.f32.mrf.mxu0
        %v1815 = vadd.f32 %v822, %v1814
        %v1816 = vpop.f32.mrf.mxu0
        %1817 = vdwg.mxu0
        %1818 = vmatpush.bf16.msra.mxu0 %v1540
        %1819 = vmatpush.bf16.msra.mxu0 %v1531
        %1820 = vmatpush.bf16.msra.mxu0 %v1522
        %1821 = vmatpush.bf16.msra.mxu0 %v1513
        %1822 = vmatpush.bf16.msra.mxu0 %v1504
        %1823 = vmatpush.bf16.msra.mxu0 %v1495
        %1824 = vmatpush.bf16.msra.mxu0 %v1486
        %1825 = vmatpush.bf16.msra.mxu0 %v1477
        %1826 = vmatmul.bf16.gmra.mxu0 %v827
        %v1827 = vpop.f32.mrf.mxu0
        %v1828 = vadd.f32 %v1815, %v1827
        %v1829 = vpop.f32.mrf.mxu0
        %1830 = vdwg.mxu0
        %1831 = vmatpush.bf16.msra.mxu0 0
        %1832 = vmatpush.bf16.msra.mxu0 0
        %1833 = vmatpush.bf16.msra.mxu0 0
        %1834 = vmatpush.bf16.msra.mxu0 %v1779
        %1835 = vmatpush.bf16.msra.mxu0 %v1576
        %1836 = vmatpush.bf16.msra.mxu0 %v1567
        %1837 = vmatpush.bf16.msra.mxu0 %v1558
        %1838 = vmatpush.bf16.msra.mxu0 %v1549
        %1839 = vmatmul.bf16.gmra.mxu0 %v1775
        %v1840 = vpop.f32.mrf.mxu0
        %v1841 = vadd.f32 %v1828, %v1840
        %v1842 = vpop.f32.mrf.mxu0
        %1843 = vdwg.mxu0
        %1844 = vmatpush.bf16.msra.mxu0 %v1469
        %1845 = vmatpush.bf16.msra.mxu0 %v1460
        %1846 = vmatpush.bf16.msra.mxu0 %v1451
        %1847 = vmatpush.bf16.msra.mxu0 %v1442
        %1848 = vmatpush.bf16.msra.mxu0 %v1433
        %1849 = vmatpush.bf16.msra.mxu0 %v1424
        %1850 = vmatpush.bf16.msra.mxu0 %v1415
        %1851 = vmatpush.bf16.msra.mxu0 %v1406
        %1852 = vmatmul.bf16.gmra.mxu0 %v826
        %v1853 = vpop.f32.mrf.mxu0
        %v1854 = vadd.f32 %v822, %v1853
        %v1855 = vpop.f32.mrf.mxu0
        %1856 = vdwg.mxu0
        %1857 = vmatpush.bf16.msra.mxu0 %v1541
        %1858 = vmatpush.bf16.msra.mxu0 %v1532
        %1859 = vmatpush.bf16.msra.mxu0 %v1523
        %1860 = vmatpush.bf16.msra.mxu0 %v1514
        %1861 = vmatpush.bf16.msra.mxu0 %v1505
        %1862 = vmatpush.bf16.msra.mxu0 %v1496
        %1863 = vmatpush.bf16.msra.mxu0 %v1487
        %1864 = vmatpush.bf16.msra.mxu0 %v1478
        %1865 = vmatmul.bf16.gmra.mxu0 %v827
        %v1866 = vpop.f32.mrf.mxu0
        %v1867 = vadd.f32 %v1854, %v1866
        %v1868 = vpop.f32.mrf.mxu0
        %1869 = vdwg.mxu0
        %1870 = vmatpush.bf16.msra.mxu0 0
        %1871 = vmatpush.bf16.msra.mxu0 0
        %1872 = vmatpush.bf16.msra.mxu0 0
        %1873 = vmatpush.bf16.msra.mxu0 %v1782
        %1874 = vmatpush.bf16.msra.mxu0 %v1577
        %1875 = vmatpush.bf16.msra.mxu0 %v1568
        %1876 = vmatpush.bf16.msra.mxu0 %v1559
        %1877 = vmatpush.bf16.msra.mxu0 %v1550
        %1878 = vmatmul.bf16.gmra.mxu0 %v1775
        %v1879 = vpop.f32.mrf.mxu0
        %v1880 = vadd.f32 %v1867, %v1879
        %v1881 = vpop.f32.mrf.mxu0
        %1882 = vdwg.mxu0
        %1883 = vmatpush.bf16.msra.mxu0 %v1470
        %1884 = vmatpush.bf16.msra.mxu0 %v1461
        %1885 = vmatpush.bf16.msra.mxu0 %v1452
        %1886 = vmatpush.bf16.msra.mxu0 %v1443
        %1887 = vmatpush.bf16.msra.mxu0 %v1434
        %1888 = vmatpush.bf16.msra.mxu0 %v1425
        %1889 = vmatpush.bf16.msra.mxu0 %v1416
        %1890 = vmatpush.bf16.msra.mxu0 %v1407
        %1891 = vmatmul.bf16.gmra.mxu0 %v826
        %v1892 = vpop.f32.mrf.mxu0
        %v1893 = vadd.f32 %v822, %v1892
        %v1894 = vpop.f32.mrf.mxu0
        %1895 = vdwg.mxu0
        %1896 = vmatpush.bf16.msra.mxu0 %v1542
        %1897 = vmatpush.bf16.msra.mxu0 %v1533
        %1898 = vmatpush.bf16.msra.mxu0 %v1524
        %1899 = vmatpush.bf16.msra.mxu0 %v1515
        %1900 = vmatpush.bf16.msra.mxu0 %v1506
        %1901 = vmatpush.bf16.msra.mxu0 %v1497
        %1902 = vmatpush.bf16.msra.mxu0 %v1488
        %1903 = vmatpush.bf16.msra.mxu0 %v1479
        %1904 = vmatmul.bf16.gmra.mxu0 %v827
        %v1905 = vpop.f32.mrf.mxu0
        %v1906 = vadd.f32 %v1893, %v1905
        %v1907 = vpop.f32.mrf.mxu0
        %1908 = vdwg.mxu0
        %1909 = vmatpush.bf16.msra.mxu0 0
        %1910 = vmatpush.bf16.msra.mxu0 0
        %1911 = vmatpush.bf16.msra.mxu0 0
        %1912 = vmatpush.bf16.msra.mxu0 %v1785
        %1913 = vmatpush.bf16.msra.mxu0 %v1578
        %1914 = vmatpush.bf16.msra.mxu0 %v1569
        %1915 = vmatpush.bf16.msra.mxu0 %v1560
        %1916 = vmatpush.bf16.msra.mxu0 %v1551
        %1917 = vmatmul.bf16.gmra.mxu0 %v1775
        %v1918 = vpop.f32.mrf.mxu0
        %v1919 = vadd.f32 %v1906, %v1918
        %v1920 = vpop.f32.mrf.mxu0
        %1921 = vdwg.mxu0
        %1922 = vmatpush.bf16.msra.mxu0 %v1471
        %1923 = vmatpush.bf16.msra.mxu0 %v1462
        %1924 = vmatpush.bf16.msra.mxu0 %v1453
        %1925 = vmatpush.bf16.msra.mxu0 %v1444
        %1926 = vmatpush.bf16.msra.mxu0 %v1435
        %1927 = vmatpush.bf16.msra.mxu0 %v1426
        %1928 = vmatpush.bf16.msra.mxu0 %v1417
        %1929 = vmatpush.bf16.msra.mxu0 %v1408
        %1930 = vmatmul.bf16.gmra.mxu0 %v826
        %v1931 = vpop.f32.mrf.mxu0
        %v1932 = vadd.f32 %v822, %v1931
        %v1933 = vpop.f32.mrf.mxu0
        %1934 = vdwg.mxu0
        %1935 = vmatpush.bf16.msra.mxu0 %v1543
        %1936 = vmatpush.bf16.msra.mxu0 %v1534
        %1937 = vmatpush.bf16.msra.mxu0 %v1525
        %1938 = vmatpush.bf16.msra.mxu0 %v1516
        %1939 = vmatpush.bf16.msra.mxu0 %v1507
        %1940 = vmatpush.bf16.msra.mxu0 %v1498
        %1941 = vmatpush.bf16.msra.mxu0 %v1489
        %1942 = vmatpush.bf16.msra.mxu0 %v1480
        %1943 = vmatmul.bf16.gmra.mxu0 %v827
        %v1944 = vpop.f32.mrf.mxu0
        %v1945 = vadd.f32 %v1932, %v1944
        %v1946 = vpop.f32.mrf.mxu0
        %1947 = vdwg.mxu0
        %1948 = vmatpush.bf16.msra.mxu0 0
        %1949 = vmatpush.bf16.msra.mxu0 0
        %1950 = vmatpush.bf16.msra.mxu0 0
        %1951 = vmatpush.bf16.msra.mxu0 %v1788
        %1952 = vmatpush.bf16.msra.mxu0 %v1579
        %1953 = vmatpush.bf16.msra.mxu0 %v1570
        %1954 = vmatpush.bf16.msra.mxu0 %v1561
        %1955 = vmatpush.bf16.msra.mxu0 %v1552
        %1956 = vmatmul.bf16.gmra.mxu0 %v1775
        %v1957 = vpop.f32.mrf.mxu0
        %v1958 = vadd.f32 %v1945, %v1957
        %v1959 = vpop.f32.mrf.mxu0
        %1960 = vdwg.mxu0
        %1961 = vmatpush.bf16.msra.mxu0 %v1472
        %1962 = vmatpush.bf16.msra.mxu0 %v1463
        %1963 = vmatpush.bf16.msra.mxu0 %v1454
        %1964 = vmatpush.bf16.msra.mxu0 %v1445
        %1965 = vmatpush.bf16.msra.mxu0 %v1436
        %1966 = vmatpush.bf16.msra.mxu0 %v1427
        %1967 = vmatpush.bf16.msra.mxu0 %v1418
        %1968 = vmatpush.bf16.msra.mxu0 %v1409
        %1969 = vmatmul.bf16.gmra.mxu0 %v826
        %v1970 = vpop.f32.mrf.mxu0
        %v1971 = vadd.f32 %v822, %v1970
        %v1972 = vpop.f32.mrf.mxu0
        %1973 = vdwg.mxu0
        %1974 = vmatpush.bf16.msra.mxu0 %v1544
        %1975 = vmatpush.bf16.msra.mxu0 %v1535
        %1976 = vmatpush.bf16.msra.mxu0 %v1526
        %1977 = vmatpush.bf16.msra.mxu0 %v1517
        %1978 = vmatpush.bf16.msra.mxu0 %v1508
        %1979 = vmatpush.bf16.msra.mxu0 %v1499
        %1980 = vmatpush.bf16.msra.mxu0 %v1490
        %1981 = vmatpush.bf16.msra.mxu0 %v1481
        %1982 = vmatmul.bf16.gmra.mxu0 %v827
        %v1983 = vpop.f32.mrf.mxu0
        %v1984 = vadd.f32 %v1971, %v1983
        %v1985 = vpop.f32.mrf.mxu0
        %1986 = vdwg.mxu0
        %1987 = vmatpush.bf16.msra.mxu0 0
        %1988 = vmatpush.bf16.msra.mxu0 0
        %1989 = vmatpush.bf16.msra.mxu0 0
        %1990 = vmatpush.bf16.msra.mxu0 %v1791
        %1991 = vmatpush.bf16.msra.mxu0 %v1580
        %1992 = vmatpush.bf16.msra.mxu0 %v1571
        %1993 = vmatpush.bf16.msra.mxu0 %v1562
        %1994 = vmatpush.bf16.msra.mxu0 %v1553
        %1995 = vmatmul.bf16.gmra.mxu0 %v1775
        %v1996 = vpop.f32.mrf.mxu0
        %v1997 = vadd.f32 %v1984, %v1996
        %v1998 = vpop.f32.mrf.mxu0
        %1999 = vdwg.mxu0
        %2000 = vmatpush.bf16.msra.mxu0 %v1473
        %2001 = vmatpush.bf16.msra.mxu0 %v1464
        %2002 = vmatpush.bf16.msra.mxu0 %v1455
        %2003 = vmatpush.bf16.msra.mxu0 %v1446
        %2004 = vmatpush.bf16.msra.mxu0 %v1437
        %2005 = vmatpush.bf16.msra.mxu0 %v1428
        %2006 = vmatpush.bf16.msra.mxu0 %v1419
        %2007 = vmatpush.bf16.msra.mxu0 %v1410
        %2008 = vmatmul.bf16.gmra.mxu0 %v826
        %v2009 = vpop.f32.mrf.mxu0
        %v2010 = vadd.f32 %v822, %v2009
        %v2011 = vpop.f32.mrf.mxu0
        %2012 = vdwg.mxu0
        %2013 = vmatpush.bf16.msra.mxu0 %v1545
        %2014 = vmatpush.bf16.msra.mxu0 %v1536
        %2015 = vmatpush.bf16.msra.mxu0 %v1527
        %2016 = vmatpush.bf16.msra.mxu0 %v1518
        %2017 = vmatpush.bf16.msra.mxu0 %v1509
        %2018 = vmatpush.bf16.msra.mxu0 %v1500
        %2019 = vmatpush.bf16.msra.mxu0 %v1491
        %2020 = vmatpush.bf16.msra.mxu0 %v1482
        %2021 = vmatmul.bf16.gmra.mxu0 %v827
        %v2022 = vpop.f32.mrf.mxu0
        %v2023 = vadd.f32 %v2010, %v2022
        %v2024 = vpop.f32.mrf.mxu0
        %2025 = vdwg.mxu0
        %2026 = vmatpush.bf16.msra.mxu0 0
        %2027 = vmatpush.bf16.msra.mxu0 0
        %2028 = vmatpush.bf16.msra.mxu0 0
        %2029 = vmatpush.bf16.msra.mxu0 %v1794
        %2030 = vmatpush.bf16.msra.mxu0 %v1581
        %2031 = vmatpush.bf16.msra.mxu0 %v1572
        %2032 = vmatpush.bf16.msra.mxu0 %v1563
        %2033 = vmatpush.bf16.msra.mxu0 %v1554
        %2034 = vmatmul.bf16.gmra.mxu0 %v1775
        %v2035 = vpop.f32.mrf.mxu0
        %v2036 = vadd.f32 %v2023, %v2035
        %v2037 = vpop.f32.mrf.mxu0
        %2038 = vdwg.mxu0
        %2039 = vmatpush.bf16.msra.mxu0 %v1474
        %2040 = vmatpush.bf16.msra.mxu0 %v1465
        %2041 = vmatpush.bf16.msra.mxu0 %v1456
        %2042 = vmatpush.bf16.msra.mxu0 %v1447
        %2043 = vmatpush.bf16.msra.mxu0 %v1438
        %2044 = vmatpush.bf16.msra.mxu0 %v1429
        %2045 = vmatpush.bf16.msra.mxu0 %v1420
        %2046 = vmatpush.bf16.msra.mxu0 %v1411
        %2047 = vmatmul.bf16.gmra.mxu0 %v826
        %v2048 = vpop.f32.mrf.mxu0
        %v2049 = vadd.f32 %v822, %v2048
        %v2050 = vpop.f32.mrf.mxu0
        %2051 = vdwg.mxu0
        %2052 = vmatpush.bf16.msra.mxu0 %v1546
        %2053 = vmatpush.bf16.msra.mxu0 %v1537
        %2054 = vmatpush.bf16.msra.mxu0 %v1528
        %2055 = vmatpush.bf16.msra.mxu0 %v1519
        %2056 = vmatpush.bf16.msra.mxu0 %v1510
        %2057 = vmatpush.bf16.msra.mxu0 %v1501
        %2058 = vmatpush.bf16.msra.mxu0 %v1492
        %2059 = vmatpush.bf16.msra.mxu0 %v1483
        %2060 = vmatmul.bf16.gmra.mxu0 %v827
        %v2061 = vpop.f32.mrf.mxu0
        %v2062 = vadd.f32 %v2049, %v2061
        %v2063 = vpop.f32.mrf.mxu0
        %2064 = vdwg.mxu0
        %2065 = vmatpush.bf16.msra.mxu0 0
        %2066 = vmatpush.bf16.msra.mxu0 0
        %2067 = vmatpush.bf16.msra.mxu0 0
        %2068 = vmatpush.bf16.msra.mxu0 %v1797
        %2069 = vmatpush.bf16.msra.mxu0 %v1582
        %2070 = vmatpush.bf16.msra.mxu0 %v1573
        %2071 = vmatpush.bf16.msra.mxu0 %v1564
        %2072 = vmatpush.bf16.msra.mxu0 %v1555
        %2073 = vmatmul.bf16.gmra.mxu0 %v1775
        %v2074 = vpop.f32.mrf.mxu0
        %v2075 = vadd.f32 %v2062, %v2074
        %v2076 = vpop.f32.mrf.mxu0
        %2077 = vdwg.mxu0
        %2078 = vmatpush.bf16.msra.mxu0 %v1475
        %2079 = vmatpush.bf16.msra.mxu0 %v1466
        %2080 = vmatpush.bf16.msra.mxu0 %v1457
        %2081 = vmatpush.bf16.msra.mxu0 %v1448
        %2082 = vmatpush.bf16.msra.mxu0 %v1439
        %2083 = vmatpush.bf16.msra.mxu0 %v1430
        %2084 = vmatpush.bf16.msra.mxu0 %v1421
        %2085 = vmatpush.bf16.msra.mxu0 %v1412
        %2086 = vmatmul.bf16.gmra.mxu0 %v826
        %v2087 = vpop.f32.mrf.mxu0
        %v2088 = vadd.f32 %v822, %v2087
        %v2089 = vpop.f32.mrf.mxu0
        %2090 = vdwg.mxu0
        %2091 = vmatpush.bf16.msra.mxu0 %v1547
        %2092 = vmatpush.bf16.msra.mxu0 %v1538
        %2093 = vmatpush.bf16.msra.mxu0 %v1529
        %2094 = vmatpush.bf16.msra.mxu0 %v1520
        %2095 = vmatpush.bf16.msra.mxu0 %v1511
        %2096 = vmatpush.bf16.msra.mxu0 %v1502
        %2097 = vmatpush.bf16.msra.mxu0 %v1493
        %2098 = vmatpush.bf16.msra.mxu0 %v1484
        %2099 = vmatmul.bf16.gmra.mxu0 %v827
        %v2100 = vpop.f32.mrf.mxu0
        %v2101 = vadd.f32 %v2088, %v2100
        %v2102 = vpop.f32.mrf.mxu0
        %2103 = vdwg.mxu0
        %2104 = vmatpush.bf16.msra.mxu0 0
        %2105 = vmatpush.bf16.msra.mxu0 0
        %2106 = vmatpush.bf16.msra.mxu0 0
        %2107 = vmatpush.bf16.msra.mxu0 %v1800
        %2108 = vmatpush.bf16.msra.mxu0 %v1583
        %2109 = vmatpush.bf16.msra.mxu0 %v1574
        %2110 = vmatpush.bf16.msra.mxu0 %v1565
        %2111 = vmatpush.bf16.msra.mxu0 %v1556
        %2112 = vmatmul.bf16.gmra.mxu0 %v1775
        %v2113 = vpop.f32.mrf.mxu0
        %v2114 = vadd.f32 %v2101, %v2113
        %v2115 = vpop.f32.mrf.mxu0
        %2116 = vdwg.mxu0
        %2117 = vmatpush.bf16.msra.mxu0 %v1476
        %2118 = vmatpush.bf16.msra.mxu0 %v1467
        %2119 = vmatpush.bf16.msra.mxu0 %v1458
        %2120 = vmatpush.bf16.msra.mxu0 %v1449
        %2121 = vmatpush.bf16.msra.mxu0 %v1440
        %2122 = vmatpush.bf16.msra.mxu0 %v1431
        %2123 = vmatpush.bf16.msra.mxu0 %v1422
        %2124 = vmatpush.bf16.msra.mxu0 %v1413
        %2125 = vmatmul.bf16.gmra.mxu0 %v826
        %v2126 = vpop.f32.mrf.mxu0
        %v2127 = vadd.f32 %v822, %v2126
        %v2128 = vpop.f32.mrf.mxu0
        %2129 = vdwg.mxu0
        %2130 = vmatpush.bf16.msra.mxu0 %v1548
        %2131 = vmatpush.bf16.msra.mxu0 %v1539
        %2132 = vmatpush.bf16.msra.mxu0 %v1530
        %2133 = vmatpush.bf16.msra.mxu0 %v1521
        %2134 = vmatpush.bf16.msra.mxu0 %v1512
        %2135 = vmatpush.bf16.msra.mxu0 %v1503
        %2136 = vmatpush.bf16.msra.mxu0 %v1494
        %2137 = vmatpush.bf16.msra.mxu0 %v1485
        %2138 = vmatmul.bf16.gmra.mxu0 %v827
        %v2139 = vpop.f32.mrf.mxu0
        %v2140 = vadd.f32 %v2127, %v2139
        %v2141 = vpop.f32.mrf.mxu0
        %2142 = vdwg.mxu0
        %2143 = vmatpush.bf16.msra.mxu0 0
        %2144 = vmatpush.bf16.msra.mxu0 0
        %2145 = vmatpush.bf16.msra.mxu0 0
        %2146 = vmatpush.bf16.msra.mxu0 %v1803
        %2147 = vmatpush.bf16.msra.mxu0 %v1584
        %2148 = vmatpush.bf16.msra.mxu0 %v1575
        %2149 = vmatpush.bf16.msra.mxu0 %v1566
        %2150 = vmatpush.bf16.msra.mxu0 %v1557
        %2151 = vmatmul.bf16.gmra.mxu0 %v1775
        %v2152 = vpop.f32.mrf.mxu0
        %v2153 = vadd.f32 %v2140, %v2152
        %v2154 = vpop.f32.mrf.mxu0
        %2155 = vdwg.mxu0
        %v2164 = vrot.slane %v1880, 4
        %v2165 = vrot.slane %v1958, 4
        %v2166 = vrot.slane %v2036, 4
        %v2167 = vrot.slane %v2114, 4
        %vm2168 = vcmask 1043456
        %v2169 = vsel %vm2168, %v1841, %v2164
        %v2170 = vsel %vm2168, %v1919, %v2165
        %v2171 = vsel %vm2168, %v1997, %v2166
        %v2172 = vsel %vm2168, %v2075, %v2167
        %2177 = vst [vmem:[%s609] sm:$0xff] %v2169
        %2178 = vst [vmem:[%s609 + $0x8] sm:$0xff] %v2170
        %2179 = vst [vmem:[%s609 + $0x10] sm:$0xff] %v2171
        %2180 = vst [vmem:[%s609 + $0x18] sm:$0xff] %v2172
        %2181 = vst [vmem:[%s609 + $0x20] sm:$0xf] %v2153
        %s2182 = smul.u32 9, %s14
        %p2183 = scmp.lt.s32.totalorder %s2182, 53
        %s2184 = scalar_select %p2183, %s2182, 53
        %s2185 = smul.addr %s2184, 4
        %s2186 = scalar_lea.vmem %s3, %s2185
        // Predicated region
        $region59: #{_lambda_.34} parent=53 // pred_check
          %p2187 = pneg %p100
        $region60: #{_lambda_.34} parent=53 // pred_check_branch
          %2189 = sbr.rel (%p2187) target = $region62
        $region61: #{_lambda_.34} parent=53 // pred_region
          %s2190 = smul.u32 9, %s14
        $region62: #{_lambda_.34} parent=53 // pred_fallthru
          _
      $region54: #{_lambda_.34} parent=5 // pred_fallthru
        _
      %p2191 = scmp.le.s32.totalorder 2, %s9
      // Predicated region
      $region63: #{_lambda_.34} parent=5 // pred_check
        %p2192 = pneg %p2191
      $region64: #{_lambda_.34} parent=5 // pred_check_branch
        %2194 = sbr.rel (%p2192) target = $region66
      $region65: #{_lambda_.34} parent=5 // pred_region
        %s2195 = ssub.s32 %s9, 2
        // Predicated region
        $region67: #{_lambda_.34} parent=65 // pred_check
          %p2196 = pneg %p106
        $region68: #{_lambda_.34} parent=65 // pred_check_branch
          %2198 = sbr.rel (%p2196) target = $region70
        $region69: #{_lambda_.34} parent=65 // pred_region
          %s2199 = smul.u32 9, %s15
          %p2200 = scmp.lt.s32.totalorder %s2199, 53
          %s2201 = scalar_select %p2200, %s2199, 53
          %s2202 = smul.addr %s2201, 4
          %s2203 = scalar_lea.vmem %s3, %s2202
        $region70: #{_lambda_.34} parent=65 // pred_fallthru
          _
      $region66: #{_lambda_.34} parent=5 // pred_fallthru
        _
    $region6: #{_lambda_.34} parent=1 // loop_footer
      %s13 = sadd.s32 1, %s9
    $region7: #{_lambda_.34} parent=1 // loop_footer_branch
      %8 = sbr.rel target = $region3
    $region8: #{_lambda_.34} parent=1 // loop_exit
      _

</llo_original>
